<compile_context>
chip_gen: v5e
topology: v5e:2x2
jax: 0.10.0
libtpu: 0.0.40
codegen_flags: <defaults>
</compile_context>

<pallas_src>
import math

import jax
import jax.numpy as jnp
from jax import lax
from jax.experimental import pallas as pl
from jax.experimental.pallas import tpu as pltpu

# ----------------------------- config ---------------------------------------
B = 2           # batch
S = 8           # sequence length
LATENT = 32     # V-JEPA latent dim
HID_PROJ = 16   # projector hidden_dim
H = 32          # LM hidden_size (tiny gpt2-like)
NH = 2          # attention heads
DH = H // NH    # head dim
NL = 2          # transformer blocks
V = 64          # vocab size
V_PAD = 128     # lane-dense padded vocab (for lm_head / logits / loss)
FF = 4 * H      # MLP inner dim
EPS = 1e-5
NEG = -1e9
BS = B * S

_vmem = pl.BlockSpec(memory_space=pltpu.MemorySpace.VMEM)

_PARAM_ORDER = [
    "proj_w1", "proj_b1", "proj_ln_g", "proj_ln_b", "proj_w2", "proj_b2",
    "wte_emb", "wpe",
    "ln1_g", "ln1_b",
    "wq", "wk", "wv", "bq", "bk", "bv",
    "attn_pw", "attn_pb",
    "ln2_g", "ln2_b",
    "fc_w", "fc_b", "fc2_w", "fc2_b",
    "lnf_g", "lnf_b", "lm_head_w",
]


def _ln(x, g, b):
    """LayerNorm over the last (lane) dim, f32 math."""
    mu = jnp.mean(x, axis=-1, keepdims=True)
    var = jnp.mean((x - mu) ** 2, axis=-1, keepdims=True)
    return (x - mu) * lax.rsqrt(var + EPS) * g + b


# --------------------------- the fused kernel --------------------------------
def fused_kernel(lat_ref, ids_ref, mask_ref, tgt_ref,
                 pw1_ref, pb1_ref, pg_ref, pbt_ref, pw2_ref, pb2_ref,
                 wte_ref, wpe_ref,
                 ln1g_ref, ln1b_ref,
                 wq_ref, wk_ref, wv_ref, bq_ref, bk_ref, bv_ref,
                 opw_ref, opb_ref,
                 ln2g_ref, ln2b_ref,
                 fcw_ref, fcb_ref, fc2w_ref, fc2b_ref,
                 lnfg_ref, lnfb_ref, lmw_ref,
                 logits_ref, loss_ref):
    f32 = jnp.float32
    bf16 = jnp.bfloat16

    # ---- latent projector: Linear -> LayerNorm -> GELU -> Dropout(id) -> Linear
    lat = lat_ref[...]                                                 # [B, LATENT] f32
    p1 = jnp.dot(lat.astype(bf16), pw1_ref[...],
                 preferred_element_type=f32) + pb1_ref[...]            # [B, HID_PROJ]
    p1 = _ln(p1, pg_ref[...], pbt_ref[...])
    # TODO(synk): nn.GELU() default is the exact erf GELU; tanh approximation used here.
    p1 = jax.nn.gelu(p1, approximate=True)
    # Dropout is identity (eval-mode semantics).
    lat_emb = jnp.dot(p1.astype(bf16), pw2_ref[...],
                      preferred_element_type=f32) + pb2_ref[...]       # [B, H]

    # ---- fused token-embedding gather + latent/token concat -------------------
    # ids_ref row s holds input_ids[:, s-1]; row 0 is a dummy (replaced by latent).
    ids = ids_ref[...]                                                 # [B, S] int32
    col_v = lax.broadcasted_iota(jnp.int32, (B, S, V_PAD), 2)
    s_pos = lax.broadcasted_iota(jnp.int32, (B, S, V_PAD), 1)
    oh = jnp.where(jnp.logical_and(col_v == ids[:, :, None], s_pos > 0), 1.0, 0.0)
    tok = jnp.dot(oh.reshape(BS, V_PAD).astype(bf16), wte_ref[...],
                  preferred_element_type=f32)                          # [B*S, H]
    tok3 = tok.reshape(B, S, H)
    s_h = lax.broadcasted_iota(jnp.int32, (B, S, H), 1)
    x3 = jnp.where(s_h == 0, lat_emb[:, None, :], tok3)                # slot 0 <- latent
    x3 = x3 + wpe_ref[...][None, :, :]                                 # position embeddings
    h = x3.reshape(BS, H)                                              # f32 residual stream

    # ---- causal + padding additive bias, computed ONCE -------------------------
    qpos = lax.broadcasted_iota(jnp.int32, (S, S), 0)
    kpos = lax.broadcasted_iota(jnp.int32, (S, S), 1)
    causal = jnp.where(kpos <= qpos, 0.0, NEG)                         # [S, S]
    pad = (1.0 - mask_ref[...]) * NEG                                  # [B, S]
    bias = causal[None, :, :] + pad[:, None, :]                        # [B, S, S]

    scale = 1.0 / math.sqrt(DH)

    for l in range(NL):                                                # static unroll
        # ---------------- attention ----------------
        a_in = _ln(h, ln1g_ref[l], ln1b_ref[l]).astype(bf16)           # [B*S, H]
        attn = None
        for hd in range(NH):                                           # per-head WEIGHT slices
            q = jnp.dot(a_in, wq_ref[l, hd], preferred_element_type=f32) + bq_ref[l, hd]
            k = jnp.dot(a_in, wk_ref[l, hd], preferred_element_type=f32) + bk_ref[l, hd]
            v = jnp.dot(a_in, wv_ref[l, hd], preferred_element_type=f32) + bv_ref[l, hd]
            q3 = q.reshape(B, S, DH).astype(bf16)
            k3 = k.reshape(B, S, DH).astype(bf16)
            sc = jnp.einsum('bqd,bkd->bqk', q3, k3,
                            preferred_element_type=f32) * scale + bias  # [B,S,S]
            sc = sc - jnp.max(sc, axis=-1, keepdims=True)
            e = jnp.exp(sc)
            p = (e / jnp.sum(e, axis=-1, keepdims=True)).astype(bf16)
            o = jnp.einsum('bqk,bkd->bqd', p, v.reshape(B, S, DH).astype(bf16),
                           preferred_element_type=f32)                  # [B,S,DH]
            part = jnp.dot(o.reshape(BS, DH).astype(bf16), opw_ref[l, hd],
                           preferred_element_type=f32)                  # per-head partial proj
            attn = part if attn is None else attn + part
        h = h + attn + opb_ref[l]

        # ---------------- MLP (gelu_new == tanh approx in GPT-2) ----------------
        m_in = _ln(h, ln2g_ref[l], ln2b_ref[l]).astype(bf16)
        m = jnp.dot(m_in, fcw_ref[l], preferred_element_type=f32) + fcb_ref[l]
        m = jax.nn.gelu(m, approximate=True)
        h = h + jnp.dot(m.astype(bf16), fc2w_ref[l],
                        preferred_element_type=f32) + fc2b_ref[l]

    # ---- final LayerNorm + tied lm_head (lane-dense V_PAD output) --------------
    hf = _ln(h, lnfg_ref[...], lnfb_ref[...])
    logits2 = jnp.dot(hf.astype(bf16), lmw_ref[...],
                      preferred_element_type=f32)                       # [B*S, V_PAD]
    logits3 = logits2.reshape(B, S, V_PAD)
    logits_ref[...] = logits3

    # ---- shifted causal-LM cross-entropy loss (all positions valid) ------------
    col = lax.broadcasted_iota(jnp.int32, (B, S, V_PAD), 2)
    masked = jnp.where(col < V, logits3, NEG)                           # drop padded vocab cols
    mx = jnp.max(masked, axis=-1, keepdims=True)
    lse = jnp.log(jnp.sum(jnp.exp(masked - mx), axis=-1, keepdims=True)) + mx   # [B,S,1]
    tgt = tgt_ref[...]                                                  # row s holds labels[s+1]
    picked = jnp.sum(jnp.where(col == tgt[:, :, None], logits3, 0.0),
                     axis=-1, keepdims=True)                            # [B,S,1]
    s_row = lax.broadcasted_iota(jnp.int32, (B, S, 1), 1)
    valid = (s_row < (S - 1)).astype(f32)                               # drop last position
    loss = jnp.sum((lse - picked) * valid) * (1.0 / (B * (S - 1)))
    # Lane-dense loss slab (avoids a masked (1,1) store); wrapper reads [0, 0].
    loss_ref[...] = jnp.broadcast_to(loss, (8, 128)).astype(f32)


# ------------------------------ cost estimate ---------------------------------
def _cost_estimate():
    flops = 2 * B * (LATENT * HID_PROJ + HID_PROJ * H)          # projector
    flops += 2 * BS * V_PAD * H                                 # one-hot embedding matmul
    per_layer = (2 * BS * H * 3 * H                             # q, k, v
                 + 2 * B * NH * S * S * DH * 2                  # scores + pv
                 + 2 * BS * H * H                               # attn out proj
                 + 2 * BS * H * FF * 2)                         # MLP
    flops += NL * per_layer
    flops += 2 * BS * H * V_PAD                                 # lm_head
    trans = B * HID_PROJ + NL * (NH * B * S * S + BS * FF) + BS * V_PAD
    bytes_acc = 4 * (B * LATENT + 3 * B * S + B * S * V_PAD + 8 * 128)
    bytes_acc += 2 * (LATENT * HID_PROJ + HID_PROJ * H + 2 * V_PAD * H
                      + NL * (3 * H * H + H * H + 2 * H * FF))          # bf16 weights
    bytes_acc += 4 * (S * H + 3 * HID_PROJ + H
                      + NL * (3 * H + 3 * DH * NH + H + 2 * H + FF + H)
                      + 2 * H)                                          # f32 LN/bias params
    return pl.CostEstimate(flops=flops, transcendentals=trans, bytes_accessed=bytes_acc)


_COST = _cost_estimate()


# ------------------------------ parameters -------------------------------------
def init_params(key):
    ks = jax.random.split(key, 12)
    n = lambda k, shape, s=0.02: (s * jax.random.normal(k, shape)).astype(jnp.float32)
    bf = jnp.bfloat16
    wte = n(ks[0], (V, H))
    wte_pad = jnp.pad(wte, ((0, V_PAD - V), (0, 0)))            # zero rows/cols for pad ids
    return {
        # latent projector
        "proj_w1": n(ks[1], (LATENT, HID_PROJ)).astype(bf),
        "proj_b1": jnp.zeros((1, HID_PROJ), jnp.float32),
        "proj_ln_g": jnp.ones((1, HID_PROJ), jnp.float32),
        "proj_ln_b": jnp.zeros((1, HID_PROJ), jnp.float32),
        "proj_w2": n(ks[2], (HID_PROJ, H)).astype(bf),
        "proj_b2": jnp.zeros((1, H), jnp.float32),
        # GPT-2-like LM (synthetic weights, tied lm_head)
        "wte_emb": wte_pad.astype(bf),                          # [V_PAD, H]
        "lm_head_w": wte_pad.T.astype(bf),                      # [H, V_PAD]
        "wpe": n(ks[3], (S, H)),
        "ln1_g": jnp.ones((NL, 1, H), jnp.float32),
        "ln1_b": jnp.zeros((NL, 1, H), jnp.float32),
        "wq": n(ks[4], (NL, NH, H, DH)).astype(bf),
        "wk": n(ks[5], (NL, NH, H, DH)).astype(bf),
        "wv": n(ks[6], (NL, NH, H, DH)).astype(bf),
        "bq": jnp.zeros((NL, NH, 1, DH), jnp.float32),
        "bk": jnp.zeros((NL, NH, 1, DH), jnp.float32),
        "bv": jnp.zeros((NL, NH, 1, DH), jnp.float32),
        "attn_pw": n(ks[7], (NL, NH, DH, H)).astype(bf),
        "attn_pb": jnp.zeros((NL, 1, H), jnp.float32),
        "ln2_g": jnp.ones((NL, 1, H), jnp.float32),
        "ln2_b": jnp.zeros((NL, 1, H), jnp.float32),
        "fc_w": n(ks[8], (NL, H, FF)).astype(bf),
        "fc_b": jnp.zeros((NL, 1, FF), jnp.float32),
        "fc2_w": n(ks[9], (NL, FF, H)).astype(bf),
        "fc2_b": jnp.zeros((NL, 1, H), jnp.float32),
        "lnf_g": jnp.ones((1, H), jnp.float32),
        "lnf_b": jnp.zeros((1, H), jnp.float32),
    }


# ------------------------------ forward wrapper --------------------------------
@jax.jit
def sequence_latent_to_text_forward(latents, input_ids, attention_mask, labels,
                                    params):
    # Only tiny [B,S] integer/mask shifts happen in XLA; all [B,S,H] work is fused.
    shifted_ids = jnp.concatenate(
        [jnp.zeros((B, 1), jnp.int32), input_ids[:, :-1].astype(jnp.int32)], axis=1)
    combined_mask = jnp.concatenate(
        [jnp.ones((B, 1), jnp.float32), attention_mask[:, :-1].astype(jnp.float32)], axis=1)
    tgt_ids = jnp.concatenate(
        [labels[:, 1:].astype(jnp.int32), jnp.zeros((B, 1), jnp.int32)], axis=1)

    logits_pad, loss_buf = pl.pallas_call(
        fused_kernel,
        out_shape=(jax.ShapeDtypeStruct((B, S, V_PAD), jnp.float32),
                   jax.ShapeDtypeStruct((8, 128), jnp.float32)),
        in_specs=[_vmem] * (4 + len(_PARAM_ORDER)),
        out_specs=(_vmem, _vmem),
        cost_estimate=_COST,
    )(latents, shifted_ids, combined_mask, tgt_ids,
      *[params[k] for k in _PARAM_ORDER])

    return {"loss": loss_buf[0, 0], "logits": logits_pad[:, :, :V]}


# TODO(synk): generate_from_latent (HF .generate beam search / nucleus sampling)
# has no clean single-kernel Pallas equivalent and is not implemented here.

# --------------------------------- main -----------------------------------------
if __name__ == "__main__":
    key = jax.random.PRNGKey(0)
    k_par, k_lat, k_ids = jax.random.split(key, 3)

    params = init_params(k_par)
    latents = jax.random.normal(k_lat, (B, LATENT), dtype=jnp.float32)
    input_ids = jax.random.randint(k_ids, (B, S), 0, V, dtype=jnp.int32)
    attention_mask = jnp.ones((B, S), jnp.float32)
    labels = input_ids

    out = sequence_latent_to_text_forward(latents, input_ids, attention_mask,
                                          labels, params)
    jax.block_until_ready(out)
    assert out["logits"].shape == (B, S, V)
    assert jnp.isfinite(out["loss"])
    print("KERNEL_OK")
</pallas_src>

<mosaic_0001>
module attributes {stable_mosaic.version = 11 : i64} {
  func.func @fused_kernel(%arg0: memref<2x32xf32, #tpu.memory_space<vmem>>, %arg1: memref<2x8xi32, #tpu.memory_space<vmem>>, %arg2: memref<2x8xf32, #tpu.memory_space<vmem>>, %arg3: memref<2x8xi32, #tpu.memory_space<vmem>>, %arg4: memref<32x16xbf16, #tpu.memory_space<vmem>>, %arg5: memref<1x16xf32, #tpu.memory_space<vmem>>, %arg6: memref<1x16xf32, #tpu.memory_space<vmem>>, %arg7: memref<1x16xf32, #tpu.memory_space<vmem>>, %arg8: memref<16x32xbf16, #tpu.memory_space<vmem>>, %arg9: memref<1x32xf32, #tpu.memory_space<vmem>>, %arg10: memref<128x32xbf16, #tpu.memory_space<vmem>>, %arg11: memref<8x32xf32, #tpu.memory_space<vmem>>, %arg12: memref<2x1x32xf32, #tpu.memory_space<vmem>>, %arg13: memref<2x1x32xf32, #tpu.memory_space<vmem>>, %arg14: memref<2x2x32x16xbf16, #tpu.memory_space<vmem>>, %arg15: memref<2x2x32x16xbf16, #tpu.memory_space<vmem>>, %arg16: memref<2x2x32x16xbf16, #tpu.memory_space<vmem>>, %arg17: memref<2x2x1x16xf32, #tpu.memory_space<vmem>>, %arg18: memref<2x2x1x16xf32, #tpu.memory_space<vmem>>, %arg19: memref<2x2x1x16xf32, #tpu.memory_space<vmem>>, %arg20: memref<2x2x16x32xbf16, #tpu.memory_space<vmem>>, %arg21: memref<2x1x32xf32, #tpu.memory_space<vmem>>, %arg22: memref<2x1x32xf32, #tpu.memory_space<vmem>>, %arg23: memref<2x1x32xf32, #tpu.memory_space<vmem>>, %arg24: memref<2x32x128xbf16, #tpu.memory_space<vmem>>, %arg25: memref<2x1x128xf32, #tpu.memory_space<vmem>>, %arg26: memref<2x128x32xbf16, #tpu.memory_space<vmem>>, %arg27: memref<2x1x32xf32, #tpu.memory_space<vmem>>, %arg28: memref<1x32xf32, #tpu.memory_space<vmem>>, %arg29: memref<1x32xf32, #tpu.memory_space<vmem>>, %arg30: memref<32x128xbf16, #tpu.memory_space<vmem>>, %arg31: memref<2x8x128xf32, #tpu.memory_space<vmem>>, %arg32: memref<8x128xf32, #tpu.memory_space<vmem>>) attributes {dimension_semantics = [], scalar_prefetch = 0 : i64, scratch_operands = 0 : i64, tpu.core_type = #tpu.core_type<tc>} {
    %c0 = arith.constant 0 : index
    %c0_0 = arith.constant 0 : index
    %0 = vector.load %arg0[%c0, %c0_0] : memref<2x32xf32, #tpu.memory_space<vmem>>, vector<2x32xf32>
    %1 = arith.truncf %0 : vector<2x32xf32> to vector<2x32xbf16>
    %c0_1 = arith.constant 0 : index
    %c0_2 = arith.constant 0 : index
    %2 = vector.load %arg4[%c0_1, %c0_2] : memref<32x16xbf16, #tpu.memory_space<vmem>>, vector<32x16xbf16>
    %cst = arith.constant dense<0.000000e+00> : vector<2x16xf32>
    %3 = tpu.matmul %1, %2, %cst {dimension_numbers = #tpu.dot_dimension_numbers<[1], [0], [0], [1], [0, 0, 1, 1], [], []>} : vector<2x32xbf16>, vector<32x16xbf16>, vector<2x16xf32> -> vector<2x16xf32>
    %c0_3 = arith.constant 0 : index
    %c0_4 = arith.constant 0 : index
    %4 = vector.load %arg5[%c0_3, %c0_4] : memref<1x16xf32, #tpu.memory_space<vmem>>, vector<1x16xf32>
    %5 = vector.broadcast %4 : vector<1x16xf32> to vector<2x16xf32>
    %6 = arith.addf %3, %5 : vector<2x16xf32>
    %c0_5 = arith.constant 0 : index
    %c0_6 = arith.constant 0 : index
    %7 = vector.load %arg6[%c0_5, %c0_6] : memref<1x16xf32, #tpu.memory_space<vmem>>, vector<1x16xf32>
    %c0_7 = arith.constant 0 : index
    %c0_8 = arith.constant 0 : index
    %8 = vector.load %arg7[%c0_7, %c0_8] : memref<1x16xf32, #tpu.memory_space<vmem>>, vector<1x16xf32>
    %cst_9 = arith.constant dense<0.000000e+00> : vector<2xf32>
    %9 = vector.multi_reduction <add>, %6, %cst_9 [1] : vector<2x16xf32> to vector<2xf32>
    %10 = vector.shape_cast %9 : vector<2xf32> to vector<2x1xf32>
    %cst_10 = arith.constant 1.600000e+01 : f32
    %11 = vector.broadcast %cst_10 : f32 to vector<2x1xf32>
    %12 = arith.divf %10, %11 : vector<2x1xf32>
    %13 = vector.broadcast %12 : vector<2x1xf32> to vector<2x16xf32>
    %14 = arith.subf %6, %13 : vector<2x16xf32>
    %15 = arith.mulf %14, %14 : vector<2x16xf32>
    %cst_11 = arith.constant dense<0.000000e+00> : vector<2xf32>
    %16 = vector.multi_reduction <add>, %15, %cst_11 [1] : vector<2x16xf32> to vector<2xf32>
    %17 = vector.shape_cast %16 : vector<2xf32> to vector<2x1xf32>
    %cst_12 = arith.constant 1.600000e+01 : f32
    %18 = vector.broadcast %cst_12 : f32 to vector<2x1xf32>
    %19 = arith.divf %17, %18 : vector<2x1xf32>
    %20 = vector.broadcast %12 : vector<2x1xf32> to vector<2x16xf32>
    %21 = arith.subf %6, %20 : vector<2x16xf32>
    %cst_13 = arith.constant 9.99999974E-6 : f32
    %22 = vector.broadcast %cst_13 : f32 to vector<2x1xf32>
    %23 = arith.addf %19, %22 : vector<2x1xf32>
    %24 = math.rsqrt %23 : vector<2x1xf32>
    %25 = vector.broadcast %24 : vector<2x1xf32> to vector<2x16xf32>
    %26 = arith.mulf %21, %25 : vector<2x16xf32>
    %27 = vector.broadcast %7 : vector<1x16xf32> to vector<2x16xf32>
    %28 = arith.mulf %26, %27 : vector<2x16xf32>
    %29 = vector.broadcast %8 : vector<1x16xf32> to vector<2x16xf32>
    %30 = arith.addf %28, %29 : vector<2x16xf32>
    %31 = arith.mulf %30, %30 : vector<2x16xf32>
    %32 = arith.mulf %30, %31 : vector<2x16xf32>
    %cst_14 = arith.constant 4.471500e-02 : f32
    %33 = vector.broadcast %cst_14 : f32 to vector<2x16xf32>
    %34 = arith.mulf %33, %32 : vector<2x16xf32>
    %35 = arith.addf %30, %34 : vector<2x16xf32>
    %cst_15 = arith.constant 0.797884583 : f32
    %36 = vector.broadcast %cst_15 : f32 to vector<2x16xf32>
    %37 = arith.mulf %36, %35 : vector<2x16xf32>
    %38 = math.tanh %37 : vector<2x16xf32>
    %cst_16 = arith.constant 1.000000e+00 : f32
    %39 = vector.broadcast %cst_16 : f32 to vector<2x16xf32>
    %40 = arith.addf %39, %38 : vector<2x16xf32>
    %cst_17 = arith.constant 5.000000e-01 : f32
    %41 = vector.broadcast %cst_17 : f32 to vector<2x16xf32>
    %42 = arith.mulf %41, %40 : vector<2x16xf32>
    %43 = arith.mulf %30, %42 : vector<2x16xf32>
    %44 = arith.truncf %43 : vector<2x16xf32> to vector<2x16xbf16>
    %c0_18 = arith.constant 0 : index
    %c0_19 = arith.constant 0 : index
    %45 = vector.load %arg8[%c0_18, %c0_19] : memref<16x32xbf16, #tpu.memory_space<vmem>>, vector<16x32xbf16>
    %cst_20 = arith.constant dense<0.000000e+00> : vector<2x32xf32>
    %46 = tpu.matmul %44, %45, %cst_20 {dimension_numbers = #tpu.dot_dimension_numbers<[1], [0], [0], [1], [0, 0, 1, 1], [], []>} : vector<2x16xbf16>, vector<16x32xbf16>, vector<2x32xf32> -> vector<2x32xf32>
    %c0_21 = arith.constant 0 : index
    %c0_22 = arith.constant 0 : index
    %47 = vector.load %arg9[%c0_21, %c0_22] : memref<1x32xf32, #tpu.memory_space<vmem>>, vector<1x32xf32>
    %48 = vector.broadcast %47 : vector<1x32xf32> to vector<2x32xf32>
    %49 = arith.addf %46, %48 : vector<2x32xf32>
    %c0_23 = arith.constant 0 : index
    %c0_24 = arith.constant 0 : index
    %50 = vector.load %arg1[%c0_23, %c0_24] : memref<2x8xi32, #tpu.memory_space<vmem>>, vector<2x8xi32>
    %51 = tpu.iota {dimensions = array<i32: 2>} : vector<2x8x128xi32>
    %52 = tpu.iota {dimensions = array<i32: 1>} : vector<2x8x128xi32>
    %53 = vector.shape_cast %50 : vector<2x8xi32> to vector<2x8x1xi32>
    %54 = vector.broadcast %53 : vector<2x8x1xi32> to vector<2x8x128xi32>
    %55 = arith.cmpi eq, %51, %54 : vector<2x8x128xi32>
    %c0_i32 = arith.constant 0 : i32
    %56 = vector.broadcast %c0_i32 : i32 to vector<2x8x128xi32>
    %57 = arith.cmpi sgt, %52, %56 : vector<2x8x128xi32>
    %58 = arith.andi %55, %57 : vector<2x8x128xi1>
    %cst_25 = arith.constant 1.000000e+00 : f32
    %cst_26 = arith.constant 0.000000e+00 : f32
    %59 = vector.broadcast %cst_25 : f32 to vector<2x8x128xf32>
    %60 = vector.broadcast %cst_26 : f32 to vector<2x8x128xf32>
    %61 = arith.select %58, %59, %60 : vector<2x8x128xi1>, vector<2x8x128xf32>
    %62 = vector.shape_cast %61 : vector<2x8x128xf32> to vector<16x128xf32>
    %63 = arith.truncf %62 : vector<16x128xf32> to vector<16x128xbf16>
    %c0_27 = arith.constant 0 : index
    %c0_28 = arith.constant 0 : index
    %64 = vector.load %arg10[%c0_27, %c0_28] : memref<128x32xbf16, #tpu.memory_space<vmem>>, vector<128x32xbf16>
    %cst_29 = arith.constant dense<0.000000e+00> : vector<16x32xf32>
    %65 = tpu.matmul %63, %64, %cst_29 {dimension_numbers = #tpu.dot_dimension_numbers<[1], [0], [0], [1], [0, 0, 1, 1], [], []>} : vector<16x128xbf16>, vector<128x32xbf16>, vector<16x32xf32> -> vector<16x32xf32>
    %66 = vector.shape_cast %65 : vector<16x32xf32> to vector<2x8x32xf32>
    %67 = tpu.iota {dimensions = array<i32: 1>} : vector<2x8x32xi32>
    %c0_i32_30 = arith.constant 0 : i32
    %68 = vector.broadcast %c0_i32_30 : i32 to vector<2x8x32xi32>
    %69 = arith.cmpi eq, %67, %68 : vector<2x8x32xi32>
    %70 = vector.shape_cast %49 : vector<2x32xf32> to vector<2x1x32xf32>
    %71 = vector.shape_cast %70 : vector<2x1x32xf32> to vector<2x1x32xf32>
    %72 = vector.broadcast %71 : vector<2x1x32xf32> to vector<2x8x32xf32>
    %73 = arith.select %69, %72, %66 : vector<2x8x32xi1>, vector<2x8x32xf32>
    %c0_31 = arith.constant 0 : index
    %c0_32 = arith.constant 0 : index
    %74 = vector.load %arg11[%c0_31, %c0_32] : memref<8x32xf32, #tpu.memory_space<vmem>>, vector<8x32xf32>
    %75 = vector.shape_cast %74 : vector<8x32xf32> to vector<1x8x32xf32>
    %76 = vector.broadcast %75 : vector<1x8x32xf32> to vector<2x8x32xf32>
    %77 = arith.addf %73, %76 : vector<2x8x32xf32>
    %78 = vector.shape_cast %77 : vector<2x8x32xf32> to vector<16x32xf32>
    %79 = tpu.iota {dimensions = array<i32: 0>} : vector<8x8xi32>
    %80 = tpu.iota {dimensions = array<i32: 1>} : vector<8x8xi32>
    %81 = arith.cmpi sle, %80, %79 : vector<8x8xi32>
    %cst_33 = arith.constant 0.000000e+00 : f32
    %cst_34 = arith.constant -1.000000e+09 : f32
    %82 = vector.broadcast %cst_33 : f32 to vector<8x8xf32>
    %83 = vector.broadcast %cst_34 : f32 to vector<8x8xf32>
    %84 = arith.select %81, %82, %83 : vector<8x8xi1>, vector<8x8xf32>
    %c0_35 = arith.constant 0 : index
    %c0_36 = arith.constant 0 : index
    %85 = vector.load %arg2[%c0_35, %c0_36] : memref<2x8xf32, #tpu.memory_space<vmem>>, vector<2x8xf32>
    %cst_37 = arith.constant 1.000000e+00 : f32
    %86 = vector.broadcast %cst_37 : f32 to vector<2x8xf32>
    %87 = arith.subf %86, %85 : vector<2x8xf32>
    %cst_38 = arith.constant -1.000000e+09 : f32
    %88 = vector.broadcast %cst_38 : f32 to vector<2x8xf32>
    %89 = arith.mulf %87, %88 : vector<2x8xf32>
    %90 = vector.shape_cast %84 : vector<8x8xf32> to vector<1x8x8xf32>
    %91 = vector.shape_cast %89 : vector<2x8xf32> to vector<2x1x8xf32>
    %92 = vector.broadcast %90 : vector<1x8x8xf32> to vector<2x8x8xf32>
    %93 = vector.broadcast %91 : vector<2x1x8xf32> to vector<2x8x8xf32>
    %94 = arith.addf %92, %93 : vector<2x8x8xf32>
    %c0_39 = arith.constant 0 : index
    %c0_40 = arith.constant 0 : index
    %c0_41 = arith.constant 0 : index
    %95 = vector.load %arg12[%c0_39, %c0_40, %c0_41] : memref<2x1x32xf32, #tpu.memory_space<vmem>>, vector<1x1x32xf32>
    %96 = vector.shape_cast %95 : vector<1x1x32xf32> to vector<1x32xf32>
    %c0_42 = arith.constant 0 : index
    %c0_43 = arith.constant 0 : index
    %c0_44 = arith.constant 0 : index
    %97 = vector.load %arg13[%c0_42, %c0_43, %c0_44] : memref<2x1x32xf32, #tpu.memory_space<vmem>>, vector<1x1x32xf32>
    %98 = vector.shape_cast %97 : vector<1x1x32xf32> to vector<1x32xf32>
    %cst_45 = arith.constant dense<0.000000e+00> : vector<16xf32>
    %99 = vector.multi_reduction <add>, %78, %cst_45 [1] : vector<16x32xf32> to vector<16xf32>
    %100 = vector.shape_cast %99 : vector<16xf32> to vector<16x1xf32>
    %cst_46 = arith.constant 3.200000e+01 : f32
    %101 = vector.broadcast %cst_46 : f32 to vector<16x1xf32>
    %102 = arith.divf %100, %101 : vector<16x1xf32>
    %103 = vector.broadcast %102 : vector<16x1xf32> to vector<16x32xf32>
    %104 = arith.subf %78, %103 : vector<16x32xf32>
    %105 = arith.mulf %104, %104 : vector<16x32xf32>
    %cst_47 = arith.constant dense<0.000000e+00> : vector<16xf32>
    %106 = vector.multi_reduction <add>, %105, %cst_47 [1] : vector<16x32xf32> to vector<16xf32>
    %107 = vector.shape_cast %106 : vector<16xf32> to vector<16x1xf32>
    %cst_48 = arith.constant 3.200000e+01 : f32
    %108 = vector.broadcast %cst_48 : f32 to vector<16x1xf32>
    %109 = arith.divf %107, %108 : vector<16x1xf32>
    %110 = vector.broadcast %102 : vector<16x1xf32> to vector<16x32xf32>
    %111 = arith.subf %78, %110 : vector<16x32xf32>
    %cst_49 = arith.constant 9.99999974E-6 : f32
    %112 = vector.broadcast %cst_49 : f32 to vector<16x1xf32>
    %113 = arith.addf %109, %112 : vector<16x1xf32>
    %114 = math.rsqrt %113 : vector<16x1xf32>
    %115 = vector.broadcast %114 : vector<16x1xf32> to vector<16x32xf32>
    %116 = arith.mulf %111, %115 : vector<16x32xf32>
    %117 = vector.broadcast %96 : vector<1x32xf32> to vector<16x32xf32>
    %118 = arith.mulf %116, %117 : vector<16x32xf32>
    %119 = vector.broadcast %98 : vector<1x32xf32> to vector<16x32xf32>
    %120 = arith.addf %118, %119 : vector<16x32xf32>
    %121 = arith.truncf %120 : vector<16x32xf32> to vector<16x32xbf16>
    %c0_50 = arith.constant 0 : index
    %c0_51 = arith.constant 0 : index
    %c0_52 = arith.constant 0 : index
    %c0_53 = arith.constant 0 : index
    %122 = vector.load %arg14[%c0_50, %c0_51, %c0_52, %c0_53] : memref<2x2x32x16xbf16, #tpu.memory_space<vmem>>, vector<1x1x32x16xbf16>
    %123 = vector.shape_cast %122 : vector<1x1x32x16xbf16> to vector<32x16xbf16>
    %cst_54 = arith.constant dense<0.000000e+00> : vector<16x16xf32>
    %124 = tpu.matmul %121, %123, %cst_54 {dimension_numbers = #tpu.dot_dimension_numbers<[1], [0], [0], [1], [0, 0, 1, 1], [], []>} : vector<16x32xbf16>, vector<32x16xbf16>, vector<16x16xf32> -> vector<16x16xf32>
    %c0_55 = arith.constant 0 : index
    %c0_56 = arith.constant 0 : index
    %c0_57 = arith.constant 0 : index
    %c0_58 = arith.constant 0 : index
    %125 = vector.load %arg17[%c0_55, %c0_56, %c0_57, %c0_58] : memref<2x2x1x16xf32, #tpu.memory_space<vmem>>, vector<1x1x1x16xf32>
    %126 = vector.shape_cast %125 : vector<1x1x1x16xf32> to vector<1x16xf32>
    %127 = vector.broadcast %126 : vector<1x16xf32> to vector<16x16xf32>
    %128 = arith.addf %124, %127 : vector<16x16xf32>
    %c0_59 = arith.constant 0 : index
    %c0_60 = arith.constant 0 : index
    %c0_61 = arith.constant 0 : index
    %c0_62 = arith.constant 0 : index
    %129 = vector.load %arg15[%c0_59, %c0_60, %c0_61, %c0_62] : memref<2x2x32x16xbf16, #tpu.memory_space<vmem>>, vector<1x1x32x16xbf16>
    %130 = vector.shape_cast %129 : vector<1x1x32x16xbf16> to vector<32x16xbf16>
    %cst_63 = arith.constant dense<0.000000e+00> : vector<16x16xf32>
    %131 = tpu.matmul %121, %130, %cst_63 {dimension_numbers = #tpu.dot_dimension_numbers<[1], [0], [0], [1], [0, 0, 1, 1], [], []>} : vector<16x32xbf16>, vector<32x16xbf16>, vector<16x16xf32> -> vector<16x16xf32>
    %c0_64 = arith.constant 0 : index
    %c0_65 = arith.constant 0 : index
    %c0_66 = arith.constant 0 : index
    %c0_67 = arith.constant 0 : index
    %132 = vector.load %arg18[%c0_64, %c0_65, %c0_66, %c0_67] : memref<2x2x1x16xf32, #tpu.memory_space<vmem>>, vector<1x1x1x16xf32>
    %133 = vector.shape_cast %132 : vector<1x1x1x16xf32> to vector<1x16xf32>
    %134 = vector.broadcast %133 : vector<1x16xf32> to vector<16x16xf32>
    %135 = arith.addf %131, %134 : vector<16x16xf32>
    %c0_68 = arith.constant 0 : index
    %c0_69 = arith.constant 0 : index
    %c0_70 = arith.constant 0 : index
    %c0_71 = arith.constant 0 : index
    %136 = vector.load %arg16[%c0_68, %c0_69, %c0_70, %c0_71] : memref<2x2x32x16xbf16, #tpu.memory_space<vmem>>, vector<1x1x32x16xbf16>
    %137 = vector.shape_cast %136 : vector<1x1x32x16xbf16> to vector<32x16xbf16>
    %cst_72 = arith.constant dense<0.000000e+00> : vector<16x16xf32>
    %138 = tpu.matmul %121, %137, %cst_72 {dimension_numbers = #tpu.dot_dimension_numbers<[1], [0], [0], [1], [0, 0, 1, 1], [], []>} : vector<16x32xbf16>, vector<32x16xbf16>, vector<16x16xf32> -> vector<16x16xf32>
    %c0_73 = arith.constant 0 : index
    %c0_74 = arith.constant 0 : index
    %c0_75 = arith.constant 0 : index
    %c0_76 = arith.constant 0 : index
    %139 = vector.load %arg19[%c0_73, %c0_74, %c0_75, %c0_76] : memref<2x2x1x16xf32, #tpu.memory_space<vmem>>, vector<1x1x1x16xf32>
    %140 = vector.shape_cast %139 : vector<1x1x1x16xf32> to vector<1x16xf32>
    %141 = vector.broadcast %140 : vector<1x16xf32> to vector<16x16xf32>
    %142 = arith.addf %138, %141 : vector<16x16xf32>
    %143 = vector.shape_cast %128 : vector<16x16xf32> to vector<2x8x16xf32>
    %144 = arith.truncf %143 : vector<2x8x16xf32> to vector<2x8x16xbf16>
    %145 = vector.shape_cast %135 : vector<16x16xf32> to vector<2x8x16xf32>
    %146 = arith.truncf %145 : vector<2x8x16xf32> to vector<2x8x16xbf16>
    "tpu.trace_start"() <{level = 10 : i32, message = "bqd,bkd->bqk"}> : () -> ()
    %cst_77 = arith.constant dense<0.000000e+00> : vector<2x8x8xf32>
    %147 = tpu.matmul %144, %146, %cst_77 {dimension_numbers = #tpu.dot_dimension_numbers<[2], [2], [1], [1], [0, 0, 0, 1, 1, 1], [0], [0]>} : vector<2x8x16xbf16>, vector<2x8x16xbf16>, vector<2x8x8xf32> -> vector<2x8x8xf32>
    "tpu.trace_stop"() : () -> ()
    %cst_78 = arith.constant 2.500000e-01 : f32
    %148 = vector.broadcast %cst_78 : f32 to vector<2x8x8xf32>
    %149 = arith.mulf %147, %148 : vector<2x8x8xf32>
    %150 = arith.addf %149, %94 : vector<2x8x8xf32>
    %cst_79 = arith.constant dense<0xFF800000> : vector<2x8xf32>
    %151 = vector.multi_reduction <maximumf>, %150, %cst_79 [2] : vector<2x8x8xf32> to vector<2x8xf32>
    %152 = vector.shape_cast %151 : vector<2x8xf32> to vector<2x8x1xf32>
    %153 = vector.broadcast %152 : vector<2x8x1xf32> to vector<2x8x8xf32>
    %154 = arith.subf %150, %153 : vector<2x8x8xf32>
    %155 = math.exp %154 : vector<2x8x8xf32>
    %cst_80 = arith.constant dense<0.000000e+00> : vector<2x8xf32>
    %156 = vector.multi_reduction <add>, %155, %cst_80 [2] : vector<2x8x8xf32> to vector<2x8xf32>
    %157 = vector.shape_cast %156 : vector<2x8xf32> to vector<2x8x1xf32>
    %158 = vector.broadcast %157 : vector<2x8x1xf32> to vector<2x8x8xf32>
    %159 = arith.divf %155, %158 : vector<2x8x8xf32>
    %160 = arith.truncf %159 : vector<2x8x8xf32> to vector<2x8x8xbf16>
    %161 = vector.shape_cast %142 : vector<16x16xf32> to vector<2x8x16xf32>
    %162 = arith.truncf %161 : vector<2x8x16xf32> to vector<2x8x16xbf16>
    "tpu.trace_start"() <{level = 10 : i32, message = "bqk,bkd->bqd"}> : () -> ()
    %cst_81 = arith.constant dense<0.000000e+00> : vector<2x8x16xf32>
    %163 = tpu.matmul %160, %162, %cst_81 {dimension_numbers = #tpu.dot_dimension_numbers<[2], [1], [1], [2], [0, 0, 0, 1, 1, 2], [0], [0]>} : vector<2x8x8xbf16>, vector<2x8x16xbf16>, vector<2x8x16xf32> -> vector<2x8x16xf32>
    "tpu.trace_stop"() : () -> ()
    %164 = vector.shape_cast %163 : vector<2x8x16xf32> to vector<16x16xf32>
    %165 = arith.truncf %164 : vector<16x16xf32> to vector<16x16xbf16>
    %c0_82 = arith.constant 0 : index
    %c0_83 = arith.constant 0 : index
    %c0_84 = arith.constant 0 : index
    %c0_85 = arith.constant 0 : index
    %166 = vector.load %arg20[%c0_82, %c0_83, %c0_84, %c0_85] : memref<2x2x16x32xbf16, #tpu.memory_space<vmem>>, vector<1x1x16x32xbf16>
    %167 = vector.shape_cast %166 : vector<1x1x16x32xbf16> to vector<16x32xbf16>
    %cst_86 = arith.constant dense<0.000000e+00> : vector<16x32xf32>
    %168 = tpu.matmul %165, %167, %cst_86 {dimension_numbers = #tpu.dot_dimension_numbers<[1], [0], [0], [1], [0, 0, 1, 1], [], []>} : vector<16x16xbf16>, vector<16x32xbf16>, vector<16x32xf32> -> vector<16x32xf32>
    %c0_87 = arith.constant 0 : index
    %c1 = arith.constant 1 : index
    %c0_88 = arith.constant 0 : index
    %c0_89 = arith.constant 0 : index
    %169 = vector.load %arg14[%c0_87, %c1, %c0_88, %c0_89] : memref<2x2x32x16xbf16, #tpu.memory_space<vmem>>, vector<1x1x32x16xbf16>
    %170 = vector.shape_cast %169 : vector<1x1x32x16xbf16> to vector<32x16xbf16>
    %cst_90 = arith.constant dense<0.000000e+00> : vector<16x16xf32>
    %171 = tpu.matmul %121, %170, %cst_90 {dimension_numbers = #tpu.dot_dimension_numbers<[1], [0], [0], [1], [0, 0, 1, 1], [], []>} : vector<16x32xbf16>, vector<32x16xbf16>, vector<16x16xf32> -> vector<16x16xf32>
    %c0_91 = arith.constant 0 : index
    %c1_92 = arith.constant 1 : index
    %c0_93 = arith.constant 0 : index
    %c0_94 = arith.constant 0 : index
    %172 = vector.load %arg17[%c0_91, %c1_92, %c0_93, %c0_94] : memref<2x2x1x16xf32, #tpu.memory_space<vmem>>, vector<1x1x1x16xf32>
    %173 = vector.shape_cast %172 : vector<1x1x1x16xf32> to vector<1x16xf32>
    %174 = vector.broadcast %173 : vector<1x16xf32> to vector<16x16xf32>
    %175 = arith.addf %171, %174 : vector<16x16xf32>
    %c0_95 = arith.constant 0 : index
    %c1_96 = arith.constant 1 : index
    %c0_97 = arith.constant 0 : index
    %c0_98 = arith.constant 0 : index
    %176 = vector.load %arg15[%c0_95, %c1_96, %c0_97, %c0_98] : memref<2x2x32x16xbf16, #tpu.memory_space<vmem>>, vector<1x1x32x16xbf16>
    %177 = vector.shape_cast %176 : vector<1x1x32x16xbf16> to vector<32x16xbf16>
    %cst_99 = arith.constant dense<0.000000e+00> : vector<16x16xf32>
    %178 = tpu.matmul %121, %177, %cst_99 {dimension_numbers = #tpu.dot_dimension_numbers<[1], [0], [0], [1], [0, 0, 1, 1], [], []>} : vector<16x32xbf16>, vector<32x16xbf16>, vector<16x16xf32> -> vector<16x16xf32>
    %c0_100 = arith.constant 0 : index
    %c1_101 = arith.constant 1 : index
    %c0_102 = arith.constant 0 : index
    %c0_103 = arith.constant 0 : index
    %179 = vector.load %arg18[%c0_100, %c1_101, %c0_102, %c0_103] : memref<2x2x1x16xf32, #tpu.memory_space<vmem>>, vector<1x1x1x16xf32>
    %180 = vector.shape_cast %179 : vector<1x1x1x16xf32> to vector<1x16xf32>
    %181 = vector.broadcast %180 : vector<1x16xf32> to vector<16x16xf32>
    %182 = arith.addf %178, %181 : vector<16x16xf32>
    %c0_104 = arith.constant 0 : index
    %c1_105 = arith.constant 1 : index
    %c0_106 = arith.constant 0 : index
    %c0_107 = arith.constant 0 : index
    %183 = vector.load %arg16[%c0_104, %c1_105, %c0_106, %c0_107] : memref<2x2x32x16xbf16, #tpu.memory_space<vmem>>, vector<1x1x32x16xbf16>
    %184 = vector.shape_cast %183 : vector<1x1x32x16xbf16> to vector<32x16xbf16>
    %cst_108 = arith.constant dense<0.000000e+00> : vector<16x16xf32>
    %185 = tpu.matmul %121, %184, %cst_108 {dimension_numbers = #tpu.dot_dimension_numbers<[1], [0], [0], [1], [0, 0, 1, 1], [], []>} : vector<16x32xbf16>, vector<32x16xbf16>, vector<16x16xf32> -> vector<16x16xf32>
    %c0_109 = arith.constant 0 : index
    %c1_110 = arith.constant 1 : index
    %c0_111 = arith.constant 0 : index
    %c0_112 = arith.constant 0 : index
    %186 = vector.load %arg19[%c0_109, %c1_110, %c0_111, %c0_112] : memref<2x2x1x16xf32, #tpu.memory_space<vmem>>, vector<1x1x1x16xf32>
    %187 = vector.shape_cast %186 : vector<1x1x1x16xf32> to vector<1x16xf32>
    %188 = vector.broadcast %187 : vector<1x16xf32> to vector<16x16xf32>
    %189 = arith.addf %185, %188 : vector<16x16xf32>
    %190 = vector.shape_cast %175 : vector<16x16xf32> to vector<2x8x16xf32>
    %191 = arith.truncf %190 : vector<2x8x16xf32> to vector<2x8x16xbf16>
    %192 = vector.shape_cast %182 : vector<16x16xf32> to vector<2x8x16xf32>
    %193 = arith.truncf %192 : vector<2x8x16xf32> to vector<2x8x16xbf16>
    "tpu.trace_start"() <{level = 10 : i32, message = "bqd,bkd->bqk"}> : () -> ()
    %cst_113 = arith.constant dense<0.000000e+00> : vector<2x8x8xf32>
    %194 = tpu.matmul %191, %193, %cst_113 {dimension_numbers = #tpu.dot_dimension_numbers<[2], [2], [1], [1], [0, 0, 0, 1, 1, 1], [0], [0]>} : vector<2x8x16xbf16>, vector<2x8x16xbf16>, vector<2x8x8xf32> -> vector<2x8x8xf32>
    "tpu.trace_stop"() : () -> ()
    %cst_114 = arith.constant 2.500000e-01 : f32
    %195 = vector.broadcast %cst_114 : f32 to vector<2x8x8xf32>
    %196 = arith.mulf %194, %195 : vector<2x8x8xf32>
    %197 = arith.addf %196, %94 : vector<2x8x8xf32>
    %cst_115 = arith.constant dense<0xFF800000> : vector<2x8xf32>
    %198 = vector.multi_reduction <maximumf>, %197, %cst_115 [2] : vector<2x8x8xf32> to vector<2x8xf32>
    %199 = vector.shape_cast %198 : vector<2x8xf32> to vector<2x8x1xf32>
    %200 = vector.broadcast %199 : vector<2x8x1xf32> to vector<2x8x8xf32>
    %201 = arith.subf %197, %200 : vector<2x8x8xf32>
    %202 = math.exp %201 : vector<2x8x8xf32>
    %cst_116 = arith.constant dense<0.000000e+00> : vector<2x8xf32>
    %203 = vector.multi_reduction <add>, %202, %cst_116 [2] : vector<2x8x8xf32> to vector<2x8xf32>
    %204 = vector.shape_cast %203 : vector<2x8xf32> to vector<2x8x1xf32>
    %205 = vector.broadcast %204 : vector<2x8x1xf32> to vector<2x8x8xf32>
    %206 = arith.divf %202, %205 : vector<2x8x8xf32>
    %207 = arith.truncf %206 : vector<2x8x8xf32> to vector<2x8x8xbf16>
    %208 = vector.shape_cast %189 : vector<16x16xf32> to vector<2x8x16xf32>
    %209 = arith.truncf %208 : vector<2x8x16xf32> to vector<2x8x16xbf16>
    "tpu.trace_start"() <{level = 10 : i32, message = "bqk,bkd->bqd"}> : () -> ()
    %cst_117 = arith.constant dense<0.000000e+00> : vector<2x8x16xf32>
    %210 = tpu.matmul %207, %209, %cst_117 {dimension_numbers = #tpu.dot_dimension_numbers<[2], [1], [1], [2], [0, 0, 0, 1, 1, 2], [0], [0]>} : vector<2x8x8xbf16>, vector<2x8x16xbf16>, vector<2x8x16xf32> -> vector<2x8x16xf32>
    "tpu.trace_stop"() : () -> ()
    %211 = vector.shape_cast %210 : vector<2x8x16xf32> to vector<16x16xf32>
    %212 = arith.truncf %211 : vector<16x16xf32> to vector<16x16xbf16>
    %c0_118 = arith.constant 0 : index
    %c1_119 = arith.constant 1 : index
    %c0_120 = arith.constant 0 : index
    %c0_121 = arith.constant 0 : index
    %213 = vector.load %arg20[%c0_118, %c1_119, %c0_120, %c0_121] : memref<2x2x16x32xbf16, #tpu.memory_space<vmem>>, vector<1x1x16x32xbf16>
    %214 = vector.shape_cast %213 : vector<1x1x16x32xbf16> to vector<16x32xbf16>
    %cst_122 = arith.constant dense<0.000000e+00> : vector<16x32xf32>
    %215 = tpu.matmul %212, %214, %cst_122 {dimension_numbers = #tpu.dot_dimension_numbers<[1], [0], [0], [1], [0, 0, 1, 1], [], []>} : vector<16x16xbf16>, vector<16x32xbf16>, vector<16x32xf32> -> vector<16x32xf32>
    %216 = arith.addf %168, %215 : vector<16x32xf32>
    %217 = arith.addf %78, %216 : vector<16x32xf32>
    %c0_123 = arith.constant 0 : index
    %c0_124 = arith.constant 0 : index
    %c0_125 = arith.constant 0 : index
    %218 = vector.load %arg21[%c0_123, %c0_124, %c0_125] : memref<2x1x32xf32, #tpu.memory_space<vmem>>, vector<1x1x32xf32>
    %219 = vector.shape_cast %218 : vector<1x1x32xf32> to vector<1x32xf32>
    %220 = vector.broadcast %219 : vector<1x32xf32> to vector<16x32xf32>
    %221 = arith.addf %217, %220 : vector<16x32xf32>
    %c0_126 = arith.constant 0 : index
    %c0_127 = arith.constant 0 : index
    %c0_128 = arith.constant 0 : index
    %222 = vector.load %arg22[%c0_126, %c0_127, %c0_128] : memref<2x1x32xf32, #tpu.memory_space<vmem>>, vector<1x1x32xf32>
    %223 = vector.shape_cast %222 : vector<1x1x32xf32> to vector<1x32xf32>
    %c0_129 = arith.constant 0 : index
    %c0_130 = arith.constant 0 : index
    %c0_131 = arith.constant 0 : index
    %224 = vector.load %arg23[%c0_129, %c0_130, %c0_131] : memref<2x1x32xf32, #tpu.memory_space<vmem>>, vector<1x1x32xf32>
    %225 = vector.shape_cast %224 : vector<1x1x32xf32> to vector<1x32xf32>
    %cst_132 = arith.constant dense<0.000000e+00> : vector<16xf32>
    %226 = vector.multi_reduction <add>, %221, %cst_132 [1] : vector<16x32xf32> to vector<16xf32>
    %227 = vector.shape_cast %226 : vector<16xf32> to vector<16x1xf32>
    %cst_133 = arith.constant 3.200000e+01 : f32
    %228 = vector.broadcast %cst_133 : f32 to vector<16x1xf32>
    %229 = arith.divf %227, %228 : vector<16x1xf32>
    %230 = vector.broadcast %229 : vector<16x1xf32> to vector<16x32xf32>
    %231 = arith.subf %221, %230 : vector<16x32xf32>
    %232 = arith.mulf %231, %231 : vector<16x32xf32>
    %cst_134 = arith.constant dense<0.000000e+00> : vector<16xf32>
    %233 = vector.multi_reduction <add>, %232, %cst_134 [1] : vector<16x32xf32> to vector<16xf32>
    %234 = vector.shape_cast %233 : vector<16xf32> to vector<16x1xf32>
    %cst_135 = arith.constant 3.200000e+01 : f32
    %235 = vector.broadcast %cst_135 : f32 to vector<16x1xf32>
    %236 = arith.divf %234, %235 : vector<16x1xf32>
    %237 = vector.broadcast %229 : vector<16x1xf32> to vector<16x32xf32>
    %238 = arith.subf %221, %237 : vector<16x32xf32>
    %cst_136 = arith.constant 9.99999974E-6 : f32
    %239 = vector.broadcast %cst_136 : f32 to vector<16x1xf32>
    %240 = arith.addf %236, %239 : vector<16x1xf32>
    %241 = math.rsqrt %240 : vector<16x1xf32>
    %242 = vector.broadcast %241 : vector<16x1xf32> to vector<16x32xf32>
    %243 = arith.mulf %238, %242 : vector<16x32xf32>
    %244 = vector.broadcast %223 : vector<1x32xf32> to vector<16x32xf32>
    %245 = arith.mulf %243, %244 : vector<16x32xf32>
    %246 = vector.broadcast %225 : vector<1x32xf32> to vector<16x32xf32>
    %247 = arith.addf %245, %246 : vector<16x32xf32>
    %248 = arith.truncf %247 : vector<16x32xf32> to vector<16x32xbf16>
    %c0_137 = arith.constant 0 : index
    %c0_138 = arith.constant 0 : index
    %c0_139 = arith.constant 0 : index
    %249 = vector.load %arg24[%c0_137, %c0_138, %c0_139] : memref<2x32x128xbf16, #tpu.memory_space<vmem>>, vector<1x32x128xbf16>
    %250 = vector.shape_cast %249 : vector<1x32x128xbf16> to vector<32x128xbf16>
    %cst_140 = arith.constant dense<0.000000e+00> : vector<16x128xf32>
    %251 = tpu.matmul %248, %250, %cst_140 {dimension_numbers = #tpu.dot_dimension_numbers<[1], [0], [0], [1], [0, 0, 1, 1], [], []>} : vector<16x32xbf16>, vector<32x128xbf16>, vector<16x128xf32> -> vector<16x128xf32>
    %c0_141 = arith.constant 0 : index
    %c0_142 = arith.constant 0 : index
    %c0_143 = arith.constant 0 : index
    %252 = vector.load %arg25[%c0_141, %c0_142, %c0_143] : memref<2x1x128xf32, #tpu.memory_space<vmem>>, vector<1x1x128xf32>
    %253 = vector.shape_cast %252 : vector<1x1x128xf32> to vector<1x128xf32>
    %254 = vector.broadcast %253 : vector<1x128xf32> to vector<16x128xf32>
    %255 = arith.addf %251, %254 : vector<16x128xf32>
    %256 = arith.mulf %255, %255 : vector<16x128xf32>
    %257 = arith.mulf %255, %256 : vector<16x128xf32>
    %cst_144 = arith.constant 4.471500e-02 : f32
    %258 = vector.broadcast %cst_144 : f32 to vector<16x128xf32>
    %259 = arith.mulf %258, %257 : vector<16x128xf32>
    %260 = arith.addf %255, %259 : vector<16x128xf32>
    %cst_145 = arith.constant 0.797884583 : f32
    %261 = vector.broadcast %cst_145 : f32 to vector<16x128xf32>
    %262 = arith.mulf %261, %260 : vector<16x128xf32>
    %263 = math.tanh %262 : vector<16x128xf32>
    %cst_146 = arith.constant 1.000000e+00 : f32
    %264 = vector.broadcast %cst_146 : f32 to vector<16x128xf32>
    %265 = arith.addf %264, %263 : vector<16x128xf32>
    %cst_147 = arith.constant 5.000000e-01 : f32
    %266 = vector.broadcast %cst_147 : f32 to vector<16x128xf32>
    %267 = arith.mulf %266, %265 : vector<16x128xf32>
    %268 = arith.mulf %255, %267 : vector<16x128xf32>
    %269 = arith.truncf %268 : vector<16x128xf32> to vector<16x128xbf16>
    %c0_148 = arith.constant 0 : index
    %c0_149 = arith.constant 0 : index
    %c0_150 = arith.constant 0 : index
    %270 = vector.load %arg26[%c0_148, %c0_149, %c0_150] : memref<2x128x32xbf16, #tpu.memory_space<vmem>>, vector<1x128x32xbf16>
    %271 = vector.shape_cast %270 : vector<1x128x32xbf16> to vector<128x32xbf16>
    %cst_151 = arith.constant dense<0.000000e+00> : vector<16x32xf32>
    %272 = tpu.matmul %269, %271, %cst_151 {dimension_numbers = #tpu.dot_dimension_numbers<[1], [0], [0], [1], [0, 0, 1, 1], [], []>} : vector<16x128xbf16>, vector<128x32xbf16>, vector<16x32xf32> -> vector<16x32xf32>
    %273 = arith.addf %221, %272 : vector<16x32xf32>
    %c0_152 = arith.constant 0 : index
    %c0_153 = arith.constant 0 : index
    %c0_154 = arith.constant 0 : index
    %274 = vector.load %arg27[%c0_152, %c0_153, %c0_154] : memref<2x1x32xf32, #tpu.memory_space<vmem>>, vector<1x1x32xf32>
    %275 = vector.shape_cast %274 : vector<1x1x32xf32> to vector<1x32xf32>
    %276 = vector.broadcast %275 : vector<1x32xf32> to vector<16x32xf32>
    %277 = arith.addf %273, %276 : vector<16x32xf32>
    %c1_155 = arith.constant 1 : index
    %c0_156 = arith.constant 0 : index
    %c0_157 = arith.constant 0 : index
    %278 = vector.load %arg12[%c1_155, %c0_156, %c0_157] : memref<2x1x32xf32, #tpu.memory_space<vmem>>, vector<1x1x32xf32>
    %279 = vector.shape_cast %278 : vector<1x1x32xf32> to vector<1x32xf32>
    %c1_158 = arith.constant 1 : index
    %c0_159 = arith.constant 0 : index
    %c0_160 = arith.constant 0 : index
    %280 = vector.load %arg13[%c1_158, %c0_159, %c0_160] : memref<2x1x32xf32, #tpu.memory_space<vmem>>, vector<1x1x32xf32>
    %281 = vector.shape_cast %280 : vector<1x1x32xf32> to vector<1x32xf32>
    %cst_161 = arith.constant dense<0.000000e+00> : vector<16xf32>
    %282 = vector.multi_reduction <add>, %277, %cst_161 [1] : vector<16x32xf32> to vector<16xf32>
    %283 = vector.shape_cast %282 : vector<16xf32> to vector<16x1xf32>
    %cst_162 = arith.constant 3.200000e+01 : f32
    %284 = vector.broadcast %cst_162 : f32 to vector<16x1xf32>
    %285 = arith.divf %283, %284 : vector<16x1xf32>
    %286 = vector.broadcast %285 : vector<16x1xf32> to vector<16x32xf32>
    %287 = arith.subf %277, %286 : vector<16x32xf32>
    %288 = arith.mulf %287, %287 : vector<16x32xf32>
    %cst_163 = arith.constant dense<0.000000e+00> : vector<16xf32>
    %289 = vector.multi_reduction <add>, %288, %cst_163 [1] : vector<16x32xf32> to vector<16xf32>
    %290 = vector.shape_cast %289 : vector<16xf32> to vector<16x1xf32>
    %cst_164 = arith.constant 3.200000e+01 : f32
    %291 = vector.broadcast %cst_164 : f32 to vector<16x1xf32>
    %292 = arith.divf %290, %291 : vector<16x1xf32>
    %293 = vector.broadcast %285 : vector<16x1xf32> to vector<16x32xf32>
    %294 = arith.subf %277, %293 : vector<16x32xf32>
    %cst_165 = arith.constant 9.99999974E-6 : f32
    %295 = vector.broadcast %cst_165 : f32 to vector<16x1xf32>
    %296 = arith.addf %292, %295 : vector<16x1xf32>
    %297 = math.rsqrt %296 : vector<16x1xf32>
    %298 = vector.broadcast %297 : vector<16x1xf32> to vector<16x32xf32>
    %299 = arith.mulf %294, %298 : vector<16x32xf32>
    %300 = vector.broadcast %279 : vector<1x32xf32> to vector<16x32xf32>
    %301 = arith.mulf %299, %300 : vector<16x32xf32>
    %302 = vector.broadcast %281 : vector<1x32xf32> to vector<16x32xf32>
    %303 = arith.addf %301, %302 : vector<16x32xf32>
    %304 = arith.truncf %303 : vector<16x32xf32> to vector<16x32xbf16>
    %c1_166 = arith.constant 1 : index
    %c0_167 = arith.constant 0 : index
    %c0_168 = arith.constant 0 : index
    %c0_169 = arith.constant 0 : index
    %305 = vector.load %arg14[%c1_166, %c0_167, %c0_168, %c0_169] : memref<2x2x32x16xbf16, #tpu.memory_space<vmem>>, vector<1x1x32x16xbf16>
    %306 = vector.shape_cast %305 : vector<1x1x32x16xbf16> to vector<32x16xbf16>
    %cst_170 = arith.constant dense<0.000000e+00> : vector<16x16xf32>
    %307 = tpu.matmul %304, %306, %cst_170 {dimension_numbers = #tpu.dot_dimension_numbers<[1], [0], [0], [1], [0, 0, 1, 1], [], []>} : vector<16x32xbf16>, vector<32x16xbf16>, vector<16x16xf32> -> vector<16x16xf32>
    %c1_171 = arith.constant 1 : index
    %c0_172 = arith.constant 0 : index
    %c0_173 = arith.constant 0 : index
    %c0_174 = arith.constant 0 : index
    %308 = vector.load %arg17[%c1_171, %c0_172, %c0_173, %c0_174] : memref<2x2x1x16xf32, #tpu.memory_space<vmem>>, vector<1x1x1x16xf32>
    %309 = vector.shape_cast %308 : vector<1x1x1x16xf32> to vector<1x16xf32>
    %310 = vector.broadcast %309 : vector<1x16xf32> to vector<16x16xf32>
    %311 = arith.addf %307, %310 : vector<16x16xf32>
    %c1_175 = arith.constant 1 : index
    %c0_176 = arith.constant 0 : index
    %c0_177 = arith.constant 0 : index
    %c0_178 = arith.constant 0 : index
    %312 = vector.load %arg15[%c1_175, %c0_176, %c0_177, %c0_178] : memref<2x2x32x16xbf16, #tpu.memory_space<vmem>>, vector<1x1x32x16xbf16>
    %313 = vector.shape_cast %312 : vector<1x1x32x16xbf16> to vector<32x16xbf16>
    %cst_179 = arith.constant dense<0.000000e+00> : vector<16x16xf32>
    %314 = tpu.matmul %304, %313, %cst_179 {dimension_numbers = #tpu.dot_dimension_numbers<[1], [0], [0], [1], [0, 0, 1, 1], [], []>} : vector<16x32xbf16>, vector<32x16xbf16>, vector<16x16xf32> -> vector<16x16xf32>
    %c1_180 = arith.constant 1 : index
    %c0_181 = arith.constant 0 : index
    %c0_182 = arith.constant 0 : index
    %c0_183 = arith.constant 0 : index
    %315 = vector.load %arg18[%c1_180, %c0_181, %c0_182, %c0_183] : memref<2x2x1x16xf32, #tpu.memory_space<vmem>>, vector<1x1x1x16xf32>
    %316 = vector.shape_cast %315 : vector<1x1x1x16xf32> to vector<1x16xf32>
    %317 = vector.broadcast %316 : vector<1x16xf32> to vector<16x16xf32>
    %318 = arith.addf %314, %317 : vector<16x16xf32>
    %c1_184 = arith.constant 1 : index
    %c0_185 = arith.constant 0 : index
    %c0_186 = arith.constant 0 : index
    %c0_187 = arith.constant 0 : index
    %319 = vector.load %arg16[%c1_184, %c0_185, %c0_186, %c0_187] : memref<2x2x32x16xbf16, #tpu.memory_space<vmem>>, vector<1x1x32x16xbf16>
    %320 = vector.shape_cast %319 : vector<1x1x32x16xbf16> to vector<32x16xbf16>
    %cst_188 = arith.constant dense<0.000000e+00> : vector<16x16xf32>
    %321 = tpu.matmul %304, %320, %cst_188 {dimension_numbers = #tpu.dot_dimension_numbers<[1], [0], [0], [1], [0, 0, 1, 1], [], []>} : vector<16x32xbf16>, vector<32x16xbf16>, vector<16x16xf32> -> vector<16x16xf32>
    %c1_189 = arith.constant 1 : index
    %c0_190 = arith.constant 0 : index
    %c0_191 = arith.constant 0 : index
    %c0_192 = arith.constant 0 : index
    %322 = vector.load %arg19[%c1_189, %c0_190, %c0_191, %c0_192] : memref<2x2x1x16xf32, #tpu.memory_space<vmem>>, vector<1x1x1x16xf32>
    %323 = vector.shape_cast %322 : vector<1x1x1x16xf32> to vector<1x16xf32>
    %324 = vector.broadcast %323 : vector<1x16xf32> to vector<16x16xf32>
    %325 = arith.addf %321, %324 : vector<16x16xf32>
    %326 = vector.shape_cast %311 : vector<16x16xf32> to vector<2x8x16xf32>
    %327 = arith.truncf %326 : vector<2x8x16xf32> to vector<2x8x16xbf16>
    %328 = vector.shape_cast %318 : vector<16x16xf32> to vector<2x8x16xf32>
    %329 = arith.truncf %328 : vector<2x8x16xf32> to vector<2x8x16xbf16>
    "tpu.trace_start"() <{level = 10 : i32, message = "bqd,bkd->bqk"}> : () -> ()
    %cst_193 = arith.constant dense<0.000000e+00> : vector<2x8x8xf32>
    %330 = tpu.matmul %327, %329, %cst_193 {dimension_numbers = #tpu.dot_dimension_numbers<[2], [2], [1], [1], [0, 0, 0, 1, 1, 1], [0], [0]>} : vector<2x8x16xbf16>, vector<2x8x16xbf16>, vector<2x8x8xf32> -> vector<2x8x8xf32>
    "tpu.trace_stop"() : () -> ()
    %cst_194 = arith.constant 2.500000e-01 : f32
    %331 = vector.broadcast %cst_194 : f32 to vector<2x8x8xf32>
    %332 = arith.mulf %330, %331 : vector<2x8x8xf32>
    %333 = arith.addf %332, %94 : vector<2x8x8xf32>
    %cst_195 = arith.constant dense<0xFF800000> : vector<2x8xf32>
    %334 = vector.multi_reduction <maximumf>, %333, %cst_195 [2] : vector<2x8x8xf32> to vector<2x8xf32>
    %335 = vector.shape_cast %334 : vector<2x8xf32> to vector<2x8x1xf32>
    %336 = vector.broadcast %335 : vector<2x8x1xf32> to vector<2x8x8xf32>
    %337 = arith.subf %333, %336 : vector<2x8x8xf32>
    %338 = math.exp %337 : vector<2x8x8xf32>
    %cst_196 = arith.constant dense<0.000000e+00> : vector<2x8xf32>
    %339 = vector.multi_reduction <add>, %338, %cst_196 [2] : vector<2x8x8xf32> to vector<2x8xf32>
    %340 = vector.shape_cast %339 : vector<2x8xf32> to vector<2x8x1xf32>
    %341 = vector.broadcast %340 : vector<2x8x1xf32> to vector<2x8x8xf32>
    %342 = arith.divf %338, %341 : vector<2x8x8xf32>
    %343 = arith.truncf %342 : vector<2x8x8xf32> to vector<2x8x8xbf16>
    %344 = vector.shape_cast %325 : vector<16x16xf32> to vector<2x8x16xf32>
    %345 = arith.truncf %344 : vector<2x8x16xf32> to vector<2x8x16xbf16>
    "tpu.trace_start"() <{level = 10 : i32, message = "bqk,bkd->bqd"}> : () -> ()
    %cst_197 = arith.constant dense<0.000000e+00> : vector<2x8x16xf32>
    %346 = tpu.matmul %343, %345, %cst_197 {dimension_numbers = #tpu.dot_dimension_numbers<[2], [1], [1], [2], [0, 0, 0, 1, 1, 2], [0], [0]>} : vector<2x8x8xbf16>, vector<2x8x16xbf16>, vector<2x8x16xf32> -> vector<2x8x16xf32>
    "tpu.trace_stop"() : () -> ()
    %347 = vector.shape_cast %346 : vector<2x8x16xf32> to vector<16x16xf32>
    %348 = arith.truncf %347 : vector<16x16xf32> to vector<16x16xbf16>
    %c1_198 = arith.constant 1 : index
    %c0_199 = arith.constant 0 : index
    %c0_200 = arith.constant 0 : index
    %c0_201 = arith.constant 0 : index
    %349 = vector.load %arg20[%c1_198, %c0_199, %c0_200, %c0_201] : memref<2x2x16x32xbf16, #tpu.memory_space<vmem>>, vector<1x1x16x32xbf16>
    %350 = vector.shape_cast %349 : vector<1x1x16x32xbf16> to vector<16x32xbf16>
    %cst_202 = arith.constant dense<0.000000e+00> : vector<16x32xf32>
    %351 = tpu.matmul %348, %350, %cst_202 {dimension_numbers = #tpu.dot_dimension_numbers<[1], [0], [0], [1], [0, 0, 1, 1], [], []>} : vector<16x16xbf16>, vector<16x32xbf16>, vector<16x32xf32> -> vector<16x32xf32>
    %c1_203 = arith.constant 1 : index
    %c1_204 = arith.constant 1 : index
    %c0_205 = arith.constant 0 : index
    %c0_206 = arith.constant 0 : index
    %352 = vector.load %arg14[%c1_203, %c1_204, %c0_205, %c0_206] : memref<2x2x32x16xbf16, #tpu.memory_space<vmem>>, vector<1x1x32x16xbf16>
    %353 = vector.shape_cast %352 : vector<1x1x32x16xbf16> to vector<32x16xbf16>
    %cst_207 = arith.constant dense<0.000000e+00> : vector<16x16xf32>
    %354 = tpu.matmul %304, %353, %cst_207 {dimension_numbers = #tpu.dot_dimension_numbers<[1], [0], [0], [1], [0, 0, 1, 1], [], []>} : vector<16x32xbf16>, vector<32x16xbf16>, vector<16x16xf32> -> vector<16x16xf32>
    %c1_208 = arith.constant 1 : index
    %c1_209 = arith.constant 1 : index
    %c0_210 = arith.constant 0 : index
    %c0_211 = arith.constant 0 : index
    %355 = vector.load %arg17[%c1_208, %c1_209, %c0_210, %c0_211] : memref<2x2x1x16xf32, #tpu.memory_space<vmem>>, vector<1x1x1x16xf32>
    %356 = vector.shape_cast %355 : vector<1x1x1x16xf32> to vector<1x16xf32>
    %357 = vector.broadcast %356 : vector<1x16xf32> to vector<16x16xf32>
    %358 = arith.addf %354, %357 : vector<16x16xf32>
    %c1_212 = arith.constant 1 : index
    %c1_213 = arith.constant 1 : index
    %c0_214 = arith.constant 0 : index
    %c0_215 = arith.constant 0 : index
    %359 = vector.load %arg15[%c1_212, %c1_213, %c0_214, %c0_215] : memref<2x2x32x16xbf16, #tpu.memory_space<vmem>>, vector<1x1x32x16xbf16>
    %360 = vector.shape_cast %359 : vector<1x1x32x16xbf16> to vector<32x16xbf16>
    %cst_216 = arith.constant dense<0.000000e+00> : vector<16x16xf32>
    %361 = tpu.matmul %304, %360, %cst_216 {dimension_numbers = #tpu.dot_dimension_numbers<[1], [0], [0], [1], [0, 0, 1, 1], [], []>} : vector<16x32xbf16>, vector<32x16xbf16>, vector<16x16xf32> -> vector<16x16xf32>
    %c1_217 = arith.constant 1 : index
    %c1_218 = arith.constant 1 : index
    %c0_219 = arith.constant 0 : index
    %c0_220 = arith.constant 0 : index
    %362 = vector.load %arg18[%c1_217, %c1_218, %c0_219, %c0_220] : memref<2x2x1x16xf32, #tpu.memory_space<vmem>>, vector<1x1x1x16xf32>
    %363 = vector.shape_cast %362 : vector<1x1x1x16xf32> to vector<1x16xf32>
    %364 = vector.broadcast %363 : vector<1x16xf32> to vector<16x16xf32>
    %365 = arith.addf %361, %364 : vector<16x16xf32>
    %c1_221 = arith.constant 1 : index
    %c1_222 = arith.constant 1 : index
    %c0_223 = arith.constant 0 : index
    %c0_224 = arith.constant 0 : index
    %366 = vector.load %arg16[%c1_221, %c1_222, %c0_223, %c0_224] : memref<2x2x32x16xbf16, #tpu.memory_space<vmem>>, vector<1x1x32x16xbf16>
    %367 = vector.shape_cast %366 : vector<1x1x32x16xbf16> to vector<32x16xbf16>
    %cst_225 = arith.constant dense<0.000000e+00> : vector<16x16xf32>
    %368 = tpu.matmul %304, %367, %cst_225 {dimension_numbers = #tpu.dot_dimension_numbers<[1], [0], [0], [1], [0, 0, 1, 1], [], []>} : vector<16x32xbf16>, vector<32x16xbf16>, vector<16x16xf32> -> vector<16x16xf32>
    %c1_226 = arith.constant 1 : index
    %c1_227 = arith.constant 1 : index
    %c0_228 = arith.constant 0 : index
    %c0_229 = arith.constant 0 : index
    %369 = vector.load %arg19[%c1_226, %c1_227, %c0_228, %c0_229] : memref<2x2x1x16xf32, #tpu.memory_space<vmem>>, vector<1x1x1x16xf32>
    %370 = vector.shape_cast %369 : vector<1x1x1x16xf32> to vector<1x16xf32>
    %371 = vector.broadcast %370 : vector<1x16xf32> to vector<16x16xf32>
    %372 = arith.addf %368, %371 : vector<16x16xf32>
    %373 = vector.shape_cast %358 : vector<16x16xf32> to vector<2x8x16xf32>
    %374 = arith.truncf %373 : vector<2x8x16xf32> to vector<2x8x16xbf16>
    %375 = vector.shape_cast %365 : vector<16x16xf32> to vector<2x8x16xf32>
    %376 = arith.truncf %375 : vector<2x8x16xf32> to vector<2x8x16xbf16>
    "tpu.trace_start"() <{level = 10 : i32, message = "bqd,bkd->bqk"}> : () -> ()
    %cst_230 = arith.constant dense<0.000000e+00> : vector<2x8x8xf32>
    %377 = tpu.matmul %374, %376, %cst_230 {dimension_numbers = #tpu.dot_dimension_numbers<[2], [2], [1], [1], [0, 0, 0, 1, 1, 1], [0], [0]>} : vector<2x8x16xbf16>, vector<2x8x16xbf16>, vector<2x8x8xf32> -> vector<2x8x8xf32>
    "tpu.trace_stop"() : () -> ()
    %cst_231 = arith.constant 2.500000e-01 : f32
    %378 = vector.broadcast %cst_231 : f32 to vector<2x8x8xf32>
    %379 = arith.mulf %377, %378 : vector<2x8x8xf32>
    %380 = arith.addf %379, %94 : vector<2x8x8xf32>
    %cst_232 = arith.constant dense<0xFF800000> : vector<2x8xf32>
    %381 = vector.multi_reduction <maximumf>, %380, %cst_232 [2] : vector<2x8x8xf32> to vector<2x8xf32>
    %382 = vector.shape_cast %381 : vector<2x8xf32> to vector<2x8x1xf32>
    %383 = vector.broadcast %382 : vector<2x8x1xf32> to vector<2x8x8xf32>
    %384 = arith.subf %380, %383 : vector<2x8x8xf32>
    %385 = math.exp %384 : vector<2x8x8xf32>
    %cst_233 = arith.constant dense<0.000000e+00> : vector<2x8xf32>
    %386 = vector.multi_reduction <add>, %385, %cst_233 [2] : vector<2x8x8xf32> to vector<2x8xf32>
    %387 = vector.shape_cast %386 : vector<2x8xf32> to vector<2x8x1xf32>
    %388 = vector.broadcast %387 : vector<2x8x1xf32> to vector<2x8x8xf32>
    %389 = arith.divf %385, %388 : vector<2x8x8xf32>
    %390 = arith.truncf %389 : vector<2x8x8xf32> to vector<2x8x8xbf16>
    %391 = vector.shape_cast %372 : vector<16x16xf32> to vector<2x8x16xf32>
    %392 = arith.truncf %391 : vector<2x8x16xf32> to vector<2x8x16xbf16>
    "tpu.trace_start"() <{level = 10 : i32, message = "bqk,bkd->bqd"}> : () -> ()
    %cst_234 = arith.constant dense<0.000000e+00> : vector<2x8x16xf32>
    %393 = tpu.matmul %390, %392, %cst_234 {dimension_numbers = #tpu.dot_dimension_numbers<[2], [1], [1], [2], [0, 0, 0, 1, 1, 2], [0], [0]>} : vector<2x8x8xbf16>, vector<2x8x16xbf16>, vector<2x8x16xf32> -> vector<2x8x16xf32>
    "tpu.trace_stop"() : () -> ()
    %394 = vector.shape_cast %393 : vector<2x8x16xf32> to vector<16x16xf32>
    %395 = arith.truncf %394 : vector<16x16xf32> to vector<16x16xbf16>
    %c1_235 = arith.constant 1 : index
    %c1_236 = arith.constant 1 : index
    %c0_237 = arith.constant 0 : index
    %c0_238 = arith.constant 0 : index
    %396 = vector.load %arg20[%c1_235, %c1_236, %c0_237, %c0_238] : memref<2x2x16x32xbf16, #tpu.memory_space<vmem>>, vector<1x1x16x32xbf16>
    %397 = vector.shape_cast %396 : vector<1x1x16x32xbf16> to vector<16x32xbf16>
    %cst_239 = arith.constant dense<0.000000e+00> : vector<16x32xf32>
    %398 = tpu.matmul %395, %397, %cst_239 {dimension_numbers = #tpu.dot_dimension_numbers<[1], [0], [0], [1], [0, 0, 1, 1], [], []>} : vector<16x16xbf16>, vector<16x32xbf16>, vector<16x32xf32> -> vector<16x32xf32>
    %399 = arith.addf %351, %398 : vector<16x32xf32>
    %400 = arith.addf %277, %399 : vector<16x32xf32>
    %c1_240 = arith.constant 1 : index
    %c0_241 = arith.constant 0 : index
    %c0_242 = arith.constant 0 : index
    %401 = vector.load %arg21[%c1_240, %c0_241, %c0_242] : memref<2x1x32xf32, #tpu.memory_space<vmem>>, vector<1x1x32xf32>
    %402 = vector.shape_cast %401 : vector<1x1x32xf32> to vector<1x32xf32>
    %403 = vector.broadcast %402 : vector<1x32xf32> to vector<16x32xf32>
    %404 = arith.addf %400, %403 : vector<16x32xf32>
    %c1_243 = arith.constant 1 : index
    %c0_244 = arith.constant 0 : index
    %c0_245 = arith.constant 0 : index
    %405 = vector.load %arg22[%c1_243, %c0_244, %c0_245] : memref<2x1x32xf32, #tpu.memory_space<vmem>>, vector<1x1x32xf32>
    %406 = vector.shape_cast %405 : vector<1x1x32xf32> to vector<1x32xf32>
    %c1_246 = arith.constant 1 : index
    %c0_247 = arith.constant 0 : index
    %c0_248 = arith.constant 0 : index
    %407 = vector.load %arg23[%c1_246, %c0_247, %c0_248] : memref<2x1x32xf32, #tpu.memory_space<vmem>>, vector<1x1x32xf32>
    %408 = vector.shape_cast %407 : vector<1x1x32xf32> to vector<1x32xf32>
    %cst_249 = arith.constant dense<0.000000e+00> : vector<16xf32>
    %409 = vector.multi_reduction <add>, %404, %cst_249 [1] : vector<16x32xf32> to vector<16xf32>
    %410 = vector.shape_cast %409 : vector<16xf32> to vector<16x1xf32>
    %cst_250 = arith.constant 3.200000e+01 : f32
    %411 = vector.broadcast %cst_250 : f32 to vector<16x1xf32>
    %412 = arith.divf %410, %411 : vector<16x1xf32>
    %413 = vector.broadcast %412 : vector<16x1xf32> to vector<16x32xf32>
    %414 = arith.subf %404, %413 : vector<16x32xf32>
    %415 = arith.mulf %414, %414 : vector<16x32xf32>
    %cst_251 = arith.constant dense<0.000000e+00> : vector<16xf32>
    %416 = vector.multi_reduction <add>, %415, %cst_251 [1] : vector<16x32xf32> to vector<16xf32>
    %417 = vector.shape_cast %416 : vector<16xf32> to vector<16x1xf32>
    %cst_252 = arith.constant 3.200000e+01 : f32
    %418 = vector.broadcast %cst_252 : f32 to vector<16x1xf32>
    %419 = arith.divf %417, %418 : vector<16x1xf32>
    %420 = vector.broadcast %412 : vector<16x1xf32> to vector<16x32xf32>
    %421 = arith.subf %404, %420 : vector<16x32xf32>
    %cst_253 = arith.constant 9.99999974E-6 : f32
    %422 = vector.broadcast %cst_253 : f32 to vector<16x1xf32>
    %423 = arith.addf %419, %422 : vector<16x1xf32>
    %424 = math.rsqrt %423 : vector<16x1xf32>
    %425 = vector.broadcast %424 : vector<16x1xf32> to vector<16x32xf32>
    %426 = arith.mulf %421, %425 : vector<16x32xf32>
    %427 = vector.broadcast %406 : vector<1x32xf32> to vector<16x32xf32>
    %428 = arith.mulf %426, %427 : vector<16x32xf32>
    %429 = vector.broadcast %408 : vector<1x32xf32> to vector<16x32xf32>
    %430 = arith.addf %428, %429 : vector<16x32xf32>
    %431 = arith.truncf %430 : vector<16x32xf32> to vector<16x32xbf16>
    %c1_254 = arith.constant 1 : index
    %c0_255 = arith.constant 0 : index
    %c0_256 = arith.constant 0 : index
    %432 = vector.load %arg24[%c1_254, %c0_255, %c0_256] : memref<2x32x128xbf16, #tpu.memory_space<vmem>>, vector<1x32x128xbf16>
    %433 = vector.shape_cast %432 : vector<1x32x128xbf16> to vector<32x128xbf16>
    %cst_257 = arith.constant dense<0.000000e+00> : vector<16x128xf32>
    %434 = tpu.matmul %431, %433, %cst_257 {dimension_numbers = #tpu.dot_dimension_numbers<[1], [0], [0], [1], [0, 0, 1, 1], [], []>} : vector<16x32xbf16>, vector<32x128xbf16>, vector<16x128xf32> -> vector<16x128xf32>
    %c1_258 = arith.constant 1 : index
    %c0_259 = arith.constant 0 : index
    %c0_260 = arith.constant 0 : index
    %435 = vector.load %arg25[%c1_258, %c0_259, %c0_260] : memref<2x1x128xf32, #tpu.memory_space<vmem>>, vector<1x1x128xf32>
    %436 = vector.shape_cast %435 : vector<1x1x128xf32> to vector<1x128xf32>
    %437 = vector.broadcast %436 : vector<1x128xf32> to vector<16x128xf32>
    %438 = arith.addf %434, %437 : vector<16x128xf32>
    %439 = arith.mulf %438, %438 : vector<16x128xf32>
    %440 = arith.mulf %438, %439 : vector<16x128xf32>
    %cst_261 = arith.constant 4.471500e-02 : f32
    %441 = vector.broadcast %cst_261 : f32 to vector<16x128xf32>
    %442 = arith.mulf %441, %440 : vector<16x128xf32>
    %443 = arith.addf %438, %442 : vector<16x128xf32>
    %cst_262 = arith.constant 0.797884583 : f32
    %444 = vector.broadcast %cst_262 : f32 to vector<16x128xf32>
    %445 = arith.mulf %444, %443 : vector<16x128xf32>
    %446 = math.tanh %445 : vector<16x128xf32>
    %cst_263 = arith.constant 1.000000e+00 : f32
    %447 = vector.broadcast %cst_263 : f32 to vector<16x128xf32>
    %448 = arith.addf %447, %446 : vector<16x128xf32>
    %cst_264 = arith.constant 5.000000e-01 : f32
    %449 = vector.broadcast %cst_264 : f32 to vector<16x128xf32>
    %450 = arith.mulf %449, %448 : vector<16x128xf32>
    %451 = arith.mulf %438, %450 : vector<16x128xf32>
    %452 = arith.truncf %451 : vector<16x128xf32> to vector<16x128xbf16>
    %c1_265 = arith.constant 1 : index
    %c0_266 = arith.constant 0 : index
    %c0_267 = arith.constant 0 : index
    %453 = vector.load %arg26[%c1_265, %c0_266, %c0_267] : memref<2x128x32xbf16, #tpu.memory_space<vmem>>, vector<1x128x32xbf16>
    %454 = vector.shape_cast %453 : vector<1x128x32xbf16> to vector<128x32xbf16>
    %cst_268 = arith.constant dense<0.000000e+00> : vector<16x32xf32>
    %455 = tpu.matmul %452, %454, %cst_268 {dimension_numbers = #tpu.dot_dimension_numbers<[1], [0], [0], [1], [0, 0, 1, 1], [], []>} : vector<16x128xbf16>, vector<128x32xbf16>, vector<16x32xf32> -> vector<16x32xf32>
    %456 = arith.addf %404, %455 : vector<16x32xf32>
    %c1_269 = arith.constant 1 : index
    %c0_270 = arith.constant 0 : index
    %c0_271 = arith.constant 0 : index
    %457 = vector.load %arg27[%c1_269, %c0_270, %c0_271] : memref<2x1x32xf32, #tpu.memory_space<vmem>>, vector<1x1x32xf32>
    %458 = vector.shape_cast %457 : vector<1x1x32xf32> to vector<1x32xf32>
    %459 = vector.broadcast %458 : vector<1x32xf32> to vector<16x32xf32>
    %460 = arith.addf %456, %459 : vector<16x32xf32>
    %c0_272 = arith.constant 0 : index
    %c0_273 = arith.constant 0 : index
    %461 = vector.load %arg28[%c0_272, %c0_273] : memref<1x32xf32, #tpu.memory_space<vmem>>, vector<1x32xf32>
    %c0_274 = arith.constant 0 : index
    %c0_275 = arith.constant 0 : index
    %462 = vector.load %arg29[%c0_274, %c0_275] : memref<1x32xf32, #tpu.memory_space<vmem>>, vector<1x32xf32>
    %cst_276 = arith.constant dense<0.000000e+00> : vector<16xf32>
    %463 = vector.multi_reduction <add>, %460, %cst_276 [1] : vector<16x32xf32> to vector<16xf32>
    %464 = vector.shape_cast %463 : vector<16xf32> to vector<16x1xf32>
    %cst_277 = arith.constant 3.200000e+01 : f32
    %465 = vector.broadcast %cst_277 : f32 to vector<16x1xf32>
    %466 = arith.divf %464, %465 : vector<16x1xf32>
    %467 = vector.broadcast %466 : vector<16x1xf32> to vector<16x32xf32>
    %468 = arith.subf %460, %467 : vector<16x32xf32>
    %469 = arith.mulf %468, %468 : vector<16x32xf32>
    %cst_278 = arith.constant dense<0.000000e+00> : vector<16xf32>
    %470 = vector.multi_reduction <add>, %469, %cst_278 [1] : vector<16x32xf32> to vector<16xf32>
    %471 = vector.shape_cast %470 : vector<16xf32> to vector<16x1xf32>
    %cst_279 = arith.constant 3.200000e+01 : f32
    %472 = vector.broadcast %cst_279 : f32 to vector<16x1xf32>
    %473 = arith.divf %471, %472 : vector<16x1xf32>
    %474 = vector.broadcast %466 : vector<16x1xf32> to vector<16x32xf32>
    %475 = arith.subf %460, %474 : vector<16x32xf32>
    %cst_280 = arith.constant 9.99999974E-6 : f32
    %476 = vector.broadcast %cst_280 : f32 to vector<16x1xf32>
    %477 = arith.addf %473, %476 : vector<16x1xf32>
    %478 = math.rsqrt %477 : vector<16x1xf32>
    %479 = vector.broadcast %478 : vector<16x1xf32> to vector<16x32xf32>
    %480 = arith.mulf %475, %479 : vector<16x32xf32>
    %481 = vector.broadcast %461 : vector<1x32xf32> to vector<16x32xf32>
    %482 = arith.mulf %480, %481 : vector<16x32xf32>
    %483 = vector.broadcast %462 : vector<1x32xf32> to vector<16x32xf32>
    %484 = arith.addf %482, %483 : vector<16x32xf32>
    %485 = arith.truncf %484 : vector<16x32xf32> to vector<16x32xbf16>
    %c0_281 = arith.constant 0 : index
    %c0_282 = arith.constant 0 : index
    %486 = vector.load %arg30[%c0_281, %c0_282] : memref<32x128xbf16, #tpu.memory_space<vmem>>, vector<32x128xbf16>
    %cst_283 = arith.constant dense<0.000000e+00> : vector<16x128xf32>
    %487 = tpu.matmul %485, %486, %cst_283 {dimension_numbers = #tpu.dot_dimension_numbers<[1], [0], [0], [1], [0, 0, 1, 1], [], []>} : vector<16x32xbf16>, vector<32x128xbf16>, vector<16x128xf32> -> vector<16x128xf32>
    %488 = vector.shape_cast %487 : vector<16x128xf32> to vector<2x8x128xf32>
    %c0_284 = arith.constant 0 : index
    %c0_285 = arith.constant 0 : index
    %c0_286 = arith.constant 0 : index
    %489 = vector.load %arg31[%c0_284, %c0_285, %c0_286] : memref<2x8x128xf32, #tpu.memory_space<vmem>>, vector<2x8x128xf32>
    tpu.vector_store %arg31[%c0_284, %c0_285, %c0_286], %488 {strides = array<i32>} : memref<2x8x128xf32, #tpu.memory_space<vmem>>, vector<2x8x128xf32>,
    %490 = tpu.iota {dimensions = array<i32: 2>} : vector<2x8x128xi32>
    %c64_i32 = arith.constant 64 : i32
    %491 = vector.broadcast %c64_i32 : i32 to vector<2x8x128xi32>
    %492 = arith.cmpi slt, %490, %491 : vector<2x8x128xi32>
    %cst_287 = arith.constant -1.000000e+09 : f32
    %493 = vector.broadcast %cst_287 : f32 to vector<2x8x128xf32>
    %494 = arith.select %492, %488, %493 : vector<2x8x128xi1>, vector<2x8x128xf32>
    %cst_288 = arith.constant dense<0xFF800000> : vector<2x8xf32>
    %495 = vector.multi_reduction <maximumf>, %494, %cst_288 [2] : vector<2x8x128xf32> to vector<2x8xf32>
    %496 = vector.shape_cast %495 : vector<2x8xf32> to vector<2x8x1xf32>
    %497 = vector.broadcast %496 : vector<2x8x1xf32> to vector<2x8x128xf32>
    %498 = arith.subf %494, %497 : vector<2x8x128xf32>
    %499 = math.exp %498 : vector<2x8x128xf32>
    %cst_289 = arith.constant dense<0.000000e+00> : vector<2x8xf32>
    %500 = vector.multi_reduction <add>, %499, %cst_289 [2] : vector<2x8x128xf32> to vector<2x8xf32>
    %501 = vector.shape_cast %500 : vector<2x8xf32> to vector<2x8x1xf32>
    %502 = math.log %501 : vector<2x8x1xf32>
    %503 = arith.addf %502, %496 : vector<2x8x1xf32>
    %c0_290 = arith.constant 0 : index
    %c0_291 = arith.constant 0 : index
    %504 = vector.load %arg3[%c0_290, %c0_291] : memref<2x8xi32, #tpu.memory_space<vmem>>, vector<2x8xi32>
    %505 = vector.shape_cast %504 : vector<2x8xi32> to vector<2x8x1xi32>
    %506 = vector.broadcast %505 : vector<2x8x1xi32> to vector<2x8x128xi32>
    %507 = arith.cmpi eq, %490, %506 : vector<2x8x128xi32>
    %cst_292 = arith.constant 0.000000e+00 : f32
    %508 = vector.broadcast %cst_292 : f32 to vector<2x8x128xf32>
    %509 = arith.select %507, %488, %508 : vector<2x8x128xi1>, vector<2x8x128xf32>
    %cst_293 = arith.constant dense<0.000000e+00> : vector<2x8xf32>
    %510 = vector.multi_reduction <add>, %509, %cst_293 [2] : vector<2x8x128xf32> to vector<2x8xf32>
    %511 = vector.shape_cast %510 : vector<2x8xf32> to vector<2x8x1xf32>
    %512 = tpu.iota {dimensions = array<i32: 1>} : vector<2x8x1xi32>
    %c7_i32 = arith.constant 7 : i32
    %513 = vector.broadcast %c7_i32 : i32 to vector<2x8x1xi32>
    %514 = arith.cmpi slt, %512, %513 : vector<2x8x1xi32>
    %515 = arith.extui %514 : vector<2x8x1xi1> to vector<2x8x1xi32>
    %516 = arith.sitofp %515 : vector<2x8x1xi32> to vector<2x8x1xf32>
    %517 = arith.subf %503, %511 : vector<2x8x1xf32>
    %518 = arith.mulf %517, %516 : vector<2x8x1xf32>
    %519 = vector.shape_cast %518 : vector<2x8x1xf32> to vector<1x2x8x1xf32>
    %cst_294 = arith.constant dense<0.000000e+00> : vector<1xf32>
    %520 = vector.multi_reduction <add>, %519, %cst_294 [1, 2, 3] : vector<1x2x8x1xf32> to vector<1xf32>
    %521 = vector.shape_cast %520 : vector<1xf32> to vector<1x1x1x1xf32>
    %522 = vector.extract %521[0, 0, 0, 0] : f32 from vector<1x1x1x1xf32>
    %cst_295 = arith.constant 0.0714285746 : f32
    %523 = arith.mulf %522, %cst_295 : f32
    %524 = vector.broadcast %523 : f32 to vector<8x128xf32>
    %c0_296 = arith.constant 0 : index
    %c0_297 = arith.constant 0 : index
    %525 = vector.load %arg32[%c0_296, %c0_297] : memref<8x128xf32, #tpu.memory_space<vmem>>, vector<8x128xf32>
    tpu.vector_store %arg32[%c0_296, %c0_297], %524 {strides = array<i32>} : memref<8x128xf32, #tpu.memory_space<vmem>>, vector<8x128xf32>,
    return
  }
}

</mosaic_0001>

<llo_original>
// kernel: sequence_latent_to_text_forward.1
$region0: #{sequence_latent_to_text_forward.1}
  #allocation0 [shape = 'u32[]', space=smem, size = 0x4, offset = 0x4, fixed_abs, tag = 'smem constant byte address 0x4 - core index']
  #allocation1 [shape = 'u32[72,128]{1,0:T(1,128)}', space=vmem, size = 0x9000, scoped, tag = 'internal scratch']
  %s0 = inlined_call_operand.smem [shape: u32[33], index: -1, kind: input, shape index: {}]
  %s1 = sld [smem:[%s0]]
  %s2 = scalar_lea.smem %s0, 1
  %s3 = sld [smem:[%s2]]
  %s4 = scalar_lea.smem %s0, 2
  %s5 = sld [smem:[%s4]]
  %s6 = scalar_lea.smem %s0, 3
  %s7 = sld [smem:[%s6]]
  %s8 = scalar_lea.smem %s0, 4
  %s9 = sld [smem:[%s8]]
  %s10 = scalar_lea.smem %s0, 5
  %s11 = sld [smem:[%s10]]
  %s12 = scalar_lea.smem %s0, 6
  %s13 = sld [smem:[%s12]]
  %s14 = scalar_lea.smem %s0, 7
  %s15 = sld [smem:[%s14]]
  %s16 = scalar_lea.smem %s0, 8
  %s17 = sld [smem:[%s16]]
  %s18 = scalar_lea.smem %s0, 9
  %s19 = sld [smem:[%s18]]
  %s20 = scalar_lea.smem %s0, 10
  %s21 = sld [smem:[%s20]]
  %s22 = scalar_lea.smem %s0, 11
  %s23 = sld [smem:[%s22]]
  %s24 = scalar_lea.smem %s0, 12
  %s25 = sld [smem:[%s24]]
  %s26 = scalar_lea.smem %s0, 13
  %s27 = sld [smem:[%s26]]
  %s28 = scalar_lea.smem %s0, 14
  %s29 = sld [smem:[%s28]]
  %s30 = scalar_lea.smem %s0, 15
  %s31 = sld [smem:[%s30]]
  %s32 = scalar_lea.smem %s0, 16
  %s33 = sld [smem:[%s32]]
  %s34 = scalar_lea.smem %s0, 17
  %s35 = sld [smem:[%s34]]
  %s36 = scalar_lea.smem %s0, 18
  %s37 = sld [smem:[%s36]]
  %s38 = scalar_lea.smem %s0, 19
  %s39 = sld [smem:[%s38]]
  %s40 = scalar_lea.smem %s0, 20
  %s41 = sld [smem:[%s40]]
  %s42 = scalar_lea.smem %s0, 21
  %s43 = sld [smem:[%s42]]
  %s44 = scalar_lea.smem %s0, 22
  %s45 = sld [smem:[%s44]]
  %s46 = scalar_lea.smem %s0, 23
  %s47 = sld [smem:[%s46]]
  %s48 = scalar_lea.smem %s0, 24
  %s49 = sld [smem:[%s48]]
  %s50 = scalar_lea.smem %s0, 25
  %s51 = sld [smem:[%s50]]
  %s52 = scalar_lea.smem %s0, 26
  %s53 = sld [smem:[%s52]]
  %s54 = scalar_lea.smem %s0, 27
  %s55 = sld [smem:[%s54]]
  %s56 = scalar_lea.smem %s0, 28
  %s57 = sld [smem:[%s56]]
  %s58 = scalar_lea.smem %s0, 29
  %s59 = sld [smem:[%s58]]
  %s60 = scalar_lea.smem %s0, 30
  %s61 = sld [smem:[%s60]]
  %s62 = scalar_lea.smem %s0, 31
  %s63 = sld [smem:[%s62]]
  %s64 = scalar_lea.smem %s0, 32
  %s65 = sld [smem:[%s64]]
  %66 = xla_tuple %s63, %s65
  %s67 = sld [smem:[#allocation0]]
  $region142: #{sequence_latent_to_text_forward.1} parent=0
    _
  %s69 = ssub.s32 1, %s67
  %s70 = scalar_select 0, %s69, %s67
  $region1: #{sequence_latent_to_text_forward.1} parent=0
    #allocation2 [shape = 'u8[8192]{0}', space=vmem, size = 0x2000, scoped, tag = 'output window, operand 0, single buffered']
    #allocation3 [shape = 's32[1]{0}', space=sflag, size = 0x4, scoped, tag = 'scoped memory for sequence_latent_to_text_forward.1']
    %71 = vsyncpa [#allocation3], 0
    // Predicated region
    $region2: #{sequence_latent_to_text_forward.1} parent=1 // pred_check
      _
    $region3: #{sequence_latent_to_text_forward.1} parent=1 // pred_check_branch
      %73 = sbr.rel (0) target = $region5
    $region4: #{sequence_latent_to_text_forward.1} parent=1 // pred_region
      _
    $region5: #{sequence_latent_to_text_forward.1} parent=1 // pred_fallthru
      _
    // Predicated region
    $region6: #{sequence_latent_to_text_forward.1} parent=1 // pred_check
      _
    $region7: #{sequence_latent_to_text_forward.1} parent=1 // pred_check_branch
      %75 = sbr.rel (0) target = $region9
    $region8: #{sequence_latent_to_text_forward.1} parent=1 // pred_region
      _
    $region9: #{sequence_latent_to_text_forward.1} parent=1 // pred_fallthru
      _
    // Predicated region
    $region10: #{sequence_latent_to_text_forward.1} parent=1 // pred_check
      _
    $region11: #{sequence_latent_to_text_forward.1} parent=1 // pred_check_branch
      %77 = sbr.rel (0) target = $region13
    $region12: #{sequence_latent_to_text_forward.1} parent=1 // pred_region
      _
    $region13: #{sequence_latent_to_text_forward.1} parent=1 // pred_fallthru
      _
    // Predicated region
    $region14: #{sequence_latent_to_text_forward.1} parent=1 // pred_check
      _
    $region15: #{sequence_latent_to_text_forward.1} parent=1 // pred_check_branch
      %79 = sbr.rel (0) target = $region17
    $region16: #{sequence_latent_to_text_forward.1} parent=1 // pred_region
      _
    $region17: #{sequence_latent_to_text_forward.1} parent=1 // pred_fallthru
      _
    // Predicated region
    $region18: #{sequence_latent_to_text_forward.1} parent=1 // pred_check
      _
    $region19: #{sequence_latent_to_text_forward.1} parent=1 // pred_check_branch
      %81 = sbr.rel (0) target = $region21
    $region20: #{sequence_latent_to_text_forward.1} parent=1 // pred_region
      _
    $region21: #{sequence_latent_to_text_forward.1} parent=1 // pred_fallthru
      _
    // Predicated region
    $region22: #{sequence_latent_to_text_forward.1} parent=1 // pred_check
      _
    $region23: #{sequence_latent_to_text_forward.1} parent=1 // pred_check_branch
      %83 = sbr.rel (0) target = $region25
    $region24: #{sequence_latent_to_text_forward.1} parent=1 // pred_region
      _
    $region25: #{sequence_latent_to_text_forward.1} parent=1 // pred_fallthru
      _
    // Predicated region
    $region26: #{sequence_latent_to_text_forward.1} parent=1 // pred_check
      _
    $region27: #{sequence_latent_to_text_forward.1} parent=1 // pred_check_branch
      %85 = sbr.rel (0) target = $region29
    $region28: #{sequence_latent_to_text_forward.1} parent=1 // pred_region
      _
    $region29: #{sequence_latent_to_text_forward.1} parent=1 // pred_fallthru
      _
    // Predicated region
    $region30: #{sequence_latent_to_text_forward.1} parent=1 // pred_check
      _
    $region31: #{sequence_latent_to_text_forward.1} parent=1 // pred_check_branch
      %87 = sbr.rel (0) target = $region33
    $region32: #{sequence_latent_to_text_forward.1} parent=1 // pred_region
      _
    $region33: #{sequence_latent_to_text_forward.1} parent=1 // pred_fallthru
      _
    // Predicated region
    $region34: #{sequence_latent_to_text_forward.1} parent=1 // pred_check
      _
    $region35: #{sequence_latent_to_text_forward.1} parent=1 // pred_check_branch
      %89 = sbr.rel (0) target = $region37
    $region36: #{sequence_latent_to_text_forward.1} parent=1 // pred_region
      _
    $region37: #{sequence_latent_to_text_forward.1} parent=1 // pred_fallthru
      _
    // Predicated region
    $region38: #{sequence_latent_to_text_forward.1} parent=1 // pred_check
      _
    $region39: #{sequence_latent_to_text_forward.1} parent=1 // pred_check_branch
      %91 = sbr.rel (0) target = $region41
    $region40: #{sequence_latent_to_text_forward.1} parent=1 // pred_region
      _
    $region41: #{sequence_latent_to_text_forward.1} parent=1 // pred_fallthru
      _
    // Predicated region
    $region42: #{sequence_latent_to_text_forward.1} parent=1 // pred_check
      _
    $region43: #{sequence_latent_to_text_forward.1} parent=1 // pred_check_branch
      %93 = sbr.rel (0) target = $region45
    $region44: #{sequence_latent_to_text_forward.1} parent=1 // pred_region
      _
    $region45: #{sequence_latent_to_text_forward.1} parent=1 // pred_fallthru
      _
    // Predicated region
    $region46: #{sequence_latent_to_text_forward.1} parent=1 // pred_check
      _
    $region47: #{sequence_latent_to_text_forward.1} parent=1 // pred_check_branch
      %95 = sbr.rel (0) target = $region49
    $region48: #{sequence_latent_to_text_forward.1} parent=1 // pred_region
      _
    $region49: #{sequence_latent_to_text_forward.1} parent=1 // pred_fallthru
      _
    // Predicated region
    $region50: #{sequence_latent_to_text_forward.1} parent=1 // pred_check
      _
    $region51: #{sequence_latent_to_text_forward.1} parent=1 // pred_check_branch
      %97 = sbr.rel (0) target = $region53
    $region52: #{sequence_latent_to_text_forward.1} parent=1 // pred_region
      _
    $region53: #{sequence_latent_to_text_forward.1} parent=1 // pred_fallthru
      _
    // Predicated region
    $region54: #{sequence_latent_to_text_forward.1} parent=1 // pred_check
      _
    $region55: #{sequence_latent_to_text_forward.1} parent=1 // pred_check_branch
      %99 = sbr.rel (0) target = $region57
    $region56: #{sequence_latent_to_text_forward.1} parent=1 // pred_region
      _
    $region57: #{sequence_latent_to_text_forward.1} parent=1 // pred_fallthru
      _
    // Predicated region
    $region58: #{sequence_latent_to_text_forward.1} parent=1 // pred_check
      _
    $region59: #{sequence_latent_to_text_forward.1} parent=1 // pred_check_branch
      %101 = sbr.rel (0) target = $region61
    $region60: #{sequence_latent_to_text_forward.1} parent=1 // pred_region
      _
    $region61: #{sequence_latent_to_text_forward.1} parent=1 // pred_fallthru
      _
    // Predicated region
    $region62: #{sequence_latent_to_text_forward.1} parent=1 // pred_check
      _
    $region63: #{sequence_latent_to_text_forward.1} parent=1 // pred_check_branch
      %103 = sbr.rel (0) target = $region65
    $region64: #{sequence_latent_to_text_forward.1} parent=1 // pred_region
      _
    $region65: #{sequence_latent_to_text_forward.1} parent=1 // pred_fallthru
      _
    // Predicated region
    $region66: #{sequence_latent_to_text_forward.1} parent=1 // pred_check
      _
    $region67: #{sequence_latent_to_text_forward.1} parent=1 // pred_check_branch
      %105 = sbr.rel (0) target = $region69
    $region68: #{sequence_latent_to_text_forward.1} parent=1 // pred_region
      _
    $region69: #{sequence_latent_to_text_forward.1} parent=1 // pred_fallthru
      _
    // Predicated region
    $region70: #{sequence_latent_to_text_forward.1} parent=1 // pred_check
      _
    $region71: #{sequence_latent_to_text_forward.1} parent=1 // pred_check_branch
      %107 = sbr.rel (0) target = $region73
    $region72: #{sequence_latent_to_text_forward.1} parent=1 // pred_region
      _
    $region73: #{sequence_latent_to_text_forward.1} parent=1 // pred_fallthru
      _
    // Predicated region
    $region74: #{sequence_latent_to_text_forward.1} parent=1 // pred_check
      _
    $region75: #{sequence_latent_to_text_forward.1} parent=1 // pred_check_branch
      %109 = sbr.rel (0) target = $region77
    $region76: #{sequence_latent_to_text_forward.1} parent=1 // pred_region
      _
    $region77: #{sequence_latent_to_text_forward.1} parent=1 // pred_fallthru
      _
    // Predicated region
    $region78: #{sequence_latent_to_text_forward.1} parent=1 // pred_check
      _
    $region79: #{sequence_latent_to_text_forward.1} parent=1 // pred_check_branch
      %111 = sbr.rel (0) target = $region81
    $region80: #{sequence_latent_to_text_forward.1} parent=1 // pred_region
      _
    $region81: #{sequence_latent_to_text_forward.1} parent=1 // pred_fallthru
      _
    // Predicated region
    $region82: #{sequence_latent_to_text_forward.1} parent=1 // pred_check
      _
    $region83: #{sequence_latent_to_text_forward.1} parent=1 // pred_check_branch
      %113 = sbr.rel (0) target = $region85
    $region84: #{sequence_latent_to_text_forward.1} parent=1 // pred_region
      _
    $region85: #{sequence_latent_to_text_forward.1} parent=1 // pred_fallthru
      _
    // Predicated region
    $region86: #{sequence_latent_to_text_forward.1} parent=1 // pred_check
      _
    $region87: #{sequence_latent_to_text_forward.1} parent=1 // pred_check_branch
      %115 = sbr.rel (0) target = $region89
    $region88: #{sequence_latent_to_text_forward.1} parent=1 // pred_region
      _
    $region89: #{sequence_latent_to_text_forward.1} parent=1 // pred_fallthru
      _
    // Predicated region
    $region90: #{sequence_latent_to_text_forward.1} parent=1 // pred_check
      _
    $region91: #{sequence_latent_to_text_forward.1} parent=1 // pred_check_branch
      %117 = sbr.rel (0) target = $region93
    $region92: #{sequence_latent_to_text_forward.1} parent=1 // pred_region
      _
    $region93: #{sequence_latent_to_text_forward.1} parent=1 // pred_fallthru
      _
    // Predicated region
    $region94: #{sequence_latent_to_text_forward.1} parent=1 // pred_check
      _
    $region95: #{sequence_latent_to_text_forward.1} parent=1 // pred_check_branch
      %119 = sbr.rel (0) target = $region97
    $region96: #{sequence_latent_to_text_forward.1} parent=1 // pred_region
      _
    $region97: #{sequence_latent_to_text_forward.1} parent=1 // pred_fallthru
      _
    // Predicated region
    $region98: #{sequence_latent_to_text_forward.1} parent=1 // pred_check
      _
    $region99: #{sequence_latent_to_text_forward.1} parent=1 // pred_check_branch
      %121 = sbr.rel (0) target = $region101
    $region100: #{sequence_latent_to_text_forward.1} parent=1 // pred_region
      _
    $region101: #{sequence_latent_to_text_forward.1} parent=1 // pred_fallthru
      _
    // Predicated region
    $region102: #{sequence_latent_to_text_forward.1} parent=1 // pred_check
      _
    $region103: #{sequence_latent_to_text_forward.1} parent=1 // pred_check_branch
      %123 = sbr.rel (0) target = $region105
    $region104: #{sequence_latent_to_text_forward.1} parent=1 // pred_region
      _
    $region105: #{sequence_latent_to_text_forward.1} parent=1 // pred_fallthru
      _
    // Predicated region
    $region106: #{sequence_latent_to_text_forward.1} parent=1 // pred_check
      _
    $region107: #{sequence_latent_to_text_forward.1} parent=1 // pred_check_branch
      %125 = sbr.rel (0) target = $region109
    $region108: #{sequence_latent_to_text_forward.1} parent=1 // pred_region
      _
    $region109: #{sequence_latent_to_text_forward.1} parent=1 // pred_fallthru
      _
    // Predicated region
    $region110: #{sequence_latent_to_text_forward.1} parent=1 // pred_check
      _
    $region111: #{sequence_latent_to_text_forward.1} parent=1 // pred_check_branch
      %127 = sbr.rel (0) target = $region113
    $region112: #{sequence_latent_to_text_forward.1} parent=1 // pred_region
      _
    $region113: #{sequence_latent_to_text_forward.1} parent=1 // pred_fallthru
      _
    // Predicated region
    $region114: #{sequence_latent_to_text_forward.1} parent=1 // pred_check
      _
    $region115: #{sequence_latent_to_text_forward.1} parent=1 // pred_check_branch
      %129 = sbr.rel (0) target = $region117
    $region116: #{sequence_latent_to_text_forward.1} parent=1 // pred_region
      _
    $region117: #{sequence_latent_to_text_forward.1} parent=1 // pred_fallthru
      _
    // Predicated region
    $region118: #{sequence_latent_to_text_forward.1} parent=1 // pred_check
      _
    $region119: #{sequence_latent_to_text_forward.1} parent=1 // pred_check_branch
      %131 = sbr.rel (0) target = $region121
    $region120: #{sequence_latent_to_text_forward.1} parent=1 // pred_region
      _
    $region121: #{sequence_latent_to_text_forward.1} parent=1 // pred_fallthru
      _
    // Predicated region
    $region122: #{sequence_latent_to_text_forward.1} parent=1 // pred_check
      _
    $region123: #{sequence_latent_to_text_forward.1} parent=1 // pred_check_branch
      %133 = sbr.rel (0) target = $region125
    $region124: #{sequence_latent_to_text_forward.1} parent=1 // pred_region
      _
    $region125: #{sequence_latent_to_text_forward.1} parent=1 // pred_fallthru
      _
    %v135 = vld [vmem:[%s1] sm:$0x3]
    %v136 = vpack.c.bf16 %v135, %v135
    %v137 = vld [vmem:[%s9] sm:$0xf]
    %v138 = vld [vmem:[%s9 + $0x4] sm:$0xf]
    %v139 = vld [vmem:[%s9 + $0x8] sm:$0xf]
    %v140 = vld [vmem:[%s9 + $0xc] sm:$0xf]
    %v141 = vld [vmem:[%s11] sm:$0x1]
    %v143 = vperm.slane %v141, 0
    %v149 = vunpack.c.l.b16 %v137
    %v150 = vunpack.c.l.b16 %v138
    %v151 = vunpack.c.l.b16 %v139
    %v152 = vunpack.c.l.b16 %v140
    %v153 = vpack.c.b16 %v150, %v149
    %v154 = vpack.c.b16 %v152, %v151
    %vm157 = vcmask 261120
    %v159 = vsel %vm157, %v136, 0
    %161 = vmatpush.bf16.msra.mxu0 0
    %162 = vmatpush.bf16.msra.mxu0 0
    %163 = vmatpush.bf16.msra.mxu0 0
    %164 = vmatpush.bf16.msra.mxu0 0
    %165 = vmatpush.bf16.msra.mxu0 0
    %166 = vmatpush.bf16.msra.mxu0 0
    %167 = vmatpush.bf16.msra.mxu0 %v154
    %168 = vmatpush.bf16.msra.mxu0 %v153
    %169 = vmatmul.bf16.gmra.mxu0 %v159
    %v170 = vpop.f32.mrf.mxu0
    %v171 = vadd.f32 %v143, %v170
    %v172 = vpop.f32.mrf.mxu0
    %173 = vdwg.mxu0
    %v174 = vld [vmem:[%s13] sm:$0x1]
    %v175 = vld [vmem:[%s15] sm:$0x1]
    %vm176 = vcmask 123904
    %v177 = vsel %vm176, %v171, 0.0
    %178 = vadd.xlane.f32.xlu0 %v177
    %v179 = vpop.xlane.xlu0 %178
    %v180 = vrcp.pop 16.0
    %v181 = vmul.f32 16.0, %v180
    %v182 = vsub.f32 1.0, %v181
    %v183 = vmul.f32 %v180, %v182
    %v184 = vadd.f32 %v180, %v183
    %vm185 = vweird.f32 %v180
    %v186 = vsel %vm185, %v180, %v184
    %v187 = vmul.f32 %v179, %v186
    %v188 = vsub.f32 %v171, %v187
    %v189 = vmul.f32 %v188, %v188
    %v190 = vsel %vm176, %v189, 0.0
    %191 = vadd.xlane.f32.xlu0 %v190
    %v192 = vpop.xlane.xlu0 %191
    %v193 = vmul.f32 %v192, %v186
    %v194 = vadd.f32 %v193, 1e-05
    %v195 = vrsqrt.pop %v194
    %v196 = vmul.f32 %v195, %v194
    %v197 = vmul.f32 %v196, %v195
    %v198 = vmul.f32 0.5, %v197
    %v199 = vsub.f32 1.5, %v198
    %v200 = vmul.f32 %v195, %v199
    %vm201 = vweird.f32 %v194
    %vm202 = vweird.f32 %v195
    %vm203 = vmor %vm201, %vm202
    %v204 = vsel %vm203, %v195, %v200
    %v205 = vmul.f32 %v188, %v204
    %v207 = vperm.slane %v174, 0
    %v209 = vmul.f32 %v205, %v207
    %v211 = vperm.slane %v175, 0
    %v213 = vadd.f32 %v209, %v211
    %v214 = vmul.f32 %v213, %v213
    %v215 = vmul.f32 %v213, %v214
    %v216 = vmul.f32 %v215, 0.044715
    %v217 = vadd.f32 %v213, %v216
    %v218 = vmul.f32 %v217, 0.7978846
    %v219 = vtanh.pop %v218
    %v220 = vadd.f32 %v219, 1.0
    %v221 = vmul.f32 %v220, 0.5
    %v222 = vmul.f32 %v213, %v221
    %v223 = vpack.c.bf16 %v222, %v222
    %v224 = vld [vmem:[%s17] sm:$0xf]
    %v225 = vld [vmem:[%s17 + $0x4] sm:$0xf]
    %v226 = vld [vmem:[%s19] sm:$0x1]
    %v228 = vperm.slane %v226, 0
    %v232 = vunpack.c.l.b16 %v224
    %v233 = vunpack.c.l.b16 %v225
    %v234 = vpack.c.b16 %v233, %v232
    %vm236 = vcmask 130048
    %v238 = vsel %vm236, %v223, 0
    %240 = vmatpush.bf16.msra.mxu0 0
    %241 = vmatpush.bf16.msra.mxu0 0
    %242 = vmatpush.bf16.msra.mxu0 0
    %243 = vmatpush.bf16.msra.mxu0 0
    %244 = vmatpush.bf16.msra.mxu0 0
    %245 = vmatpush.bf16.msra.mxu0 0
    %246 = vmatpush.bf16.msra.mxu0 0
    %247 = vmatpush.bf16.msra.mxu0 %v234
    %248 = vmatmul.bf16.gmra.mxu0 %v238
    %v249 = vpop.f32.mrf.mxu0
    %v250 = vadd.f32 %v228, %v249
    %v251 = vpop.f32.mrf.mxu0
    %252 = vdwg.mxu0
    %v253 = vld [vmem:[%s3] sm:$0x3]
    %v254 = vlaneseq
    %v255 = vand.u32 %v254, 127
    %v256 = vlaneseq
    %v257 = vshrl.u32 %v256, 7
    %v258 = vperm.slane %v253, 0
    %v259 = vlaneseq
    %v260 = vshrl.u32 %v259, 7
    %262 = vset.pattern.permute.xlu0 %v260
    %263 = vperm.xlu0 %262, %v258
    %v264 = vpop.permute.xlu0 %263
    %v265 = vperm.slane %v253, 1
    %v266 = vlaneseq
    %v267 = vshrl.u32 %v266, 7
    %269 = vset.pattern.permute.xlu0 %v267
    %270 = vperm.xlu0 %269, %v265
    %v271 = vpop.permute.xlu0 %270
    %vm272 = vcmp.eq.s32.totalorder %v255, %v264
    %vm273 = vcmp.eq.s32.totalorder %v255, %v271
    %vm274 = vcmp.gt.s32.totalorder %v257, 0
    %vm275 = vmand %vm272, %vm274
    %vm276 = vmand %vm273, %vm274
    %v277 = vsel %vm275, 1.0, 0.0
    %v278 = vsel %vm276, 1.0, 0.0
    %v279 = vpack.c.bf16 %v278, %v277
    %v280 = vld [vmem:[%s21] sm:$0xf]
    %v281 = vld [vmem:[%s21 + $0x4] sm:$0xf]
    %v282 = vld [vmem:[%s21 + $0x8] sm:$0xf]
    %v283 = vld [vmem:[%s21 + $0xc] sm:$0xf]
    %v284 = vld [vmem:[%s21 + $0x10] sm:$0xf]
    %v285 = vld [vmem:[%s21 + $0x14] sm:$0xf]
    %v286 = vld [vmem:[%s21 + $0x18] sm:$0xf]
    %v287 = vld [vmem:[%s21 + $0x1c] sm:$0xf]
    %v288 = vld [vmem:[%s21 + $0x20] sm:$0xf]
    %v289 = vld [vmem:[%s21 + $0x24] sm:$0xf]
    %v290 = vld [vmem:[%s21 + $0x28] sm:$0xf]
    %v291 = vld [vmem:[%s21 + $0x2c] sm:$0xf]
    %v292 = vld [vmem:[%s21 + $0x30] sm:$0xf]
    %v293 = vld [vmem:[%s21 + $0x34] sm:$0xf]
    %v294 = vld [vmem:[%s21 + $0x38] sm:$0xf]
    %v295 = vld [vmem:[%s21 + $0x3c] sm:$0xf]
    %v312 = vunpack.c.l.b16 %v280
    %v313 = vunpack.c.l.b16 %v281
    %v314 = vunpack.c.l.b16 %v282
    %v315 = vunpack.c.l.b16 %v283
    %v316 = vunpack.c.l.b16 %v284
    %v317 = vunpack.c.l.b16 %v285
    %v318 = vunpack.c.l.b16 %v286
    %v319 = vunpack.c.l.b16 %v287
    %v320 = vunpack.c.l.b16 %v288
    %v321 = vunpack.c.l.b16 %v289
    %v322 = vunpack.c.l.b16 %v290
    %v323 = vunpack.c.l.b16 %v291
    %v324 = vunpack.c.l.b16 %v292
    %v325 = vunpack.c.l.b16 %v293
    %v326 = vunpack.c.l.b16 %v294
    %v327 = vunpack.c.l.b16 %v295
    %v328 = vpack.c.b16 %v313, %v312
    %v329 = vpack.c.b16 %v315, %v314
    %v330 = vpack.c.b16 %v317, %v316
    %v331 = vpack.c.b16 %v319, %v318
    %v332 = vpack.c.b16 %v321, %v320
    %v333 = vpack.c.b16 %v323, %v322
    %v334 = vpack.c.b16 %v325, %v324
    %v335 = vpack.c.b16 %v327, %v326
    %344 = vmatpush.bf16.msra.mxu0 %v335
    %345 = vmatpush.bf16.msra.mxu0 %v334
    %346 = vmatpush.bf16.msra.mxu0 %v333
    %347 = vmatpush.bf16.msra.mxu0 %v332
    %348 = vmatpush.bf16.msra.mxu0 %v331
    %349 = vmatpush.bf16.msra.mxu0 %v330
    %350 = vmatpush.bf16.msra.mxu0 %v329
    %351 = vmatpush.bf16.msra.mxu0 %v328
    %352 = vmatmul.bf16.gmra.mxu0 %v279
    %v353 = vpop.f32.mrf.mxu0
    %v354 = vadd.f32 0.0, %v353
    %v355 = vpop.f32.mrf.mxu0
    %v356 = vadd.f32 0.0, %v355
    %357 = vdwg.mxu0
    %vm358 = vcmp.eq.s32.totalorder %v257, 0
    %v360 = vrot.slane %v250, 1
    %v361 = vperm.slane %v250, 0
    %v362 = vperm.slane %v360, 0
    %v365 = vsel %vm358, %v361, %v354
    %v366 = vsel %vm358, %v362, %v356
    %v367 = vld [vmem:[%s23] sm:$0xff]
    %v368 = vadd.f32 %v365, %v367
    %v369 = vadd.f32 %v366, %v367
    %vm370 = vcmp.le.s32.totalorder %v255, %v257
    %v371 = vsel %vm370, 0.0, -1e+09
    %v372 = vld [vmem:[%s5] sm:$0x3]
    %v373 = vsub.f32 1.0, %v372
    %v374 = vmul.f32 %v373, -1e+09
    %v376 = vrot.slane %v374, 1
    %v377 = vperm.slane %v374, 0
    %v378 = vperm.slane %v376, 0
    %v381 = vadd.f32 %v371, %v377
    %v382 = vadd.f32 %v371, %v378
    %v383 = vld [vmem:[%s25] sm:$0x1]
    %v384 = vld [vmem:[%s27] sm:$0x1]
    %v385 = vsel %vm157, %v368, 0.0
    %386 = vadd.xlane.f32.xlu0 %v385
    %v387 = vpop.xlane.xlu0 %386
    %v388 = vsel %vm157, %v369, 0.0
    %389 = vadd.xlane.f32.xlu0 %v388
    %v390 = vpop.xlane.xlu0 %389
    %v391 = vrcp.pop 32.0
    %v392 = vmul.f32 32.0, %v391
    %v393 = vsub.f32 1.0, %v392
    %v394 = vmul.f32 %v391, %v393
    %v395 = vadd.f32 %v391, %v394
    %vm396 = vweird.f32 %v391
    %v397 = vsel %vm396, %v391, %v395
    %v398 = vmul.f32 %v387, %v397
    %v399 = vmul.f32 %v390, %v397
    %v400 = vsub.f32 %v368, %v398
    %v401 = vsub.f32 %v369, %v399
    %v402 = vmul.f32 %v400, %v400
    %v403 = vmul.f32 %v401, %v401
    %v404 = vsel %vm157, %v402, 0.0
    %405 = vadd.xlane.f32.xlu0 %v404
    %v406 = vpop.xlane.xlu0 %405
    %v407 = vsel %vm157, %v403, 0.0
    %408 = vadd.xlane.f32.xlu0 %v407
    %v409 = vpop.xlane.xlu0 %408
    %v410 = vmul.f32 %v406, %v397
    %v411 = vmul.f32 %v409, %v397
    %v412 = vadd.f32 %v410, 1e-05
    %v413 = vadd.f32 %v411, 1e-05
    %v414 = vrsqrt.pop %v412
    %v415 = vmul.f32 %v414, %v412
    %v416 = vmul.f32 %v415, %v414
    %v417 = vmul.f32 0.5, %v416
    %v418 = vsub.f32 1.5, %v417
    %v419 = vmul.f32 %v414, %v418
    %vm420 = vweird.f32 %v412
    %vm421 = vweird.f32 %v414
    %vm422 = vmor %vm420, %vm421
    %v423 = vsel %vm422, %v414, %v419
    %v424 = vrsqrt.pop %v413
    %v425 = vmul.f32 %v424, %v413
    %v426 = vmul.f32 %v425, %v424
    %v427 = vmul.f32 0.5, %v426
    %v428 = vsub.f32 1.5, %v427
    %v429 = vmul.f32 %v424, %v428
    %vm430 = vweird.f32 %v413
    %vm431 = vweird.f32 %v424
    %vm432 = vmor %vm430, %vm431
    %v433 = vsel %vm432, %v424, %v429
    %v434 = vmul.f32 %v400, %v423
    %v435 = vmul.f32 %v401, %v433
    %v437 = vperm.slane %v383, 0
    %v439 = vmul.f32 %v434, %v437
    %v440 = vmul.f32 %v435, %v437
    %v442 = vperm.slane %v384, 0
    %v444 = vadd.f32 %v439, %v442
    %v445 = vadd.f32 %v440, %v442
    %v446 = vpack.c.bf16 %v445, %v444
    %v447 = vld [vmem:[%s29] sm:$0xf]
    %v448 = vld [vmem:[%s29 + $0x4] sm:$0xf]
    %v449 = vld [vmem:[%s29 + $0x8] sm:$0xf]
    %v450 = vld [vmem:[%s29 + $0xc] sm:$0xf]
    %v451 = vld [vmem:[%s35] sm:$0x1]
    %v453 = vperm.slane %v451, 0
    %v459 = vunpack.c.l.b16 %v447
    %v460 = vunpack.c.l.b16 %v448
    %v461 = vunpack.c.l.b16 %v449
    %v462 = vunpack.c.l.b16 %v450
    %v463 = vpack.c.b16 %v460, %v459
    %v464 = vpack.c.b16 %v462, %v461
    %v468 = vsel %vm157, %v446, 0
    %470 = vmatpush.bf16.msra.mxu0 0
    %471 = vmatpush.bf16.msra.mxu0 0
    %472 = vmatpush.bf16.msra.mxu0 0
    %473 = vmatpush.bf16.msra.mxu0 0
    %474 = vmatpush.bf16.msra.mxu0 0
    %475 = vmatpush.bf16.msra.mxu0 0
    %476 = vmatpush.bf16.msra.mxu0 %v464
    %477 = vmatpush.bf16.msra.mxu0 %v463
    %478 = vmatmul.bf16.gmra.mxu0 %v468
    %v479 = vpop.f32.mrf.mxu0
    %v480 = vadd.f32 %v453, %v479
    %v481 = vpop.f32.mrf.mxu0
    %v482 = vadd.f32 %v453, %v481
    %483 = vdwg.mxu0
    %v484 = vld [vmem:[%s31] sm:$0xf]
    %v485 = vld [vmem:[%s31 + $0x4] sm:$0xf]
    %v486 = vld [vmem:[%s31 + $0x8] sm:$0xf]
    %v487 = vld [vmem:[%s31 + $0xc] sm:$0xf]
    %v488 = vld [vmem:[%s37] sm:$0x1]
    %v490 = vperm.slane %v488, 0
    %v496 = vunpack.c.l.b16 %v484
    %v497 = vunpack.c.l.b16 %v485
    %v498 = vunpack.c.l.b16 %v486
    %v499 = vunpack.c.l.b16 %v487
    %v500 = vpack.c.b16 %v497, %v496
    %v501 = vpack.c.b16 %v499, %v498
    %504 = vmatpush.bf16.msra.mxu0 0
    %505 = vmatpush.bf16.msra.mxu0 0
    %506 = vmatpush.bf16.msra.mxu0 0
    %507 = vmatpush.bf16.msra.mxu0 0
    %508 = vmatpush.bf16.msra.mxu0 0
    %509 = vmatpush.bf16.msra.mxu0 0
    %510 = vmatpush.bf16.msra.mxu0 %v501
    %511 = vmatpush.bf16.msra.mxu0 %v500
    %512 = vmatmul.bf16.gmra.mxu0 %v468
    %v513 = vpop.f32.mrf.mxu0
    %v514 = vadd.f32 %v490, %v513
    %v515 = vpop.f32.mrf.mxu0
    %v516 = vadd.f32 %v490, %v515
    %517 = vdwg.mxu0
    %v518 = vld [vmem:[%s33] sm:$0xf]
    %v519 = vld [vmem:[%s33 + $0x4] sm:$0xf]
    %v520 = vld [vmem:[%s33 + $0x8] sm:$0xf]
    %v521 = vld [vmem:[%s33 + $0xc] sm:$0xf]
    %v522 = vld [vmem:[%s39] sm:$0x1]
    %v524 = vperm.slane %v522, 0
    %v530 = vunpack.c.l.b16 %v518
    %v531 = vunpack.c.l.b16 %v519
    %v532 = vunpack.c.l.b16 %v520
    %v533 = vunpack.c.l.b16 %v521
    %v534 = vpack.c.b16 %v531, %v530
    %v535 = vpack.c.b16 %v533, %v532
    %538 = vmatpush.bf16.msra.mxu0 0
    %539 = vmatpush.bf16.msra.mxu0 0
    %540 = vmatpush.bf16.msra.mxu0 0
    %541 = vmatpush.bf16.msra.mxu0 0
    %542 = vmatpush.bf16.msra.mxu0 0
    %543 = vmatpush.bf16.msra.mxu0 0
    %544 = vmatpush.bf16.msra.mxu0 %v535
    %545 = vmatpush.bf16.msra.mxu0 %v534
    %546 = vmatmul.bf16.gmra.mxu0 %v468
    %v547 = vpop.f32.mrf.mxu0
    %v548 = vadd.f32 %v524, %v547
    %v549 = vpop.f32.mrf.mxu0
    %v550 = vadd.f32 %v524, %v549
    %551 = vdwg.mxu0
    %v552 = vpack.c.bf16 %v480, %v480
    %v553 = vpack.c.bf16 %v482, %v482
    %v554 = vpack.c.bf16 %v514, %v514
    %v555 = vpack.c.bf16 %v516, %v516
    %v557 = vsel %vm236, %v552, 0
    %v560 = vsel %vm236, %v554, 0
    %562 = vmatpush.bf16.xpose.msra.mxu0 0
    %563 = vmatpush.bf16.xpose.msra.mxu0 0
    %564 = vmatpush.bf16.xpose.msra.mxu0 0
    %565 = vmatpush.bf16.xpose.msra.mxu0 0
    %566 = vmatpush.bf16.xpose.msra.mxu0 0
    %567 = vmatpush.bf16.xpose.msra.mxu0 0
    %568 = vmatpush.bf16.xpose.msra.mxu0 0
    %569 = vmatpush.bf16.xpose.msra.mxu0 %v560
    %570 = vmatmul.bf16.gmra.mxu0 %v557
    %v571 = vpop.f32.mrf.mxu0
    %v572 = vadd.f32 0.0, %v571
    %v573 = vpop.f32.mrf.mxu0
    %574 = vdwg.mxu0
    %v576 = vsel %vm236, %v553, 0
    %v579 = vsel %vm236, %v555, 0
    %581 = vmatpush.bf16.xpose.msra.mxu0 0
    %582 = vmatpush.bf16.xpose.msra.mxu0 0
    %583 = vmatpush.bf16.xpose.msra.mxu0 0
    %584 = vmatpush.bf16.xpose.msra.mxu0 0
    %585 = vmatpush.bf16.xpose.msra.mxu0 0
    %586 = vmatpush.bf16.xpose.msra.mxu0 0
    %587 = vmatpush.bf16.xpose.msra.mxu0 0
    %588 = vmatpush.bf16.xpose.msra.mxu0 %v579
    %589 = vmatmul.bf16.gmra.mxu0 %v576
    %v590 = vpop.f32.mrf.mxu0
    %v591 = vadd.f32 0.0, %v590
    %v592 = vpop.f32.mrf.mxu0
    %593 = vdwg.mxu0
    %v594 = vmul.f32 %v572, 0.25
    %v595 = vmul.f32 %v591, 0.25
    %v596 = vadd.f32 %v594, %v381
    %v597 = vadd.f32 %v595, %v382
    %vm598 = vcmask 64512
    %v599 = vsel %vm598, %v596, -inf
    %600 = vmax.xlane.f32.xlu0 %v599
    %v601 = vpop.xlane.xlu0 %600
    %v602 = vsel %vm598, %v597, -inf
    %603 = vmax.xlane.f32.xlu0 %v602
    %v604 = vpop.xlane.xlu0 %603
    %v605 = vsub.f32 %v596, %v601
    %v606 = vsub.f32 %v597, %v604
    %v607 = vmul.f32 %v605, 1.442695
    %v608 = vpow.pop %v607
    %v609 = vmul.f32 %v606, 1.442695
    %v610 = vpow.pop %v609
    %v611 = vsel %vm598, %v608, 0.0
    %612 = vadd.xlane.f32.xlu0 %v611
    %v613 = vpop.xlane.xlu0 %612
    %v614 = vsel %vm598, %v610, 0.0
    %615 = vadd.xlane.f32.xlu0 %v614
    %v616 = vpop.xlane.xlu0 %615
    %v617 = vrcp.pop %v613
    %v618 = vmul.f32 %v613, %v617
    %v619 = vsub.f32 1.0, %v618
    %v620 = vmul.f32 %v617, %v619
    %v621 = vadd.f32 %v617, %v620
    %vm622 = vweird.f32 %v613
    %vm623 = vweird.f32 %v617
    %vm624 = vmor %vm622, %vm623
    %v625 = vsel %vm624, %v617, %v621
    %v626 = vand.u32 2147483647, %v613
    %vm627 = vcmp.eq.f32.partialorder %v626, 8.507059e+37
    %v628 = vand.u32 %v613, 2147483648
    %v629 = vor.u32 1.1754944e-38, %v628
    %v630 = vsel %vm627, %v629, %v625
    %v631 = vmul.f32 %v608, %v630
    %v632 = vrcp.pop %v616
    %v633 = vmul.f32 %v616, %v632
    %v634 = vsub.f32 1.0, %v633
    %v635 = vmul.f32 %v632, %v634
    %v636 = vadd.f32 %v632, %v635
    %vm637 = vweird.f32 %v616
    %vm638 = vweird.f32 %v632
    %vm639 = vmor %vm637, %vm638
    %v640 = vsel %vm639, %v632, %v636
    %v641 = vand.u32 2147483647, %v616
    %vm642 = vcmp.eq.f32.partialorder %v641, 8.507059e+37
    %v643 = vand.u32 %v616, 2147483648
    %v644 = vor.u32 1.1754944e-38, %v643
    %v645 = vsel %vm642, %v644, %v640
    %v646 = vmul.f32 %v610, %v645
    %v647 = vpack.c.bf16 %v631, %v631
    %v648 = vpack.c.bf16 %v646, %v646
    %v649 = vpack.c.bf16 %v548, %v548
    %v650 = vpack.c.bf16 %v550, %v550
    %v652 = vsel %vm598, %v647, 0
    %vm654 = vcmask 1043456
    %v656 = vsel %vm654, %v649, 0
    %658 = vmatpush.bf16.msra.mxu0 0
    %659 = vmatpush.bf16.msra.mxu0 0
    %660 = vmatpush.bf16.msra.mxu0 0
    %661 = vmatpush.bf16.msra.mxu0 0
    %662 = vmatpush.bf16.msra.mxu0 0
    %663 = vmatpush.bf16.msra.mxu0 0
    %664 = vmatpush.bf16.msra.mxu0 0
    %665 = vmatpush.bf16.msra.mxu0 %v656
    %666 = vmatmul.bf16.gmra.mxu0 %v652
    %v667 = vpop.f32.mrf.mxu0
    %v668 = vadd.f32 0.0, %v667
    %v669 = vpop.f32.mrf.mxu0
    %670 = vdwg.mxu0
    %v672 = vsel %vm598, %v648, 0
    %v675 = vsel %vm654, %v650, 0
    %677 = vmatpush.bf16.msra.mxu0 0
    %678 = vmatpush.bf16.msra.mxu0 0
    %679 = vmatpush.bf16.msra.mxu0 0
    %680 = vmatpush.bf16.msra.mxu0 0
    %681 = vmatpush.bf16.msra.mxu0 0
    %682 = vmatpush.bf16.msra.mxu0 0
    %683 = vmatpush.bf16.msra.mxu0 0
    %684 = vmatpush.bf16.msra.mxu0 %v675
    %685 = vmatmul.bf16.gmra.mxu0 %v672
    %v686 = vpop.f32.mrf.mxu0
    %v687 = vadd.f32 0.0, %v686
    %v688 = vpop.f32.mrf.mxu0
    %689 = vdwg.mxu0
    %v690 = vpack.c.bf16 %v687, %v668
    %v691 = vld [vmem:[%s41] sm:$0xf]
    %v692 = vld [vmem:[%s41 + $0x4] sm:$0xf]
    %s693 = scalar_lea.vmem %s29, 16
    %v694 = vld [vmem:[%s693] sm:$0xf]
    %v695 = vld [vmem:[%s693 + $0x4] sm:$0xf]
    %v696 = vld [vmem:[%s693 + $0x8] sm:$0xf]
    %v697 = vld [vmem:[%s693 + $0xc] sm:$0xf]
    %s698 = scalar_lea.vmem %s35, 1
    %v699 = vld [vmem:[%s698] sm:$0x1]
    %v701 = vperm.slane %v699, 0
    %v707 = vunpack.c.l.b16 %v694
    %v708 = vunpack.c.l.b16 %v695
    %v709 = vunpack.c.l.b16 %v696
    %v710 = vunpack.c.l.b16 %v697
    %v711 = vpack.c.b16 %v708, %v707
    %v712 = vpack.c.b16 %v710, %v709
    %715 = vmatpush.bf16.msra.mxu0 0
    %716 = vmatpush.bf16.msra.mxu0 0
    %717 = vmatpush.bf16.msra.mxu0 0
    %718 = vmatpush.bf16.msra.mxu0 0
    %719 = vmatpush.bf16.msra.mxu0 0
    %720 = vmatpush.bf16.msra.mxu0 0
    %721 = vmatpush.bf16.msra.mxu0 %v712
    %722 = vmatpush.bf16.msra.mxu0 %v711
    %723 = vmatmul.bf16.gmra.mxu0 %v468
    %v724 = vpop.f32.mrf.mxu0
    %v725 = vadd.f32 %v701, %v724
    %v726 = vpop.f32.mrf.mxu0
    %v727 = vadd.f32 %v701, %v726
    %728 = vdwg.mxu0
    %s729 = scalar_lea.vmem %s31, 16
    %v730 = vld [vmem:[%s729] sm:$0xf]
    %v731 = vld [vmem:[%s729 + $0x4] sm:$0xf]
    %v732 = vld [vmem:[%s729 + $0x8] sm:$0xf]
    %v733 = vld [vmem:[%s729 + $0xc] sm:$0xf]
    %s734 = scalar_lea.vmem %s37, 1
    %v735 = vld [vmem:[%s734] sm:$0x1]
    %v737 = vperm.slane %v735, 0
    %v743 = vunpack.c.l.b16 %v730
    %v744 = vunpack.c.l.b16 %v731
    %v745 = vunpack.c.l.b16 %v732
    %v746 = vunpack.c.l.b16 %v733
    %v747 = vpack.c.b16 %v744, %v743
    %v748 = vpack.c.b16 %v746, %v745
    %751 = vmatpush.bf16.msra.mxu0 0
    %752 = vmatpush.bf16.msra.mxu0 0
    %753 = vmatpush.bf16.msra.mxu0 0
    %754 = vmatpush.bf16.msra.mxu0 0
    %755 = vmatpush.bf16.msra.mxu0 0
    %756 = vmatpush.bf16.msra.mxu0 0
    %757 = vmatpush.bf16.msra.mxu0 %v748
    %758 = vmatpush.bf16.msra.mxu0 %v747
    %759 = vmatmul.bf16.gmra.mxu0 %v468
    %v760 = vpop.f32.mrf.mxu0
    %v761 = vadd.f32 %v737, %v760
    %v762 = vpop.f32.mrf.mxu0
    %v763 = vadd.f32 %v737, %v762
    %764 = vdwg.mxu0
    %s765 = scalar_lea.vmem %s33, 16
    %v766 = vld [vmem:[%s765] sm:$0xf]
    %v767 = vld [vmem:[%s765 + $0x4] sm:$0xf]
    %v768 = vld [vmem:[%s765 + $0x8] sm:$0xf]
    %v769 = vld [vmem:[%s765 + $0xc] sm:$0xf]
    %s770 = scalar_lea.vmem %s39, 1
    %v771 = vld [vmem:[%s770] sm:$0x1]
    %v773 = vperm.slane %v771, 0
    %v779 = vunpack.c.l.b16 %v766
    %v780 = vunpack.c.l.b16 %v767
    %v781 = vunpack.c.l.b16 %v768
    %v782 = vunpack.c.l.b16 %v769
    %v783 = vpack.c.b16 %v780, %v779
    %v784 = vpack.c.b16 %v782, %v781
    %787 = vmatpush.bf16.msra.mxu0 0
    %788 = vmatpush.bf16.msra.mxu0 0
    %789 = vmatpush.bf16.msra.mxu0 0
    %790 = vmatpush.bf16.msra.mxu0 0
    %791 = vmatpush.bf16.msra.mxu0 0
    %792 = vmatpush.bf16.msra.mxu0 0
    %793 = vmatpush.bf16.msra.mxu0 %v784
    %794 = vmatpush.bf16.msra.mxu0 %v783
    %795 = vmatmul.bf16.gmra.mxu0 %v468
    %v796 = vpop.f32.mrf.mxu0
    %v797 = vadd.f32 %v773, %v796
    %v798 = vpop.f32.mrf.mxu0
    %v799 = vadd.f32 %v773, %v798
    %800 = vdwg.mxu0
    %v801 = vpack.c.bf16 %v725, %v725
    %v802 = vpack.c.bf16 %v727, %v727
    %v803 = vpack.c.bf16 %v761, %v761
    %v804 = vpack.c.bf16 %v763, %v763
    %v806 = vsel %vm236, %v801, 0
    %v809 = vsel %vm236, %v803, 0
    %811 = vmatpush.bf16.xpose.msra.mxu0 0
    %812 = vmatpush.bf16.xpose.msra.mxu0 0
    %813 = vmatpush.bf16.xpose.msra.mxu0 0
    %814 = vmatpush.bf16.xpose.msra.mxu0 0
    %815 = vmatpush.bf16.xpose.msra.mxu0 0
    %816 = vmatpush.bf16.xpose.msra.mxu0 0
    %817 = vmatpush.bf16.xpose.msra.mxu0 0
    %818 = vmatpush.bf16.xpose.msra.mxu0 %v809
    %819 = vmatmul.bf16.gmra.mxu0 %v806
    %v820 = vpop.f32.mrf.mxu0
    %v821 = vadd.f32 0.0, %v820
    %v822 = vpop.f32.mrf.mxu0
    %823 = vdwg.mxu0
    %v825 = vsel %vm236, %v802, 0
    %v828 = vsel %vm236, %v804, 0
    %830 = vmatpush.bf16.xpose.msra.mxu0 0
    %831 = vmatpush.bf16.xpose.msra.mxu0 0
    %832 = vmatpush.bf16.xpose.msra.mxu0 0
    %833 = vmatpush.bf16.xpose.msra.mxu0 0
    %834 = vmatpush.bf16.xpose.msra.mxu0 0
    %835 = vmatpush.bf16.xpose.msra.mxu0 0
    %836 = vmatpush.bf16.xpose.msra.mxu0 0
    %837 = vmatpush.bf16.xpose.msra.mxu0 %v828
    %838 = vmatmul.bf16.gmra.mxu0 %v825
    %v839 = vpop.f32.mrf.mxu0
    %v840 = vadd.f32 0.0, %v839
    %v841 = vpop.f32.mrf.mxu0
    %842 = vdwg.mxu0
    %v843 = vmul.f32 %v821, 0.25
    %v844 = vmul.f32 %v840, 0.25
    %v845 = vadd.f32 %v843, %v381
    %v846 = vadd.f32 %v844, %v382
    %v847 = vsel %vm598, %v845, -inf
    %848 = vmax.xlane.f32.xlu0 %v847
    %v849 = vpop.xlane.xlu0 %848
    %v850 = vsel %vm598, %v846, -inf
    %851 = vmax.xlane.f32.xlu0 %v850
    %v852 = vpop.xlane.xlu0 %851
    %v853 = vsub.f32 %v845, %v849
    %v854 = vsub.f32 %v846, %v852
    %v855 = vmul.f32 %v853, 1.442695
    %v856 = vpow.pop %v855
    %v857 = vmul.f32 %v854, 1.442695
    %v858 = vpow.pop %v857
    %v859 = vsel %vm598, %v856, 0.0
    %860 = vadd.xlane.f32.xlu0 %v859
    %v861 = vpop.xlane.xlu0 %860
    %v862 = vsel %vm598, %v858, 0.0
    %863 = vadd.xlane.f32.xlu0 %v862
    %v864 = vpop.xlane.xlu0 %863
    %v865 = vrcp.pop %v861
    %v866 = vmul.f32 %v861, %v865
    %v867 = vsub.f32 1.0, %v866
    %v868 = vmul.f32 %v865, %v867
    %v869 = vadd.f32 %v865, %v868
    %vm870 = vweird.f32 %v861
    %vm871 = vweird.f32 %v865
    %vm872 = vmor %vm870, %vm871
    %v873 = vsel %vm872, %v865, %v869
    %v874 = vand.u32 2147483647, %v861
    %vm875 = vcmp.eq.f32.partialorder %v874, 8.507059e+37
    %v876 = vand.u32 %v861, 2147483648
    %v877 = vor.u32 1.1754944e-38, %v876
    %v878 = vsel %vm875, %v877, %v873
    %v879 = vmul.f32 %v856, %v878
    %v880 = vrcp.pop %v864
    %v881 = vmul.f32 %v864, %v880
    %v882 = vsub.f32 1.0, %v881
    %v883 = vmul.f32 %v880, %v882
    %v884 = vadd.f32 %v880, %v883
    %vm885 = vweird.f32 %v864
    %vm886 = vweird.f32 %v880
    %vm887 = vmor %vm885, %vm886
    %v888 = vsel %vm887, %v880, %v884
    %v889 = vand.u32 2147483647, %v864
    %vm890 = vcmp.eq.f32.partialorder %v889, 8.507059e+37
    %v891 = vand.u32 %v864, 2147483648
    %v892 = vor.u32 1.1754944e-38, %v891
    %v893 = vsel %vm890, %v892, %v888
    %v894 = vmul.f32 %v858, %v893
    %v895 = vpack.c.bf16 %v879, %v879
    %v896 = vpack.c.bf16 %v894, %v894
    %v897 = vpack.c.bf16 %v797, %v797
    %v898 = vpack.c.bf16 %v799, %v799
    %v900 = vsel %vm598, %v895, 0
    %v903 = vsel %vm654, %v897, 0
    %905 = vmatpush.bf16.msra.mxu0 0
    %906 = vmatpush.bf16.msra.mxu0 0
    %907 = vmatpush.bf16.msra.mxu0 0
    %908 = vmatpush.bf16.msra.mxu0 0
    %909 = vmatpush.bf16.msra.mxu0 0
    %910 = vmatpush.bf16.msra.mxu0 0
    %911 = vmatpush.bf16.msra.mxu0 0
    %912 = vmatpush.bf16.msra.mxu0 %v903
    %913 = vmatmul.bf16.gmra.mxu0 %v900
    %v914 = vpop.f32.mrf.mxu0
    %v915 = vadd.f32 0.0, %v914
    %v916 = vpop.f32.mrf.mxu0
    %917 = vdwg.mxu0
    %v919 = vsel %vm598, %v896, 0
    %v922 = vsel %vm654, %v898, 0
    %924 = vmatpush.bf16.msra.mxu0 0
    %925 = vmatpush.bf16.msra.mxu0 0
    %926 = vmatpush.bf16.msra.mxu0 0
    %927 = vmatpush.bf16.msra.mxu0 0
    %928 = vmatpush.bf16.msra.mxu0 0
    %929 = vmatpush.bf16.msra.mxu0 0
    %930 = vmatpush.bf16.msra.mxu0 0
    %931 = vmatpush.bf16.msra.mxu0 %v922
    %932 = vmatmul.bf16.gmra.mxu0 %v919
    %v933 = vpop.f32.mrf.mxu0
    %v934 = vadd.f32 0.0, %v933
    %v935 = vpop.f32.mrf.mxu0
    %936 = vdwg.mxu0
    %v937 = vpack.c.bf16 %v934, %v915
    %s938 = scalar_lea.vmem %s41, 8
    %v939 = vld [vmem:[%s938] sm:$0xf]
    %v940 = vld [vmem:[%s938 + $0x4] sm:$0xf]
    %v943 = vunpack.c.l.b16 %v939
    %v944 = vunpack.c.l.b16 %v940
    %v945 = vpack.c.b16 %v944, %v943
    %v948 = vsel %vm236, %v937, 0
    %950 = vmatpush.bf16.msra.mxu0 0
    %951 = vmatpush.bf16.msra.mxu0 0
    %952 = vmatpush.bf16.msra.mxu0 0
    %953 = vmatpush.bf16.msra.mxu0 0
    %954 = vmatpush.bf16.msra.mxu0 0
    %955 = vmatpush.bf16.msra.mxu0 0
    %956 = vmatpush.bf16.msra.mxu0 0
    %957 = vmatpush.bf16.msra.mxu0 %v945
    %958 = vmatmul.bf16.gmra.mxu0 %v948
    %v959 = vpop.f32.mrf.mxu0
    %v960 = vadd.f32 0.0, %v959
    %v961 = vpop.f32.mrf.mxu0
    %v962 = vadd.f32 0.0, %v961
    %963 = vdwg.mxu0
    %v966 = vunpack.c.l.b16 %v691
    %v967 = vunpack.c.l.b16 %v692
    %v968 = vpack.c.b16 %v967, %v966
    %v971 = vsel %vm236, %v690, 0
    %973 = vmatpush.bf16.msra.mxu0 0
    %974 = vmatpush.bf16.msra.mxu0 0
    %975 = vmatpush.bf16.msra.mxu0 0
    %976 = vmatpush.bf16.msra.mxu0 0
    %977 = vmatpush.bf16.msra.mxu0 0
    %978 = vmatpush.bf16.msra.mxu0 0
    %979 = vmatpush.bf16.msra.mxu0 0
    %980 = vmatpush.bf16.msra.mxu0 %v968
    %981 = vmatmul.bf16.gmra.mxu0 %v971
    %v982 = vpop.f32.mrf.mxu0
    %v983 = vadd.f32 %v960, %v982
    %v984 = vpop.f32.mrf.mxu0
    %v985 = vadd.f32 %v962, %v984
    %986 = vdwg.mxu0
    %v987 = vadd.f32 %v368, %v983
    %v988 = vadd.f32 %v369, %v985
    %v989 = vld [vmem:[%s43] sm:$0x1]
    %v991 = vperm.slane %v989, 0
    %v993 = vadd.f32 %v987, %v991
    %v994 = vadd.f32 %v988, %v991
    %v995 = vld [vmem:[%s45] sm:$0x1]
    %v996 = vld [vmem:[%s47] sm:$0x1]
    %v997 = vsel %vm157, %v993, 0.0
    %998 = vadd.xlane.f32.xlu0 %v997
    %v999 = vpop.xlane.xlu0 %998
    %v1000 = vsel %vm157, %v994, 0.0
    %1001 = vadd.xlane.f32.xlu0 %v1000
    %v1002 = vpop.xlane.xlu0 %1001
    %v1003 = vmul.f32 %v999, %v397
    %v1004 = vmul.f32 %v1002, %v397
    %v1005 = vsub.f32 %v993, %v1003
    %v1006 = vsub.f32 %v994, %v1004
    %v1007 = vmul.f32 %v1005, %v1005
    %v1008 = vmul.f32 %v1006, %v1006
    %v1009 = vsel %vm157, %v1007, 0.0
    %1010 = vadd.xlane.f32.xlu0 %v1009
    %v1011 = vpop.xlane.xlu0 %1010
    %v1012 = vsel %vm157, %v1008, 0.0
    %1013 = vadd.xlane.f32.xlu0 %v1012
    %v1014 = vpop.xlane.xlu0 %1013
    %v1015 = vmul.f32 %v1011, %v397
    %v1016 = vmul.f32 %v1014, %v397
    %v1017 = vadd.f32 %v1015, 1e-05
    %v1018 = vadd.f32 %v1016, 1e-05
    %v1019 = vrsqrt.pop %v1017
    %v1020 = vmul.f32 %v1019, %v1017
    %v1021 = vmul.f32 %v1020, %v1019
    %v1022 = vmul.f32 0.5, %v1021
    %v1023 = vsub.f32 1.5, %v1022
    %v1024 = vmul.f32 %v1019, %v1023
    %vm1025 = vweird.f32 %v1017
    %vm1026 = vweird.f32 %v1019
    %vm1027 = vmor %vm1025, %vm1026
    %v1028 = vsel %vm1027, %v1019, %v1024
    %v1029 = vrsqrt.pop %v1018
    %v1030 = vmul.f32 %v1029, %v1018
    %v1031 = vmul.f32 %v1030, %v1029
    %v1032 = vmul.f32 0.5, %v1031
    %v1033 = vsub.f32 1.5, %v1032
    %v1034 = vmul.f32 %v1029, %v1033
    %vm1035 = vweird.f32 %v1018
    %vm1036 = vweird.f32 %v1029
    %vm1037 = vmor %vm1035, %vm1036
    %v1038 = vsel %vm1037, %v1029, %v1034
    %v1039 = vmul.f32 %v1005, %v1028
    %v1040 = vmul.f32 %v1006, %v1038
    %v1042 = vperm.slane %v995, 0
    %v1044 = vmul.f32 %v1039, %v1042
    %v1045 = vmul.f32 %v1040, %v1042
    %v1047 = vperm.slane %v996, 0
    %v1049 = vadd.f32 %v1044, %v1047
    %v1050 = vadd.f32 %v1045, %v1047
    %v1051 = vpack.c.bf16 %v1050, %v1049
    %v1052 = vld [vmem:[%s49] sm:$0xf]
    %v1053 = vld [vmem:[%s49 + $0x4] sm:$0xf]
    %v1054 = vld [vmem:[%s49 + $0x8] sm:$0xf]
    %v1055 = vld [vmem:[%s49 + $0xc] sm:$0xf]
    %v1056 = vld [vmem:[%s51] sm:$0x1]
    %v1058 = vperm.slane %v1056, 0
    %v1064 = vunpack.c.l.b16 %v1052
    %v1065 = vunpack.c.l.b16 %v1053
    %v1066 = vunpack.c.l.b16 %v1054
    %v1067 = vunpack.c.l.b16 %v1055
    %v1068 = vpack.c.b16 %v1065, %v1064
    %v1069 = vpack.c.b16 %v1067, %v1066
    %v1073 = vsel %vm157, %v1051, 0
    %1075 = vmatpush.bf16.msra.mxu0 0
    %1076 = vmatpush.bf16.msra.mxu0 0
    %1077 = vmatpush.bf16.msra.mxu0 0
    %1078 = vmatpush.bf16.msra.mxu0 0
    %1079 = vmatpush.bf16.msra.mxu0 0
    %1080 = vmatpush.bf16.msra.mxu0 0
    %1081 = vmatpush.bf16.msra.mxu0 %v1069
    %1082 = vmatpush.bf16.msra.mxu0 %v1068
    %1083 = vmatmul.bf16.gmra.mxu0 %v1073
    %v1084 = vpop.f32.mrf.mxu0
    %v1085 = vadd.f32 %v1058, %v1084
    %v1086 = vpop.f32.mrf.mxu0
    %v1087 = vadd.f32 %v1058, %v1086
    %1088 = vdwg.mxu0
    %v1089 = vmul.f32 %v1085, %v1085
    %v1090 = vmul.f32 %v1087, %v1087
    %v1091 = vmul.f32 %v1085, %v1089
    %v1092 = vmul.f32 %v1087, %v1090
    %v1093 = vmul.f32 %v1091, 0.044715
    %v1094 = vmul.f32 %v1092, 0.044715
    %v1095 = vadd.f32 %v1085, %v1093
    %v1096 = vadd.f32 %v1087, %v1094
    %v1097 = vmul.f32 %v1095, 0.7978846
    %v1098 = vmul.f32 %v1096, 0.7978846
    %v1099 = vtanh.pop %v1097
    %v1100 = vtanh.pop %v1098
    %v1101 = vadd.f32 %v1099, 1.0
    %v1102 = vadd.f32 %v1100, 1.0
    %v1103 = vmul.f32 %v1101, 0.5
    %v1104 = vmul.f32 %v1102, 0.5
    %v1105 = vmul.f32 %v1085, %v1103
    %v1106 = vmul.f32 %v1087, %v1104
    %v1107 = vpack.c.bf16 %v1106, %v1105
    %v1108 = vld [vmem:[%s53] sm:$0xf]
    %v1109 = vld [vmem:[%s53 + $0x4] sm:$0xf]
    %v1110 = vld [vmem:[%s53 + $0x8] sm:$0xf]
    %v1111 = vld [vmem:[%s53 + $0xc] sm:$0xf]
    %v1112 = vld [vmem:[%s53 + $0x10] sm:$0xf]
    %v1113 = vld [vmem:[%s53 + $0x14] sm:$0xf]
    %v1114 = vld [vmem:[%s53 + $0x18] sm:$0xf]
    %v1115 = vld [vmem:[%s53 + $0x1c] sm:$0xf]
    %v1116 = vld [vmem:[%s53 + $0x20] sm:$0xf]
    %v1117 = vld [vmem:[%s53 + $0x24] sm:$0xf]
    %v1118 = vld [vmem:[%s53 + $0x28] sm:$0xf]
    %v1119 = vld [vmem:[%s53 + $0x2c] sm:$0xf]
    %v1120 = vld [vmem:[%s53 + $0x30] sm:$0xf]
    %v1121 = vld [vmem:[%s53 + $0x34] sm:$0xf]
    %v1122 = vld [vmem:[%s53 + $0x38] sm:$0xf]
    %v1123 = vld [vmem:[%s53 + $0x3c] sm:$0xf]
    %v1140 = vunpack.c.l.b16 %v1108
    %v1141 = vunpack.c.l.b16 %v1109
    %v1142 = vunpack.c.l.b16 %v1110
    %v1143 = vunpack.c.l.b16 %v1111
    %v1144 = vunpack.c.l.b16 %v1112
    %v1145 = vunpack.c.l.b16 %v1113
    %v1146 = vunpack.c.l.b16 %v1114
    %v1147 = vunpack.c.l.b16 %v1115
    %v1148 = vunpack.c.l.b16 %v1116
    %v1149 = vunpack.c.l.b16 %v1117
    %v1150 = vunpack.c.l.b16 %v1118
    %v1151 = vunpack.c.l.b16 %v1119
    %v1152 = vunpack.c.l.b16 %v1120
    %v1153 = vunpack.c.l.b16 %v1121
    %v1154 = vunpack.c.l.b16 %v1122
    %v1155 = vunpack.c.l.b16 %v1123
    %v1156 = vpack.c.b16 %v1141, %v1140
    %v1157 = vpack.c.b16 %v1143, %v1142
    %v1158 = vpack.c.b16 %v1145, %v1144
    %v1159 = vpack.c.b16 %v1147, %v1146
    %v1160 = vpack.c.b16 %v1149, %v1148
    %v1161 = vpack.c.b16 %v1151, %v1150
    %v1162 = vpack.c.b16 %v1153, %v1152
    %v1163 = vpack.c.b16 %v1155, %v1154
    %1172 = vmatpush.bf16.msra.mxu0 %v1163
    %1173 = vmatpush.bf16.msra.mxu0 %v1162
    %1174 = vmatpush.bf16.msra.mxu0 %v1161
    %1175 = vmatpush.bf16.msra.mxu0 %v1160
    %1176 = vmatpush.bf16.msra.mxu0 %v1159
    %1177 = vmatpush.bf16.msra.mxu0 %v1158
    %1178 = vmatpush.bf16.msra.mxu0 %v1157
    %1179 = vmatpush.bf16.msra.mxu0 %v1156
    %1180 = vmatmul.bf16.gmra.mxu0 %v1107
    %v1181 = vpop.f32.mrf.mxu0
    %v1182 = vadd.f32 0.0, %v1181
    %v1183 = vpop.f32.mrf.mxu0
    %v1184 = vadd.f32 0.0, %v1183
    %1185 = vdwg.mxu0
    %v1186 = vadd.f32 %v993, %v1182
    %v1187 = vadd.f32 %v994, %v1184
    %v1188 = vld [vmem:[%s55] sm:$0x1]
    %v1190 = vperm.slane %v1188, 0
    %v1192 = vadd.f32 %v1186, %v1190
    %v1193 = vadd.f32 %v1187, %v1190
    %s1194 = scalar_lea.vmem %s25, 1
    %v1195 = vld [vmem:[%s1194] sm:$0x1]
    %s1196 = scalar_lea.vmem %s27, 1
    %v1197 = vld [vmem:[%s1196] sm:$0x1]
    %v1198 = vsel %vm157, %v1192, 0.0
    %1199 = vadd.xlane.f32.xlu0 %v1198
    %v1200 = vpop.xlane.xlu0 %1199
    %v1201 = vsel %vm157, %v1193, 0.0
    %1202 = vadd.xlane.f32.xlu0 %v1201
    %v1203 = vpop.xlane.xlu0 %1202
    %v1204 = vmul.f32 %v1200, %v397
    %v1205 = vmul.f32 %v1203, %v397
    %v1206 = vsub.f32 %v1192, %v1204
    %v1207 = vsub.f32 %v1193, %v1205
    %v1208 = vmul.f32 %v1206, %v1206
    %v1209 = vmul.f32 %v1207, %v1207
    %v1210 = vsel %vm157, %v1208, 0.0
    %1211 = vadd.xlane.f32.xlu0 %v1210
    %v1212 = vpop.xlane.xlu0 %1211
    %v1213 = vsel %vm157, %v1209, 0.0
    %1214 = vadd.xlane.f32.xlu0 %v1213
    %v1215 = vpop.xlane.xlu0 %1214
    %v1216 = vmul.f32 %v1212, %v397
    %v1217 = vmul.f32 %v1215, %v397
    %v1218 = vadd.f32 %v1216, 1e-05
    %v1219 = vadd.f32 %v1217, 1e-05
    %v1220 = vrsqrt.pop %v1218
    %v1221 = vmul.f32 %v1220, %v1218
    %v1222 = vmul.f32 %v1221, %v1220
    %v1223 = vmul.f32 0.5, %v1222
    %v1224 = vsub.f32 1.5, %v1223
    %v1225 = vmul.f32 %v1220, %v1224
    %vm1226 = vweird.f32 %v1218
    %vm1227 = vweird.f32 %v1220
    %vm1228 = vmor %vm1226, %vm1227
    %v1229 = vsel %vm1228, %v1220, %v1225
    %v1230 = vrsqrt.pop %v1219
    %v1231 = vmul.f32 %v1230, %v1219
    %v1232 = vmul.f32 %v1231, %v1230
    %v1233 = vmul.f32 0.5, %v1232
    %v1234 = vsub.f32 1.5, %v1233
    %v1235 = vmul.f32 %v1230, %v1234
    %vm1236 = vweird.f32 %v1219
    %vm1237 = vweird.f32 %v1230
    %vm1238 = vmor %vm1236, %vm1237
    %v1239 = vsel %vm1238, %v1230, %v1235
    %v1240 = vmul.f32 %v1206, %v1229
    %v1241 = vmul.f32 %v1207, %v1239
    %v1243 = vperm.slane %v1195, 0
    %v1245 = vmul.f32 %v1240, %v1243
    %v1246 = vmul.f32 %v1241, %v1243
    %v1248 = vperm.slane %v1197, 0
    %v1250 = vadd.f32 %v1245, %v1248
    %v1251 = vadd.f32 %v1246, %v1248
    %v1252 = vpack.c.bf16 %v1251, %v1250
    %s1253 = scalar_lea.vmem %s29, 32
    %v1254 = vld [vmem:[%s1253] sm:$0xf]
    %v1255 = vld [vmem:[%s1253 + $0x4] sm:$0xf]
    %v1256 = vld [vmem:[%s1253 + $0x8] sm:$0xf]
    %v1257 = vld [vmem:[%s1253 + $0xc] sm:$0xf]
    %s1258 = scalar_lea.vmem %s35, 2
    %v1259 = vld [vmem:[%s1258] sm:$0x1]
    %v1261 = vperm.slane %v1259, 0
    %v1267 = vunpack.c.l.b16 %v1254
    %v1268 = vunpack.c.l.b16 %v1255
    %v1269 = vunpack.c.l.b16 %v1256
    %v1270 = vunpack.c.l.b16 %v1257
    %v1271 = vpack.c.b16 %v1268, %v1267
    %v1272 = vpack.c.b16 %v1270, %v1269
    %v1276 = vsel %vm157, %v1252, 0
    %1278 = vmatpush.bf16.msra.mxu0 0
    %1279 = vmatpush.bf16.msra.mxu0 0
    %1280 = vmatpush.bf16.msra.mxu0 0
    %1281 = vmatpush.bf16.msra.mxu0 0
    %1282 = vmatpush.bf16.msra.mxu0 0
    %1283 = vmatpush.bf16.msra.mxu0 0
    %1284 = vmatpush.bf16.msra.mxu0 %v1272
    %1285 = vmatpush.bf16.msra.mxu0 %v1271
    %1286 = vmatmul.bf16.gmra.mxu0 %v1276
    %v1287 = vpop.f32.mrf.mxu0
    %v1288 = vadd.f32 %v1261, %v1287
    %v1289 = vpop.f32.mrf.mxu0
    %v1290 = vadd.f32 %v1261, %v1289
    %1291 = vdwg.mxu0
    %s1292 = scalar_lea.vmem %s31, 32
    %v1293 = vld [vmem:[%s1292] sm:$0xf]
    %v1294 = vld [vmem:[%s1292 + $0x4] sm:$0xf]
    %v1295 = vld [vmem:[%s1292 + $0x8] sm:$0xf]
    %v1296 = vld [vmem:[%s1292 + $0xc] sm:$0xf]
    %s1297 = scalar_lea.vmem %s37, 2
    %v1298 = vld [vmem:[%s1297] sm:$0x1]
    %v1300 = vperm.slane %v1298, 0
    %v1306 = vunpack.c.l.b16 %v1293
    %v1307 = vunpack.c.l.b16 %v1294
    %v1308 = vunpack.c.l.b16 %v1295
    %v1309 = vunpack.c.l.b16 %v1296
    %v1310 = vpack.c.b16 %v1307, %v1306
    %v1311 = vpack.c.b16 %v1309, %v1308
    %1314 = vmatpush.bf16.msra.mxu0 0
    %1315 = vmatpush.bf16.msra.mxu0 0
    %1316 = vmatpush.bf16.msra.mxu0 0
    %1317 = vmatpush.bf16.msra.mxu0 0
    %1318 = vmatpush.bf16.msra.mxu0 0
    %1319 = vmatpush.bf16.msra.mxu0 0
    %1320 = vmatpush.bf16.msra.mxu0 %v1311
    %1321 = vmatpush.bf16.msra.mxu0 %v1310
    %1322 = vmatmul.bf16.gmra.mxu0 %v1276
    %v1323 = vpop.f32.mrf.mxu0
    %v1324 = vadd.f32 %v1300, %v1323
    %v1325 = vpop.f32.mrf.mxu0
    %v1326 = vadd.f32 %v1300, %v1325
    %1327 = vdwg.mxu0
    %s1328 = scalar_lea.vmem %s33, 32
    %v1329 = vld [vmem:[%s1328] sm:$0xf]
    %v1330 = vld [vmem:[%s1328 + $0x4] sm:$0xf]
    %v1331 = vld [vmem:[%s1328 + $0x8] sm:$0xf]
    %v1332 = vld [vmem:[%s1328 + $0xc] sm:$0xf]
    %s1333 = scalar_lea.vmem %s39, 2
    %v1334 = vld [vmem:[%s1333] sm:$0x1]
    %v1336 = vperm.slane %v1334, 0
    %v1342 = vunpack.c.l.b16 %v1329
    %v1343 = vunpack.c.l.b16 %v1330
    %v1344 = vunpack.c.l.b16 %v1331
    %v1345 = vunpack.c.l.b16 %v1332
    %v1346 = vpack.c.b16 %v1343, %v1342
    %v1347 = vpack.c.b16 %v1345, %v1344
    %1350 = vmatpush.bf16.msra.mxu0 0
    %1351 = vmatpush.bf16.msra.mxu0 0
    %1352 = vmatpush.bf16.msra.mxu0 0
    %1353 = vmatpush.bf16.msra.mxu0 0
    %1354 = vmatpush.bf16.msra.mxu0 0
    %1355 = vmatpush.bf16.msra.mxu0 0
    %1356 = vmatpush.bf16.msra.mxu0 %v1347
    %1357 = vmatpush.bf16.msra.mxu0 %v1346
    %1358 = vmatmul.bf16.gmra.mxu0 %v1276
    %v1359 = vpop.f32.mrf.mxu0
    %v1360 = vadd.f32 %v1336, %v1359
    %v1361 = vpop.f32.mrf.mxu0
    %v1362 = vadd.f32 %v1336, %v1361
    %1363 = vdwg.mxu0
    %v1364 = vpack.c.bf16 %v1288, %v1288
    %v1365 = vpack.c.bf16 %v1290, %v1290
    %v1366 = vpack.c.bf16 %v1324, %v1324
    %v1367 = vpack.c.bf16 %v1326, %v1326
    %v1369 = vsel %vm236, %v1364, 0
    %v1372 = vsel %vm236, %v1366, 0
    %1374 = vmatpush.bf16.xpose.msra.mxu0 0
    %1375 = vmatpush.bf16.xpose.msra.mxu0 0
    %1376 = vmatpush.bf16.xpose.msra.mxu0 0
    %1377 = vmatpush.bf16.xpose.msra.mxu0 0
    %1378 = vmatpush.bf16.xpose.msra.mxu0 0
    %1379 = vmatpush.bf16.xpose.msra.mxu0 0
    %1380 = vmatpush.bf16.xpose.msra.mxu0 0
    %1381 = vmatpush.bf16.xpose.msra.mxu0 %v1372
    %1382 = vmatmul.bf16.gmra.mxu0 %v1369
    %v1383 = vpop.f32.mrf.mxu0
    %v1384 = vadd.f32 0.0, %v1383
    %v1385 = vpop.f32.mrf.mxu0
    %1386 = vdwg.mxu0
    %v1388 = vsel %vm236, %v1365, 0
    %v1391 = vsel %vm236, %v1367, 0
    %1393 = vmatpush.bf16.xpose.msra.mxu0 0
    %1394 = vmatpush.bf16.xpose.msra.mxu0 0
    %1395 = vmatpush.bf16.xpose.msra.mxu0 0
    %1396 = vmatpush.bf16.xpose.msra.mxu0 0
    %1397 = vmatpush.bf16.xpose.msra.mxu0 0
    %1398 = vmatpush.bf16.xpose.msra.mxu0 0
    %1399 = vmatpush.bf16.xpose.msra.mxu0 0
    %1400 = vmatpush.bf16.xpose.msra.mxu0 %v1391
    %1401 = vmatmul.bf16.gmra.mxu0 %v1388
    %v1402 = vpop.f32.mrf.mxu0
    %v1403 = vadd.f32 0.0, %v1402
    %v1404 = vpop.f32.mrf.mxu0
    %1405 = vdwg.mxu0
    %v1406 = vmul.f32 %v1384, 0.25
    %v1407 = vmul.f32 %v1403, 0.25
    %v1408 = vadd.f32 %v1406, %v381
    %v1409 = vadd.f32 %v1407, %v382
    %v1410 = vsel %vm598, %v1408, -inf
    %1411 = vmax.xlane.f32.xlu0 %v1410
    %v1412 = vpop.xlane.xlu0 %1411
    %v1413 = vsel %vm598, %v1409, -inf
    %1414 = vmax.xlane.f32.xlu0 %v1413
    %v1415 = vpop.xlane.xlu0 %1414
    %v1416 = vsub.f32 %v1408, %v1412
    %v1417 = vsub.f32 %v1409, %v1415
    %v1418 = vmul.f32 %v1416, 1.442695
    %v1419 = vpow.pop %v1418
    %v1420 = vmul.f32 %v1417, 1.442695
    %v1421 = vpow.pop %v1420
    %v1422 = vsel %vm598, %v1419, 0.0
    %1423 = vadd.xlane.f32.xlu0 %v1422
    %v1424 = vpop.xlane.xlu0 %1423
    %v1425 = vsel %vm598, %v1421, 0.0
    %1426 = vadd.xlane.f32.xlu0 %v1425
    %v1427 = vpop.xlane.xlu0 %1426
    %v1428 = vrcp.pop %v1424
    %v1429 = vmul.f32 %v1424, %v1428
    %v1430 = vsub.f32 1.0, %v1429
    %v1431 = vmul.f32 %v1428, %v1430
    %v1432 = vadd.f32 %v1428, %v1431
    %vm1433 = vweird.f32 %v1424
    %vm1434 = vweird.f32 %v1428
    %vm1435 = vmor %vm1433, %vm1434
    %v1436 = vsel %vm1435, %v1428, %v1432
    %v1437 = vand.u32 2147483647, %v1424
    %vm1438 = vcmp.eq.f32.partialorder %v1437, 8.507059e+37
    %v1439 = vand.u32 %v1424, 2147483648
    %v1440 = vor.u32 1.1754944e-38, %v1439
    %v1441 = vsel %vm1438, %v1440, %v1436
    %v1442 = vmul.f32 %v1419, %v1441
    %v1443 = vrcp.pop %v1427
    %v1444 = vmul.f32 %v1427, %v1443
    %v1445 = vsub.f32 1.0, %v1444
    %v1446 = vmul.f32 %v1443, %v1445
    %v1447 = vadd.f32 %v1443, %v1446
    %vm1448 = vweird.f32 %v1427
    %vm1449 = vweird.f32 %v1443
    %vm1450 = vmor %vm1448, %vm1449
    %v1451 = vsel %vm1450, %v1443, %v1447
    %v1452 = vand.u32 2147483647, %v1427
    %vm1453 = vcmp.eq.f32.partialorder %v1452, 8.507059e+37
    %v1454 = vand.u32 %v1427, 2147483648
    %v1455 = vor.u32 1.1754944e-38, %v1454
    %v1456 = vsel %vm1453, %v1455, %v1451
    %v1457 = vmul.f32 %v1421, %v1456
    %v1458 = vpack.c.bf16 %v1442, %v1442
    %v1459 = vpack.c.bf16 %v1457, %v1457
    %v1460 = vpack.c.bf16 %v1360, %v1360
    %v1461 = vpack.c.bf16 %v1362, %v1362
    %v1463 = vsel %vm598, %v1458, 0
    %v1466 = vsel %vm654, %v1460, 0
    %1468 = vmatpush.bf16.msra.mxu0 0
    %1469 = vmatpush.bf16.msra.mxu0 0
    %1470 = vmatpush.bf16.msra.mxu0 0
    %1471 = vmatpush.bf16.msra.mxu0 0
    %1472 = vmatpush.bf16.msra.mxu0 0
    %1473 = vmatpush.bf16.msra.mxu0 0
    %1474 = vmatpush.bf16.msra.mxu0 0
    %1475 = vmatpush.bf16.msra.mxu0 %v1466
    %1476 = vmatmul.bf16.gmra.mxu0 %v1463
    %v1477 = vpop.f32.mrf.mxu0
    %v1478 = vadd.f32 0.0, %v1477
    %v1479 = vpop.f32.mrf.mxu0
    %1480 = vdwg.mxu0
    %v1482 = vsel %vm598, %v1459, 0
    %v1485 = vsel %vm654, %v1461, 0
    %1487 = vmatpush.bf16.msra.mxu0 0
    %1488 = vmatpush.bf16.msra.mxu0 0
    %1489 = vmatpush.bf16.msra.mxu0 0
    %1490 = vmatpush.bf16.msra.mxu0 0
    %1491 = vmatpush.bf16.msra.mxu0 0
    %1492 = vmatpush.bf16.msra.mxu0 0
    %1493 = vmatpush.bf16.msra.mxu0 0
    %1494 = vmatpush.bf16.msra.mxu0 %v1485
    %1495 = vmatmul.bf16.gmra.mxu0 %v1482
    %v1496 = vpop.f32.mrf.mxu0
    %v1497 = vadd.f32 0.0, %v1496
    %v1498 = vpop.f32.mrf.mxu0
    %1499 = vdwg.mxu0
    %v1500 = vpack.c.bf16 %v1497, %v1478
    %s1501 = scalar_lea.vmem %s41, 16
    %v1502 = vld [vmem:[%s1501] sm:$0xf]
    %v1503 = vld [vmem:[%s1501 + $0x4] sm:$0xf]
    %s1504 = scalar_lea.vmem %s29, 48
    %v1505 = vld [vmem:[%s1504] sm:$0xf]
    %v1506 = vld [vmem:[%s1504 + $0x4] sm:$0xf]
    %v1507 = vld [vmem:[%s1504 + $0x8] sm:$0xf]
    %v1508 = vld [vmem:[%s1504 + $0xc] sm:$0xf]
    %s1509 = scalar_lea.vmem %s35, 3
    %v1510 = vld [vmem:[%s1509] sm:$0x1]
    %v1512 = vperm.slane %v1510, 0
    %v1518 = vunpack.c.l.b16 %v1505
    %v1519 = vunpack.c.l.b16 %v1506
    %v1520 = vunpack.c.l.b16 %v1507
    %v1521 = vunpack.c.l.b16 %v1508
    %v1522 = vpack.c.b16 %v1519, %v1518
    %v1523 = vpack.c.b16 %v1521, %v1520
    %1526 = vmatpush.bf16.msra.mxu0 0
    %1527 = vmatpush.bf16.msra.mxu0 0
    %1528 = vmatpush.bf16.msra.mxu0 0
    %1529 = vmatpush.bf16.msra.mxu0 0
    %1530 = vmatpush.bf16.msra.mxu0 0
    %1531 = vmatpush.bf16.msra.mxu0 0
    %1532 = vmatpush.bf16.msra.mxu0 %v1523
    %1533 = vmatpush.bf16.msra.mxu0 %v1522
    %1534 = vmatmul.bf16.gmra.mxu0 %v1276
    %v1535 = vpop.f32.mrf.mxu0
    %v1536 = vadd.f32 %v1512, %v1535
    %v1537 = vpop.f32.mrf.mxu0
    %v1538 = vadd.f32 %v1512, %v1537
    %1539 = vdwg.mxu0
    %s1540 = scalar_lea.vmem %s31, 48
    %v1541 = vld [vmem:[%s1540] sm:$0xf]
    %v1542 = vld [vmem:[%s1540 + $0x4] sm:$0xf]
    %v1543 = vld [vmem:[%s1540 + $0x8] sm:$0xf]
    %v1544 = vld [vmem:[%s1540 + $0xc] sm:$0xf]
    %s1545 = scalar_lea.vmem %s37, 3
    %v1546 = vld [vmem:[%s1545] sm:$0x1]
    %v1548 = vperm.slane %v1546, 0
    %v1554 = vunpack.c.l.b16 %v1541
    %v1555 = vunpack.c.l.b16 %v1542
    %v1556 = vunpack.c.l.b16 %v1543
    %v1557 = vunpack.c.l.b16 %v1544
    %v1558 = vpack.c.b16 %v1555, %v1554
    %v1559 = vpack.c.b16 %v1557, %v1556
    %1562 = vmatpush.bf16.msra.mxu0 0
    %1563 = vmatpush.bf16.msra.mxu0 0
    %1564 = vmatpush.bf16.msra.mxu0 0
    %1565 = vmatpush.bf16.msra.mxu0 0
    %1566 = vmatpush.bf16.msra.mxu0 0
    %1567 = vmatpush.bf16.msra.mxu0 0
    %1568 = vmatpush.bf16.msra.mxu0 %v1559
    %1569 = vmatpush.bf16.msra.mxu0 %v1558
    %1570 = vmatmul.bf16.gmra.mxu0 %v1276
    %v1571 = vpop.f32.mrf.mxu0
    %v1572 = vadd.f32 %v1548, %v1571
    %v1573 = vpop.f32.mrf.mxu0
    %v1574 = vadd.f32 %v1548, %v1573
    %1575 = vdwg.mxu0
    %s1576 = scalar_lea.vmem %s33, 48
    %v1577 = vld [vmem:[%s1576] sm:$0xf]
    %v1578 = vld [vmem:[%s1576 + $0x4] sm:$0xf]
    %v1579 = vld [vmem:[%s1576 + $0x8] sm:$0xf]
    %v1580 = vld [vmem:[%s1576 + $0xc] sm:$0xf]
    %s1581 = scalar_lea.vmem %s39, 3
    %v1582 = vld [vmem:[%s1581] sm:$0x1]
    %v1584 = vperm.slane %v1582, 0
    %v1590 = vunpack.c.l.b16 %v1577
    %v1591 = vunpack.c.l.b16 %v1578
    %v1592 = vunpack.c.l.b16 %v1579
    %v1593 = vunpack.c.l.b16 %v1580
    %v1594 = vpack.c.b16 %v1591, %v1590
    %v1595 = vpack.c.b16 %v1593, %v1592
    %1598 = vmatpush.bf16.msra.mxu0 0
    %1599 = vmatpush.bf16.msra.mxu0 0
    %1600 = vmatpush.bf16.msra.mxu0 0
    %1601 = vmatpush.bf16.msra.mxu0 0
    %1602 = vmatpush.bf16.msra.mxu0 0
    %1603 = vmatpush.bf16.msra.mxu0 0
    %1604 = vmatpush.bf16.msra.mxu0 %v1595
    %1605 = vmatpush.bf16.msra.mxu0 %v1594
    %1606 = vmatmul.bf16.gmra.mxu0 %v1276
    %v1607 = vpop.f32.mrf.mxu0
    %v1608 = vadd.f32 %v1584, %v1607
    %v1609 = vpop.f32.mrf.mxu0
    %v1610 = vadd.f32 %v1584, %v1609
    %1611 = vdwg.mxu0
    %v1612 = vpack.c.bf16 %v1536, %v1536
    %v1613 = vpack.c.bf16 %v1538, %v1538
    %v1614 = vpack.c.bf16 %v1572, %v1572
    %v1615 = vpack.c.bf16 %v1574, %v1574
    %v1617 = vsel %vm236, %v1612, 0
    %v1620 = vsel %vm236, %v1614, 0
    %1622 = vmatpush.bf16.xpose.msra.mxu0 0
    %1623 = vmatpush.bf16.xpose.msra.mxu0 0
    %1624 = vmatpush.bf16.xpose.msra.mxu0 0
    %1625 = vmatpush.bf16.xpose.msra.mxu0 0
    %1626 = vmatpush.bf16.xpose.msra.mxu0 0
    %1627 = vmatpush.bf16.xpose.msra.mxu0 0
    %1628 = vmatpush.bf16.xpose.msra.mxu0 0
    %1629 = vmatpush.bf16.xpose.msra.mxu0 %v1620
    %1630 = vmatmul.bf16.gmra.mxu0 %v1617
    %v1631 = vpop.f32.mrf.mxu0
    %v1632 = vadd.f32 0.0, %v1631
    %v1633 = vpop.f32.mrf.mxu0
    %1634 = vdwg.mxu0
    %v1636 = vsel %vm236, %v1613, 0
    %v1639 = vsel %vm236, %v1615, 0
    %1641 = vmatpush.bf16.xpose.msra.mxu0 0
    %1642 = vmatpush.bf16.xpose.msra.mxu0 0
    %1643 = vmatpush.bf16.xpose.msra.mxu0 0
    %1644 = vmatpush.bf16.xpose.msra.mxu0 0
    %1645 = vmatpush.bf16.xpose.msra.mxu0 0
    %1646 = vmatpush.bf16.xpose.msra.mxu0 0
    %1647 = vmatpush.bf16.xpose.msra.mxu0 0
    %1648 = vmatpush.bf16.xpose.msra.mxu0 %v1639
    %1649 = vmatmul.bf16.gmra.mxu0 %v1636
    %v1650 = vpop.f32.mrf.mxu0
    %v1651 = vadd.f32 0.0, %v1650
    %v1652 = vpop.f32.mrf.mxu0
    %1653 = vdwg.mxu0
    %v1654 = vmul.f32 %v1632, 0.25
    %v1655 = vmul.f32 %v1651, 0.25
    %v1656 = vadd.f32 %v1654, %v381
    %v1657 = vadd.f32 %v1655, %v382
    %v1658 = vsel %vm598, %v1656, -inf
    %1659 = vmax.xlane.f32.xlu0 %v1658
    %v1660 = vpop.xlane.xlu0 %1659
    %v1661 = vsel %vm598, %v1657, -inf
    %1662 = vmax.xlane.f32.xlu0 %v1661
    %v1663 = vpop.xlane.xlu0 %1662
    %v1664 = vsub.f32 %v1656, %v1660
    %v1665 = vsub.f32 %v1657, %v1663
    %v1666 = vmul.f32 %v1664, 1.442695
    %v1667 = vpow.pop %v1666
    %v1668 = vmul.f32 %v1665, 1.442695
    %v1669 = vpow.pop %v1668
    %v1670 = vsel %vm598, %v1667, 0.0
    %1671 = vadd.xlane.f32.xlu0 %v1670
    %v1672 = vpop.xlane.xlu0 %1671
    %v1673 = vsel %vm598, %v1669, 0.0
    %1674 = vadd.xlane.f32.xlu0 %v1673
    %v1675 = vpop.xlane.xlu0 %1674
    %v1676 = vrcp.pop %v1672
    %v1677 = vmul.f32 %v1672, %v1676
    %v1678 = vsub.f32 1.0, %v1677
    %v1679 = vmul.f32 %v1676, %v1678
    %v1680 = vadd.f32 %v1676, %v1679
    %vm1681 = vweird.f32 %v1672
    %vm1682 = vweird.f32 %v1676
    %vm1683 = vmor %vm1681, %vm1682
    %v1684 = vsel %vm1683, %v1676, %v1680
    %v1685 = vand.u32 2147483647, %v1672
    %vm1686 = vcmp.eq.f32.partialorder %v1685, 8.507059e+37
    %v1687 = vand.u32 %v1672, 2147483648
    %v1688 = vor.u32 1.1754944e-38, %v1687
    %v1689 = vsel %vm1686, %v1688, %v1684
    %v1690 = vmul.f32 %v1667, %v1689
    %v1691 = vrcp.pop %v1675
    %v1692 = vmul.f32 %v1675, %v1691
    %v1693 = vsub.f32 1.0, %v1692
    %v1694 = vmul.f32 %v1691, %v1693
    %v1695 = vadd.f32 %v1691, %v1694
    %vm1696 = vweird.f32 %v1675
    %vm1697 = vweird.f32 %v1691
    %vm1698 = vmor %vm1696, %vm1697
    %v1699 = vsel %vm1698, %v1691, %v1695
    %v1700 = vand.u32 2147483647, %v1675
    %vm1701 = vcmp.eq.f32.partialorder %v1700, 8.507059e+37
    %v1702 = vand.u32 %v1675, 2147483648
    %v1703 = vor.u32 1.1754944e-38, %v1702
    %v1704 = vsel %vm1701, %v1703, %v1699
    %v1705 = vmul.f32 %v1669, %v1704
    %v1706 = vpack.c.bf16 %v1690, %v1690
    %v1707 = vpack.c.bf16 %v1705, %v1705
    %v1708 = vpack.c.bf16 %v1608, %v1608
    %v1709 = vpack.c.bf16 %v1610, %v1610
    %v1711 = vsel %vm598, %v1706, 0
    %v1714 = vsel %vm654, %v1708, 0
    %1716 = vmatpush.bf16.msra.mxu0 0
    %1717 = vmatpush.bf16.msra.mxu0 0
    %1718 = vmatpush.bf16.msra.mxu0 0
    %1719 = vmatpush.bf16.msra.mxu0 0
    %1720 = vmatpush.bf16.msra.mxu0 0
    %1721 = vmatpush.bf16.msra.mxu0 0
    %1722 = vmatpush.bf16.msra.mxu0 0
    %1723 = vmatpush.bf16.msra.mxu0 %v1714
    %1724 = vmatmul.bf16.gmra.mxu0 %v1711
    %v1725 = vpop.f32.mrf.mxu0
    %v1726 = vadd.f32 0.0, %v1725
    %v1727 = vpop.f32.mrf.mxu0
    %1728 = vdwg.mxu0
    %v1730 = vsel %vm598, %v1707, 0
    %v1733 = vsel %vm654, %v1709, 0
    %1735 = vmatpush.bf16.msra.mxu0 0
    %1736 = vmatpush.bf16.msra.mxu0 0
    %1737 = vmatpush.bf16.msra.mxu0 0
    %1738 = vmatpush.bf16.msra.mxu0 0
    %1739 = vmatpush.bf16.msra.mxu0 0
    %1740 = vmatpush.bf16.msra.mxu0 0
    %1741 = vmatpush.bf16.msra.mxu0 0
    %1742 = vmatpush.bf16.msra.mxu0 %v1733
    %1743 = vmatmul.bf16.gmra.mxu0 %v1730
    %v1744 = vpop.f32.mrf.mxu0
    %v1745 = vadd.f32 0.0, %v1744
    %v1746 = vpop.f32.mrf.mxu0
    %1747 = vdwg.mxu0
    %v1748 = vpack.c.bf16 %v1745, %v1726
    %s1749 = scalar_lea.vmem %s41, 24
    %v1750 = vld [vmem:[%s1749] sm:$0xf]
    %v1751 = vld [vmem:[%s1749 + $0x4] sm:$0xf]
    %v1754 = vunpack.c.l.b16 %v1750
    %v1755 = vunpack.c.l.b16 %v1751
    %v1756 = vpack.c.b16 %v1755, %v1754
    %v1759 = vsel %vm236, %v1748, 0
    %1761 = vmatpush.bf16.msra.mxu0 0
    %1762 = vmatpush.bf16.msra.mxu0 0
    %1763 = vmatpush.bf16.msra.mxu0 0
    %1764 = vmatpush.bf16.msra.mxu0 0
    %1765 = vmatpush.bf16.msra.mxu0 0
    %1766 = vmatpush.bf16.msra.mxu0 0
    %1767 = vmatpush.bf16.msra.mxu0 0
    %1768 = vmatpush.bf16.msra.mxu0 %v1756
    %1769 = vmatmul.bf16.gmra.mxu0 %v1759
    %v1770 = vpop.f32.mrf.mxu0
    %v1771 = vadd.f32 0.0, %v1770
    %v1772 = vpop.f32.mrf.mxu0
    %v1773 = vadd.f32 0.0, %v1772
    %1774 = vdwg.mxu0
    %v1777 = vunpack.c.l.b16 %v1502
    %v1778 = vunpack.c.l.b16 %v1503
    %v1779 = vpack.c.b16 %v1778, %v1777
    %v1782 = vsel %vm236, %v1500, 0
    %1784 = vmatpush.bf16.msra.mxu0 0
    %1785 = vmatpush.bf16.msra.mxu0 0
    %1786 = vmatpush.bf16.msra.mxu0 0
    %1787 = vmatpush.bf16.msra.mxu0 0
    %1788 = vmatpush.bf16.msra.mxu0 0
    %1789 = vmatpush.bf16.msra.mxu0 0
    %1790 = vmatpush.bf16.msra.mxu0 0
    %1791 = vmatpush.bf16.msra.mxu0 %v1779
    %1792 = vmatmul.bf16.gmra.mxu0 %v1782
    %v1793 = vpop.f32.mrf.mxu0
    %v1794 = vadd.f32 %v1771, %v1793
    %v1795 = vpop.f32.mrf.mxu0
    %v1796 = vadd.f32 %v1773, %v1795
    %1797 = vdwg.mxu0
    %v1798 = vadd.f32 %v1192, %v1794
    %v1799 = vadd.f32 %v1193, %v1796
    %s1800 = scalar_lea.vmem %s43, 1
    %v1801 = vld [vmem:[%s1800] sm:$0x1]
    %v1803 = vperm.slane %v1801, 0
    %v1805 = vadd.f32 %v1798, %v1803
    %v1806 = vadd.f32 %v1799, %v1803
    %s1807 = scalar_lea.vmem %s45, 1
    %v1808 = vld [vmem:[%s1807] sm:$0x1]
    %s1809 = scalar_lea.vmem %s47, 1
    %v1810 = vld [vmem:[%s1809] sm:$0x1]
    %v1811 = vsel %vm157, %v1805, 0.0
    %1812 = vadd.xlane.f32.xlu0 %v1811
    %v1813 = vpop.xlane.xlu0 %1812
    %v1814 = vsel %vm157, %v1806, 0.0
    %1815 = vadd.xlane.f32.xlu0 %v1814
    %v1816 = vpop.xlane.xlu0 %1815
    %v1817 = vmul.f32 %v1813, %v397
    %v1818 = vmul.f32 %v1816, %v397
    %v1819 = vsub.f32 %v1805, %v1817
    %v1820 = vsub.f32 %v1806, %v1818
    %v1821 = vmul.f32 %v1819, %v1819
    %v1822 = vmul.f32 %v1820, %v1820
    %v1823 = vsel %vm157, %v1821, 0.0
    %1824 = vadd.xlane.f32.xlu0 %v1823
    %v1825 = vpop.xlane.xlu0 %1824
    %v1826 = vsel %vm157, %v1822, 0.0
    %1827 = vadd.xlane.f32.xlu0 %v1826
    %v1828 = vpop.xlane.xlu0 %1827
    %v1829 = vmul.f32 %v1825, %v397
    %v1830 = vmul.f32 %v1828, %v397
    %v1831 = vadd.f32 %v1829, 1e-05
    %v1832 = vadd.f32 %v1830, 1e-05
    %v1833 = vrsqrt.pop %v1831
    %v1834 = vmul.f32 %v1833, %v1831
    %v1835 = vmul.f32 %v1834, %v1833
    %v1836 = vmul.f32 0.5, %v1835
    %v1837 = vsub.f32 1.5, %v1836
    %v1838 = vmul.f32 %v1833, %v1837
    %vm1839 = vweird.f32 %v1831
    %vm1840 = vweird.f32 %v1833
    %vm1841 = vmor %vm1839, %vm1840
    %v1842 = vsel %vm1841, %v1833, %v1838
    %v1843 = vrsqrt.pop %v1832
    %v1844 = vmul.f32 %v1843, %v1832
    %v1845 = vmul.f32 %v1844, %v1843
    %v1846 = vmul.f32 0.5, %v1845
    %v1847 = vsub.f32 1.5, %v1846
    %v1848 = vmul.f32 %v1843, %v1847
    %vm1849 = vweird.f32 %v1832
    %vm1850 = vweird.f32 %v1843
    %vm1851 = vmor %vm1849, %vm1850
    %v1852 = vsel %vm1851, %v1843, %v1848
    %v1853 = vmul.f32 %v1819, %v1842
    %v1854 = vmul.f32 %v1820, %v1852
    %v1856 = vperm.slane %v1808, 0
    %v1858 = vmul.f32 %v1853, %v1856
    %v1859 = vmul.f32 %v1854, %v1856
    %v1861 = vperm.slane %v1810, 0
    %v1863 = vadd.f32 %v1858, %v1861
    %v1864 = vadd.f32 %v1859, %v1861
    %v1865 = vpack.c.bf16 %v1864, %v1863
    %s1866 = scalar_lea.vmem %s49, 16
    %v1867 = vld [vmem:[%s1866] sm:$0xf]
    %v1868 = vld [vmem:[%s1866 + $0x4] sm:$0xf]
    %v1869 = vld [vmem:[%s1866 + $0x8] sm:$0xf]
    %v1870 = vld [vmem:[%s1866 + $0xc] sm:$0xf]
    %s1871 = scalar_lea.vmem %s51, 1
    %v1872 = vld [vmem:[%s1871] sm:$0x1]
    %v1874 = vperm.slane %v1872, 0
    %v1880 = vunpack.c.l.b16 %v1867
    %v1881 = vunpack.c.l.b16 %v1868
    %v1882 = vunpack.c.l.b16 %v1869
    %v1883 = vunpack.c.l.b16 %v1870
    %v1884 = vpack.c.b16 %v1881, %v1880
    %v1885 = vpack.c.b16 %v1883, %v1882
    %v1889 = vsel %vm157, %v1865, 0
    %1891 = vmatpush.bf16.msra.mxu0 0
    %1892 = vmatpush.bf16.msra.mxu0 0
    %1893 = vmatpush.bf16.msra.mxu0 0
    %1894 = vmatpush.bf16.msra.mxu0 0
    %1895 = vmatpush.bf16.msra.mxu0 0
    %1896 = vmatpush.bf16.msra.mxu0 0
    %1897 = vmatpush.bf16.msra.mxu0 %v1885
    %1898 = vmatpush.bf16.msra.mxu0 %v1884
    %1899 = vmatmul.bf16.gmra.mxu0 %v1889
    %v1900 = vpop.f32.mrf.mxu0
    %v1901 = vadd.f32 %v1874, %v1900
    %v1902 = vpop.f32.mrf.mxu0
    %v1903 = vadd.f32 %v1874, %v1902
    %1904 = vdwg.mxu0
    %v1905 = vmul.f32 %v1901, %v1901
    %v1906 = vmul.f32 %v1903, %v1903
    %v1907 = vmul.f32 %v1901, %v1905
    %v1908 = vmul.f32 %v1903, %v1906
    %v1909 = vmul.f32 %v1907, 0.044715
    %v1910 = vmul.f32 %v1908, 0.044715
    %v1911 = vadd.f32 %v1901, %v1909
    %v1912 = vadd.f32 %v1903, %v1910
    %v1913 = vmul.f32 %v1911, 0.7978846
    %v1914 = vmul.f32 %v1912, 0.7978846
    %v1915 = vtanh.pop %v1913
    %v1916 = vtanh.pop %v1914
    %v1917 = vadd.f32 %v1915, 1.0
    %v1918 = vadd.f32 %v1916, 1.0
    %v1919 = vmul.f32 %v1917, 0.5
    %v1920 = vmul.f32 %v1918, 0.5
    %v1921 = vmul.f32 %v1901, %v1919
    %v1922 = vmul.f32 %v1903, %v1920
    %v1923 = vpack.c.bf16 %v1922, %v1921
    %s1924 = scalar_lea.vmem %s53, 64
    %v1925 = vld [vmem:[%s1924] sm:$0xf]
    %v1926 = vld [vmem:[%s1924 + $0x4] sm:$0xf]
    %v1927 = vld [vmem:[%s1924 + $0x8] sm:$0xf]
    %v1928 = vld [vmem:[%s1924 + $0xc] sm:$0xf]
    %v1929 = vld [vmem:[%s1924 + $0x10] sm:$0xf]
    %v1930 = vld [vmem:[%s1924 + $0x14] sm:$0xf]
    %v1931 = vld [vmem:[%s1924 + $0x18] sm:$0xf]
    %v1932 = vld [vmem:[%s1924 + $0x1c] sm:$0xf]
    %v1933 = vld [vmem:[%s1924 + $0x20] sm:$0xf]
    %v1934 = vld [vmem:[%s1924 + $0x24] sm:$0xf]
    %v1935 = vld [vmem:[%s1924 + $0x28] sm:$0xf]
    %v1936 = vld [vmem:[%s1924 + $0x2c] sm:$0xf]
    %v1937 = vld [vmem:[%s1924 + $0x30] sm:$0xf]
    %v1938 = vld [vmem:[%s1924 + $0x34] sm:$0xf]
    %v1939 = vld [vmem:[%s1924 + $0x38] sm:$0xf]
    %v1940 = vld [vmem:[%s1924 + $0x3c] sm:$0xf]
    %v1957 = vunpack.c.l.b16 %v1925
    %v1958 = vunpack.c.l.b16 %v1926
    %v1959 = vunpack.c.l.b16 %v1927
    %v1960 = vunpack.c.l.b16 %v1928
    %v1961 = vunpack.c.l.b16 %v1929
    %v1962 = vunpack.c.l.b16 %v1930
    %v1963 = vunpack.c.l.b16 %v1931
    %v1964 = vunpack.c.l.b16 %v1932
    %v1965 = vunpack.c.l.b16 %v1933
    %v1966 = vunpack.c.l.b16 %v1934
    %v1967 = vunpack.c.l.b16 %v1935
    %v1968 = vunpack.c.l.b16 %v1936
    %v1969 = vunpack.c.l.b16 %v1937
    %v1970 = vunpack.c.l.b16 %v1938
    %v1971 = vunpack.c.l.b16 %v1939
    %v1972 = vunpack.c.l.b16 %v1940
    %v1973 = vpack.c.b16 %v1958, %v1957
    %v1974 = vpack.c.b16 %v1960, %v1959
    %v1975 = vpack.c.b16 %v1962, %v1961
    %v1976 = vpack.c.b16 %v1964, %v1963
    %v1977 = vpack.c.b16 %v1966, %v1965
    %v1978 = vpack.c.b16 %v1968, %v1967
    %v1979 = vpack.c.b16 %v1970, %v1969
    %v1980 = vpack.c.b16 %v1972, %v1971
    %1989 = vmatpush.bf16.msra.mxu0 %v1980
    %1990 = vmatpush.bf16.msra.mxu0 %v1979
    %1991 = vmatpush.bf16.msra.mxu0 %v1978
    %1992 = vmatpush.bf16.msra.mxu0 %v1977
    %1993 = vmatpush.bf16.msra.mxu0 %v1976
    %1994 = vmatpush.bf16.msra.mxu0 %v1975
    %1995 = vmatpush.bf16.msra.mxu0 %v1974
    %1996 = vmatpush.bf16.msra.mxu0 %v1973
    %1997 = vmatmul.bf16.gmra.mxu0 %v1923
    %v1998 = vpop.f32.mrf.mxu0
    %v1999 = vadd.f32 0.0, %v1998
    %v2000 = vpop.f32.mrf.mxu0
    %v2001 = vadd.f32 0.0, %v2000
    %2002 = vdwg.mxu0
    %v2003 = vadd.f32 %v1805, %v1999
    %v2004 = vadd.f32 %v1806, %v2001
    %s2005 = scalar_lea.vmem %s55, 1
    %v2006 = vld [vmem:[%s2005] sm:$0x1]
    %v2008 = vperm.slane %v2006, 0
    %v2010 = vadd.f32 %v2003, %v2008
    %v2011 = vadd.f32 %v2004, %v2008
    %v2012 = vld [vmem:[%s57] sm:$0x1]
    %v2013 = vld [vmem:[%s59] sm:$0x1]
    %v2014 = vsel %vm157, %v2010, 0.0
    %2015 = vadd.xlane.f32.xlu0 %v2014
    %v2016 = vpop.xlane.xlu0 %2015
    %v2017 = vsel %vm157, %v2011, 0.0
    %2018 = vadd.xlane.f32.xlu0 %v2017
    %v2019 = vpop.xlane.xlu0 %2018
    %v2020 = vmul.f32 %v2016, %v397
    %v2021 = vmul.f32 %v2019, %v397
    %v2022 = vsub.f32 %v2010, %v2020
    %v2023 = vsub.f32 %v2011, %v2021
    %v2024 = vmul.f32 %v2022, %v2022
    %v2025 = vmul.f32 %v2023, %v2023
    %v2026 = vsel %vm157, %v2024, 0.0
    %2027 = vadd.xlane.f32.xlu0 %v2026
    %v2028 = vpop.xlane.xlu0 %2027
    %v2029 = vsel %vm157, %v2025, 0.0
    %2030 = vadd.xlane.f32.xlu0 %v2029
    %v2031 = vpop.xlane.xlu0 %2030
    %v2032 = vmul.f32 %v2028, %v397
    %v2033 = vmul.f32 %v2031, %v397
    %v2034 = vadd.f32 %v2032, 1e-05
    %v2035 = vadd.f32 %v2033, 1e-05
    %v2036 = vrsqrt.pop %v2034
    %v2037 = vmul.f32 %v2036, %v2034
    %v2038 = vmul.f32 %v2037, %v2036
    %v2039 = vmul.f32 0.5, %v2038
    %v2040 = vsub.f32 1.5, %v2039
    %v2041 = vmul.f32 %v2036, %v2040
    %vm2042 = vweird.f32 %v2034
    %vm2043 = vweird.f32 %v2036
    %vm2044 = vmor %vm2042, %vm2043
    %v2045 = vsel %vm2044, %v2036, %v2041
    %v2046 = vrsqrt.pop %v2035
    %v2047 = vmul.f32 %v2046, %v2035
    %v2048 = vmul.f32 %v2047, %v2046
    %v2049 = vmul.f32 0.5, %v2048
    %v2050 = vsub.f32 1.5, %v2049
    %v2051 = vmul.f32 %v2046, %v2050
    %vm2052 = vweird.f32 %v2035
    %vm2053 = vweird.f32 %v2046
    %vm2054 = vmor %vm2052, %vm2053
    %v2055 = vsel %vm2054, %v2046, %v2051
    %v2056 = vmul.f32 %v2022, %v2045
    %v2057 = vmul.f32 %v2023, %v2055
    %v2059 = vperm.slane %v2012, 0
    %v2061 = vmul.f32 %v2056, %v2059
    %v2062 = vmul.f32 %v2057, %v2059
    %v2064 = vperm.slane %v2013, 0
    %v2066 = vadd.f32 %v2061, %v2064
    %v2067 = vadd.f32 %v2062, %v2064
    %v2068 = vpack.c.bf16 %v2067, %v2066
    %v2069 = vld [vmem:[%s61] sm:$0xf]
    %v2070 = vld [vmem:[%s61 + $0x4] sm:$0xf]
    %v2071 = vld [vmem:[%s61 + $0x8] sm:$0xf]
    %v2072 = vld [vmem:[%s61 + $0xc] sm:$0xf]
    %v2077 = vunpack.c.l.b16 %v2069
    %v2078 = vunpack.c.l.b16 %v2070
    %v2079 = vunpack.c.l.b16 %v2071
    %v2080 = vunpack.c.l.b16 %v2072
    %v2081 = vpack.c.b16 %v2078, %v2077
    %v2082 = vpack.c.b16 %v2080, %v2079
    %v2086 = vsel %vm157, %v2068, 0
    %2088 = vmatpush.bf16.msra.mxu0 0
    %2089 = vmatpush.bf16.msra.mxu0 0
    %2090 = vmatpush.bf16.msra.mxu0 0
    %2091 = vmatpush.bf16.msra.mxu0 0
    %2092 = vmatpush.bf16.msra.mxu0 0
    %2093 = vmatpush.bf16.msra.mxu0 0
    %2094 = vmatpush.bf16.msra.mxu0 %v2082
    %2095 = vmatpush.bf16.msra.mxu0 %v2081
    %2096 = vmatmul.bf16.gmra.mxu0 %v2086
    %v2097 = vpop.f32.mrf.mxu0
    %v2098 = vadd.f32 0.0, %v2097
    %v2099 = vpop.f32.mrf.mxu0
    %v2100 = vadd.f32 0.0, %v2099
    %2101 = vdwg.mxu0
    %2102 = vst [vmem:[#allocation2] sm:$0xff] %v2098
    %2103 = vst [vmem:[#allocation2 + $0x8] sm:$0xff] %v2100
    %vm2104 = vcmp.lt.s32.totalorder %v255, 64
    %v2105 = vsel %vm2104, %v2098, -1e+09
    %v2106 = vsel %vm2104, %v2100, -1e+09
    %2107 = vmax.xlane.f32.xlu0 %v2105
    %v2108 = vpop.xlane.xlu0 %2107
    %2109 = vmax.xlane.f32.xlu0 %v2106
    %v2110 = vpop.xlane.xlu0 %2109
    %v2111 = vsub.f32 %v2105, %v2108
    %v2112 = vsub.f32 %v2106, %v2110
    %v2113 = vmul.f32 %v2111, 1.442695
    %v2114 = vpow.pop %v2113
    %v2115 = vmul.f32 %v2112, 1.442695
    %v2116 = vpow.pop %v2115
    %2117 = vadd.xlane.f32.xlu0 %v2114
    %v2118 = vpop.xlane.xlu0 %2117
    %2119 = vadd.xlane.f32.xlu0 %v2116
    %v2120 = vpop.xlane.xlu0 %2119
    %v2121 = vlog2.pop %v2118
    %v2122 = vmul.f32 %v2121, 0.6931472
    %v2123 = vlog2.pop %v2120
    %v2124 = vmul.f32 %v2123, 0.6931472
    %v2125 = vadd.f32 %v2122, %v2108
    %v2126 = vadd.f32 %v2124, %v2110
    %v2127 = vld [vmem:[%s7] sm:$0x3]
    %v2128 = vperm.slane %v2127, 0
    %v2129 = vlaneseq
    %v2130 = vshrl.u32 %v2129, 7
    %2132 = vset.pattern.permute.xlu0 %v2130
    %2133 = vperm.xlu0 %2132, %v2128
    %v2134 = vpop.permute.xlu0 %2133
    %v2135 = vperm.slane %v2127, 1
    %v2136 = vlaneseq
    %v2137 = vshrl.u32 %v2136, 7
    %2139 = vset.pattern.permute.xlu0 %v2137
    %2140 = vperm.xlu0 %2139, %v2135
    %v2141 = vpop.permute.xlu0 %2140
    %vm2142 = vcmp.eq.s32.totalorder %v255, %v2134
    %vm2143 = vcmp.eq.s32.totalorder %v255, %v2141
    %v2144 = vsel %vm2142, %v2098, 0.0
    %v2145 = vsel %vm2143, %v2100, 0.0
    %2146 = vadd.xlane.f32.xlu0 %v2144
    %v2147 = vpop.xlane.xlu0 %2146
    %2148 = vadd.xlane.f32.xlu0 %v2145
    %v2149 = vpop.xlane.xlu0 %2148
    %vm2150 = vcmp.lt.s32.totalorder %v257, 7
    %v2151 = vsel %vm2150, 1, 0
    %v2152 = vcvt.s32.f32 %v2151
    %v2153 = vsub.f32 %v2125, %v2147
    %v2154 = vsub.f32 %v2126, %v2149
    %v2155 = vmul.f32 %v2153, %v2152
    %v2156 = vmul.f32 %v2154, %v2152
    %vm2157 = vcmask 7168
    %v2158 = vsel %vm2157, %v2155, 0.0
    %v2159 = vsel %vm2157, %v2156, 0.0
    %v2160 = vadd.f32 %v2158, %v2159
    %2161 = vadd.xlane.f32.xlu0 %v2160
    %v2162 = vpop.xlane.xlu0 %2161
    %v2163 = vrot.slane %v2162, 4
    %v2164 = vadd.f32 %v2162, %v2163
    %v2165 = vrot.slane %v2164, 2
    %v2166 = vadd.f32 %v2164, %v2165
    %v2167 = vrot.slane %v2166, 1
    %v2168 = vadd.f32 %v2166, %v2167
    %s2169 = vtos %v2168
    %s2170 = smul.f32 %s2169, 0.071428575
    %v2171 = vstv %s2170
    %2172 = vst [vmem:[%s65] sm:$0xff] %v2171
    // Predicated region
    $region126: #{sequence_latent_to_text_forward.1} parent=1 // pred_check
      _
    $region127: #{sequence_latent_to_text_forward.1} parent=1 // pred_check_branch
      %2174 = sbr.rel (0) target = $region129
    $region128: #{sequence_latent_to_text_forward.1} parent=1 // pred_region
      %2176 = vsyncadd [#allocation3], 0
      %s2177 = sshll.u32 [#allocation2], 4
      %s2178 = int_to_ptr.vmem [resolvable:$true] %s2177
      %s2179 = sshll.u32 %s63, 4
      %s2180 = int_to_ptr.hbm [resolvable:$true] %s2179
      %2185 = dma.vmem_to_hbm [thread:$0]  %s2178, 256, %s2180, [#allocation3], 128, 128, 8
    $region129: #{sequence_latent_to_text_forward.1} parent=1 // pred_fallthru
      _
    // Predicated region
    $region130: #{sequence_latent_to_text_forward.1} parent=1 // pred_check
      _
    $region131: #{sequence_latent_to_text_forward.1} parent=1 // pred_check_branch
      %2187 = sbr.rel (0) target = $region133
    $region132: #{sequence_latent_to_text_forward.1} parent=1 // pred_region
      _
    $region133: #{sequence_latent_to_text_forward.1} parent=1 // pred_fallthru
      _
    // Predicated region
    $region134: #{sequence_latent_to_text_forward.1} parent=1 // pred_check
      _
    $region135: #{sequence_latent_to_text_forward.1} parent=1 // pred_check_branch
      %2189 = sbr.rel (0) target = $region137
    $region136: #{sequence_latent_to_text_forward.1} parent=1 // pred_region
      %2191 = dma.done [#allocation3], 256
    $region137: #{sequence_latent_to_text_forward.1} parent=1 // pred_fallthru
      _
    // Predicated region
    $region138: #{sequence_latent_to_text_forward.1} parent=1 // pred_check
      _
    $region139: #{sequence_latent_to_text_forward.1} parent=1 // pred_check_branch
      %2193 = sbr.rel (0) target = $region141
    $region140: #{sequence_latent_to_text_forward.1} parent=1 // pred_region
      _
    $region141: #{sequence_latent_to_text_forward.1} parent=1 // pred_fallthru
      _
    %2194 = vsyncpa [#allocation3], 1

</llo_original>
